<compile_context>
chip_gen: v7x
topology: tpu7x:2x2x1
jax: 0.10.0
libtpu: 0.0.40
codegen_flags: <defaults>
</compile_context>

<pallas_src>
import functools
import math

import jax
import jax.numpy as jnp
from jax import lax
from jax.experimental import pallas as pl
from jax.experimental.pallas import tpu as pltpu


def _layernorm(x, eps=1e-6):
    # LayerNorm with elementwise_affine=False, eps=1e-6 (biased variance).
    mu = jnp.mean(x, axis=-1, keepdims=True)
    var = jnp.mean((x - mu) ** 2, axis=-1, keepdims=True)
    return (x - mu) * lax.rsqrt(var + eps)


def _erf_poly(x):
    # Abramowitz & Stegun 7.1.26, |abs err| <= 1.5e-7. Uses only exp + VPU ops,
    # avoiding any reliance on an erf lowering inside Mosaic.
    p = 0.3275911
    a1, a2, a3, a4, a5 = (0.254829592, -0.284496736, 1.421413741,
                          -1.453152027, 1.061405429)
    ax = jnp.abs(x)
    t = 1.0 / (1.0 + p * ax)
    poly = ((((a5 * t + a4) * t + a3) * t + a2) * t + a1) * t
    y = 1.0 - poly * jnp.exp(-ax * ax)
    return jnp.where(x >= 0, y, -y)


def _gelu_exact_kernel(x):
    # nn.GELU default (approximate='none'): 0.5*x*(1+erf(x/sqrt(2)))
    return 0.5 * x * (1.0 + _erf_poly(x * (1.0 / math.sqrt(2.0))))


def _gelu_exact_ref(x):
    return 0.5 * x * (1.0 + lax.erf(x * (1.0 / math.sqrt(2.0))))


def encoder_block_kernel(x_ref, *refs, num_heads, k_block, has_mask, conservative):
    # One grid step == one batch element; whole block fused in VMEM.
    if has_mask:
        mask_ref, refs = refs[0], refs[1:]
    else:
        mask_ref = None
    (wqkv_ref, bqkv_ref, wo_ref, bo_ref,
     w1_ref, b1_ref, w2_ref, b2_ref, o_ref) = refs

    x = x_ref[0].astype(jnp.float32)                      # (N, D)
    N, D = x.shape
    H = num_heads
    hd = D // H

    # ---- norm1 ----
    xn = _layernorm(x)
    xn_b = xn.astype(jnp.bfloat16)

    # ---- fused QKV projection (qkv_bias=True); scale already folded into Q ----
    qkv = jnp.dot(xn_b, wqkv_ref[...],
                  preferred_element_type=jnp.float32) + bqkv_ref[...]   # (N, 3D)

    def split_heads(t_bf16):                              # (N, D) -> (H, N, hd)
        if conservative:
            return jnp.concatenate(
                [t_bf16[:, h * hd:(h + 1) * hd][None] for h in range(H)], axis=0)
        return pltpu.einshape("nhd->hnd", t_bf16.reshape(N, H, hd))

    qh = split_heads(qkv[:, :D].astype(jnp.bfloat16))         # (H, N, hd)
    kh = split_heads(qkv[:, D:2 * D].astype(jnp.bfloat16))    # (H, N, hd)
    vh = split_heads(qkv[:, 2 * D:].astype(jnp.bfloat16))     # (H, N, hd)

    if has_mask:
        mask_full = mask_ref[0].astype(jnp.float32)           # (N, N)

    # ---- flash-style attention: online softmax over key blocks ----
    num_kb = N // k_block
    m_i = jnp.full((H, N, 1), -jnp.inf, jnp.float32)
    l_i = jnp.zeros((H, N, 1), jnp.float32)
    acc = jnp.zeros((H, N, hd), jnp.float32)
    for kb in range(num_kb):                               # static (unrolled) loop
        ks = kb * k_block
        k_blk = kh[:, ks:ks + k_block]                     # (H, KB, hd)
        v_blk = vh[:, ks:ks + k_block]
        s = jnp.einsum('hqd,hkd->hqk', qh, k_blk,
                       preferred_element_type=jnp.float32)  # (H, N, KB)
        if has_mask:
            s = s + mask_full[None, :, ks:ks + k_block]
        m_new = jnp.maximum(m_i, jnp.max(s, axis=-1, keepdims=True))
        alpha = jnp.exp(m_i - m_new)
        p = jnp.exp(s - m_new)
        l_i = alpha * l_i + jnp.sum(p, axis=-1, keepdims=True)
        acc = alpha * acc + jnp.einsum('hqk,hkd->hqd', p.astype(jnp.bfloat16), v_blk,
                                       preferred_element_type=jnp.float32)
        m_i = m_new
    ctx = acc * pl.reciprocal(l_i, approx=True)            # (H, N, hd) f32

    # ---- output projection: head merge rides the MXU contraction ----
    # wo_ref is (H, hd, D); per-head matmul then a cheap VPU sum over heads.
    attn = jnp.sum(
        jnp.einsum('hqd,hdo->hqo', ctx.astype(jnp.bfloat16), wo_ref[...],
                   preferred_element_type=jnp.float32),
        axis=0) + bo_ref[...]                               # (N, D)

    # Residual adds to the *normalized* x (the PyTorch forward overwrites x with norm1(x)).
    x1 = xn + attn

    # ---- norm2 + MLP (exact GELU) ----
    x2n = _layernorm(x1).astype(jnp.bfloat16)
    h1 = jnp.dot(x2n, w1_ref[...], preferred_element_type=jnp.float32) + b1_ref[...]
    h1 = _gelu_exact_kernel(h1)
    h2 = jnp.dot(h1.astype(jnp.bfloat16), w2_ref[...],
                 preferred_element_type=jnp.float32) + b2_ref[...]

    o_ref[0] = (x1 + h2).astype(o_ref.dtype)


def transformer_encoder_block(x, params, *, num_heads, mask=None, k_block=None,
                              conservative=False, vmem_limit_bytes=None):
    B, N, D = x.shape
    Hm = params["w1"].shape[1]
    hd = D // num_heads
    bf16 = jnp.bfloat16

    if k_block is None:
        k_block = min(N, 512)
    assert N % k_block == 0, "N must be a multiple of k_block"

    # Host-side, one-time weight prep:
    #  * fold 1/sqrt(head_dim) into the Q projection (weights and bias)
    #  * fuse Q/K/V into a single (D, 3D) matmul
    #  * reshape the output projection to (H, hd, D) so the head merge is a contraction
    #  * pre-cast matmul weights to bf16 (biases stay f32, added to f32 accumulators)
    scale = hd ** -0.5
    wqkv = jnp.concatenate(
        [params["wq"] * scale, params["wk"], params["wv"]], axis=1).astype(bf16)
    bqkv = jnp.concatenate(
        [params["bq"] * scale, params["bk"], params["bv"]], axis=1)      # f32 (1, 3D)
    wo_r = params["wo"].reshape(num_heads, hd, D).astype(bf16)
    w1 = params["w1"].astype(bf16)
    w2 = params["w2"].astype(bf16)

    has_mask = mask is not None

    def weight_spec(shape):
        zero = lambda b: (0,) * len(shape)
        if conservative:
            return pl.BlockSpec(shape, zero)
        # Constant-index across the grid: single-buffer to halve weight VMEM footprint.
        return pl.BlockSpec(shape, zero, pipeline_mode=pl.Buffered(1))

    in_specs = [pl.BlockSpec((1, N, D), lambda b: (b, 0, 0))]            # x
    args = [x]
    if has_mask:
        in_specs.append(pl.BlockSpec((1, N, N), lambda b: (b, 0, 0)))
        args.append(mask.astype(bf16))   # half the mask DMA; added to f32 logits in-kernel
    in_specs += [
        weight_spec((D, 3 * D)), weight_spec((1, 3 * D)),                # wqkv, bqkv
        weight_spec((num_heads, hd, D)), weight_spec((1, D)),            # wo,   bo
        weight_spec((D, Hm)), weight_spec((1, Hm)),                      # w1,   b1
        weight_spec((Hm, D)), weight_spec((1, D)),                       # w2,   b2
    ]
    args += [wqkv, bqkv, wo_r, params["bo"], w1, params["b1"], w2, params["b2"]]

    kernel = functools.partial(encoder_block_kernel, num_heads=num_heads,
                               k_block=k_block, has_mask=has_mask,
                               conservative=conservative)

    # TODO(synk): for realistic N (>=1024) add a query-tile grid axis (grid=(B, N//TN))
    # with K/V produced once by a separate projection kernel (or recomputed per tile),
    # and for tiny-N workloads block several batch rows per grid step to fill the MXU
    # M dimension; on v5e with D>=768 pass vmem_limit_bytes explicitly.
    return pl.pallas_call(
        kernel,
        out_shape=jax.ShapeDtypeStruct((B, N, D), x.dtype),
        grid=(B,),
        in_specs=in_specs,
        out_specs=pl.BlockSpec((1, N, D), lambda b: (b, 0, 0)),
        compiler_params=pltpu.CompilerParams(
            dimension_semantics=("parallel",),
            vmem_limit_bytes=vmem_limit_bytes),
    )(*args)


def reference_block(x, params, *, num_heads, mask=None):
    # Pure-JAX fp32 reference mirroring the PyTorch forward.
    B, N, D = x.shape
    hd = D // num_heads
    xn = _layernorm(x)
    q = xn @ params["wq"] + params["bq"]
    k = xn @ params["wk"] + params["bk"]
    v = xn @ params["wv"] + params["bv"]
    q = q.reshape(B, N, num_heads, hd).transpose(0, 2, 1, 3)
    k = k.reshape(B, N, num_heads, hd).transpose(0, 2, 1, 3)
    v = v.reshape(B, N, num_heads, hd).transpose(0, 2, 1, 3)
    s = jnp.einsum("bhqd,bhkd->bhqk", q, k) * (hd ** -0.5)
    if mask is not None:
        s = s + mask[:, None]
    p = jax.nn.softmax(s, axis=-1)
    o = jnp.einsum("bhqk,bhkd->bhqd", p, v)
    o = o.transpose(0, 2, 1, 3).reshape(B, N, D)
    o = o @ params["wo"] + params["bo"]
    x1 = xn + o
    x2n = _layernorm(x1)
    h = _gelu_exact_ref(x2n @ params["w1"] + params["b1"])
    h = h @ params["w2"] + params["b2"]
    return x1 + h


def make_params(key, hidden, num_heads, mlp_ratio=4):
    mlp_hidden = hidden * mlp_ratio
    ks = jax.random.split(key, 12)
    std = 0.02
    return {
        "wq": jax.random.normal(ks[0], (hidden, hidden), jnp.float32) * std,
        "bq": jax.random.normal(ks[1], (1, hidden), jnp.float32) * std,
        "wk": jax.random.normal(ks[2], (hidden, hidden), jnp.float32) * std,
        "bk": jax.random.normal(ks[3], (1, hidden), jnp.float32) * std,
        "wv": jax.random.normal(ks[4], (hidden, hidden), jnp.float32) * std,
        "bv": jax.random.normal(ks[5], (1, hidden), jnp.float32) * std,
        "wo": jax.random.normal(ks[6], (hidden, hidden), jnp.float32) * std,
        "bo": jax.random.normal(ks[7], (1, hidden), jnp.float32) * std,
        "w1": jax.random.normal(ks[8], (hidden, mlp_hidden), jnp.float32) * std,
        "b1": jax.random.normal(ks[9], (1, mlp_hidden), jnp.float32) * std,
        "w2": jax.random.normal(ks[10], (mlp_hidden, hidden), jnp.float32) * std,
        "b2": jax.random.normal(ks[11], (1, hidden), jnp.float32) * std,
    }


if __name__ == "__main__":
    # Small but lane-dense shapes: B=2, seq N=8, hidden D=128, heads=4 (hd=32).
    B, N, D, H = 2, 8, 128, 4

    key = jax.random.PRNGKey(0)
    kx, kp, km = jax.random.split(key, 3)
    x = jax.random.normal(kx, (B, N, D), jnp.float32)
    params = make_params(kp, D, H, mlp_ratio=4)

    def run(msk, cons):
        return jax.block_until_ready(
            transformer_encoder_block(x, params, num_heads=H, mask=msk,
                                      conservative=cons))

    # Primary path uses pl.Buffered(1) single-buffered weights and einshape head split;
    # if this JAX build rejects either, fall back to the conservative (default-buffered,
    # slice/concat head split) variant -- identical math.
    try:
        out = run(None, False)
        cons = False
    except Exception:
        cons = True
        out = run(None, True)

    ref = reference_block(x, params, num_heads=H, mask=None)
    assert out.shape == (B, N, D)
    assert jnp.allclose(out, ref, atol=2e-2, rtol=2e-2), (
        f"mismatch vs reference (no mask), max abs err "
        f"{float(jnp.max(jnp.abs(out - ref)))}")

    # Additive-mask path (mask streamed as bf16).
    mask = jax.random.normal(km, (B, N, N), jnp.float32)
    out_m = run(mask, cons)
    ref_m = reference_block(x, params, num_heads=H, mask=mask)
    assert jnp.allclose(out_m, ref_m, atol=2e-2, rtol=2e-2), (
        f"mismatch vs reference (mask), max abs err "
        f"{float(jnp.max(jnp.abs(out_m - ref_m)))}")

    print("KERNEL_OK")
</pallas_src>

<mosaic_0001>
module attributes {stable_mosaic.version = 11 : i64} {
  func.func @encoder_block_kernel(%arg0: i32, %arg1: memref<1x8x128xf32, #tpu.memory_space<vmem>>, %arg2: memref<128x384xbf16, #tpu.memory_space<vmem>>, %arg3: memref<1x384xf32, #tpu.memory_space<vmem>>, %arg4: memref<4x32x128xbf16, #tpu.memory_space<vmem>>, %arg5: memref<1x128xf32, #tpu.memory_space<vmem>>, %arg6: memref<128x512xbf16, #tpu.memory_space<vmem>>, %arg7: memref<1x512xf32, #tpu.memory_space<vmem>>, %arg8: memref<512x128xbf16, #tpu.memory_space<vmem>>, %arg9: memref<1x128xf32, #tpu.memory_space<vmem>>, %arg10: memref<1x8x128xf32, #tpu.memory_space<vmem>>) attributes {dimension_semantics = [#tpu.dimension_semantics<parallel>], iteration_bounds = array<i64: 2>, scalar_prefetch = 0 : i64, scratch_operands = 0 : i64, tpu.core_type = #tpu.core_type<tc>, window_params = [{transform_indices = @transform_0, window_bounds = array<i64: 1, 8, 128>}, {pipeline_mode = #tpu.pipeline_mode<synchronous>, transform_indices = @transform_1, window_bounds = array<i64: 128, 384>}, {pipeline_mode = #tpu.pipeline_mode<synchronous>, transform_indices = @transform_2, window_bounds = array<i64: 1, 384>}, {pipeline_mode = #tpu.pipeline_mode<synchronous>, transform_indices = @transform_3, window_bounds = array<i64: 4, 32, 128>}, {pipeline_mode = #tpu.pipeline_mode<synchronous>, transform_indices = @transform_4, window_bounds = array<i64: 1, 128>}, {pipeline_mode = #tpu.pipeline_mode<synchronous>, transform_indices = @transform_5, window_bounds = array<i64: 128, 512>}, {pipeline_mode = #tpu.pipeline_mode<synchronous>, transform_indices = @transform_6, window_bounds = array<i64: 1, 512>}, {pipeline_mode = #tpu.pipeline_mode<synchronous>, transform_indices = @transform_7, window_bounds = array<i64: 512, 128>}, {pipeline_mode = #tpu.pipeline_mode<synchronous>, transform_indices = @transform_8, window_bounds = array<i64: 1, 128>}, {transform_indices = @transform_9, window_bounds = array<i64: 1, 8, 128>}]} {
    %c0 = arith.constant 0 : index
    %c0_0 = arith.constant 0 : index
    %c0_1 = arith.constant 0 : index
    %0 = vector.load %arg1[%c0, %c0_0, %c0_1] : memref<1x8x128xf32, #tpu.memory_space<vmem>>, vector<1x8x128xf32>
    %1 = vector.shape_cast %0 : vector<1x8x128xf32> to vector<8x128xf32>
    %cst = arith.constant dense<0.000000e+00> : vector<8xf32>
    %2 = vector.multi_reduction <add>, %1, %cst [1] : vector<8x128xf32> to vector<8xf32>
    %3 = vector.shape_cast %2 : vector<8xf32> to vector<8x1xf32>
    %cst_2 = arith.constant 1.280000e+02 : f32
    %4 = vector.broadcast %cst_2 : f32 to vector<8x1xf32>
    %5 = arith.divf %3, %4 : vector<8x1xf32>
    %6 = vector.broadcast %5 : vector<8x1xf32> to vector<8x128xf32>
    %7 = arith.subf %1, %6 : vector<8x128xf32>
    %8 = arith.mulf %7, %7 : vector<8x128xf32>
    %cst_3 = arith.constant dense<0.000000e+00> : vector<8xf32>
    %9 = vector.multi_reduction <add>, %8, %cst_3 [1] : vector<8x128xf32> to vector<8xf32>
    %10 = vector.shape_cast %9 : vector<8xf32> to vector<8x1xf32>
    %cst_4 = arith.constant 1.280000e+02 : f32
    %11 = vector.broadcast %cst_4 : f32 to vector<8x1xf32>
    %12 = arith.divf %10, %11 : vector<8x1xf32>
    %13 = vector.broadcast %5 : vector<8x1xf32> to vector<8x128xf32>
    %14 = arith.subf %1, %13 : vector<8x128xf32>
    %cst_5 = arith.constant 9.99999997E-7 : f32
    %15 = vector.broadcast %cst_5 : f32 to vector<8x1xf32>
    %16 = arith.addf %12, %15 : vector<8x1xf32>
    %17 = math.rsqrt %16 : vector<8x1xf32>
    %18 = vector.broadcast %17 : vector<8x1xf32> to vector<8x128xf32>
    %19 = arith.mulf %14, %18 : vector<8x128xf32>
    %20 = arith.truncf %19 : vector<8x128xf32> to vector<8x128xbf16>
    %c0_6 = arith.constant 0 : index
    %c0_7 = arith.constant 0 : index
    %21 = vector.load %arg2[%c0_6, %c0_7] : memref<128x384xbf16, #tpu.memory_space<vmem>>, vector<128x384xbf16>
    %cst_8 = arith.constant dense<0.000000e+00> : vector<8x384xf32>
    %22 = tpu.matmul %20, %21, %cst_8 {dimension_numbers = #tpu.dot_dimension_numbers<[1], [0], [0], [1], [0, 0, 1, 1], [], []>} : vector<8x128xbf16>, vector<128x384xbf16>, vector<8x384xf32> -> vector<8x384xf32>
    %c0_9 = arith.constant 0 : index
    %c0_10 = arith.constant 0 : index
    %23 = vector.load %arg3[%c0_9, %c0_10] : memref<1x384xf32, #tpu.memory_space<vmem>>, vector<1x384xf32>
    %24 = vector.broadcast %23 : vector<1x384xf32> to vector<8x384xf32>
    %25 = arith.addf %22, %24 : vector<8x384xf32>
    %26 = vector.extract_strided_slice %25 {offsets = [0, 0], sizes = [8, 128], strides = [1, 1]} : vector<8x384xf32> to vector<8x128xf32>
    %27 = arith.truncf %26 : vector<8x128xf32> to vector<8x128xbf16>
    %28 = vector.shape_cast %27 : vector<8x128xbf16> to vector<8x4x32xbf16>
    %29 = tpu.transpose %28, [1, 0, 2] : vector<8x4x32xbf16> -> vector<4x8x32xbf16>
    %30 = vector.extract_strided_slice %25 {offsets = [0, 128], sizes = [8, 128], strides = [1, 1]} : vector<8x384xf32> to vector<8x128xf32>
    %31 = arith.truncf %30 : vector<8x128xf32> to vector<8x128xbf16>
    %32 = vector.shape_cast %31 : vector<8x128xbf16> to vector<8x4x32xbf16>
    %33 = tpu.transpose %32, [1, 0, 2] : vector<8x4x32xbf16> -> vector<4x8x32xbf16>
    %34 = vector.extract_strided_slice %25 {offsets = [0, 256], sizes = [8, 128], strides = [1, 1]} : vector<8x384xf32> to vector<8x128xf32>
    %35 = arith.truncf %34 : vector<8x128xf32> to vector<8x128xbf16>
    %36 = vector.shape_cast %35 : vector<8x128xbf16> to vector<8x4x32xbf16>
    %37 = tpu.transpose %36, [1, 0, 2] : vector<8x4x32xbf16> -> vector<4x8x32xbf16>
    %cst_11 = arith.constant 0xFF800000 : f32
    %38 = vector.broadcast %cst_11 : f32 to vector<4x8x1xf32>
    %cst_12 = arith.constant 0.000000e+00 : f32
    %39 = vector.broadcast %cst_12 : f32 to vector<4x8x1xf32>
    %cst_13 = arith.constant 0.000000e+00 : f32
    %40 = vector.broadcast %cst_13 : f32 to vector<4x8x32xf32>
    "tpu.trace_start"() <{level = 10 : i32, message = "hqd,hkd->hqk"}> : () -> ()
    %cst_14 = arith.constant dense<0.000000e+00> : vector<4x8x8xf32>
    %41 = tpu.matmul %29, %33, %cst_14 {dimension_numbers = #tpu.dot_dimension_numbers<[2], [2], [1], [1], [0, 0, 0, 1, 1, 1], [0], [0]>} : vector<4x8x32xbf16>, vector<4x8x32xbf16>, vector<4x8x8xf32> -> vector<4x8x8xf32>
    "tpu.trace_stop"() : () -> ()
    %cst_15 = arith.constant dense<0xFF800000> : vector<4x8xf32>
    %42 = vector.multi_reduction <maximumf>, %41, %cst_15 [2] : vector<4x8x8xf32> to vector<4x8xf32>
    %43 = vector.shape_cast %42 : vector<4x8xf32> to vector<4x8x1xf32>
    %44 = arith.maximumf %38, %43 : vector<4x8x1xf32>
    %45 = arith.subf %38, %44 : vector<4x8x1xf32>
    %46 = math.exp %45 : vector<4x8x1xf32>
    %47 = vector.broadcast %44 : vector<4x8x1xf32> to vector<4x8x8xf32>
    %48 = arith.subf %41, %47 : vector<4x8x8xf32>
    %49 = math.exp %48 : vector<4x8x8xf32>
    %50 = arith.mulf %46, %39 : vector<4x8x1xf32>
    %cst_16 = arith.constant dense<0.000000e+00> : vector<4x8xf32>
    %51 = vector.multi_reduction <add>, %49, %cst_16 [2] : vector<4x8x8xf32> to vector<4x8xf32>
    %52 = vector.shape_cast %51 : vector<4x8xf32> to vector<4x8x1xf32>
    %53 = arith.addf %50, %52 : vector<4x8x1xf32>
    %54 = vector.broadcast %46 : vector<4x8x1xf32> to vector<4x8x32xf32>
    %55 = arith.mulf %54, %40 : vector<4x8x32xf32>
    %56 = arith.truncf %49 : vector<4x8x8xf32> to vector<4x8x8xbf16>
    "tpu.trace_start"() <{level = 10 : i32, message = "hqk,hkd->hqd"}> : () -> ()
    %cst_17 = arith.constant dense<0.000000e+00> : vector<4x8x32xf32>
    %57 = tpu.matmul %56, %37, %cst_17 {dimension_numbers = #tpu.dot_dimension_numbers<[2], [1], [1], [2], [0, 0, 0, 1, 1, 2], [0], [0]>} : vector<4x8x8xbf16>, vector<4x8x32xbf16>, vector<4x8x32xf32> -> vector<4x8x32xf32>
    "tpu.trace_stop"() : () -> ()
    %58 = arith.addf %55, %57 : vector<4x8x32xf32>
    %59 = tpu.reciprocal %53 {approx = true} : vector<4x8x1xf32> -> vector<4x8x1xf32>
    %60 = vector.broadcast %59 : vector<4x8x1xf32> to vector<4x8x32xf32>
    %61 = arith.mulf %58, %60 : vector<4x8x32xf32>
    %62 = arith.truncf %61 : vector<4x8x32xf32> to vector<4x8x32xbf16>
    %c0_18 = arith.constant 0 : index
    %c0_19 = arith.constant 0 : index
    %c0_20 = arith.constant 0 : index
    %63 = vector.load %arg4[%c0_18, %c0_19, %c0_20] : memref<4x32x128xbf16, #tpu.memory_space<vmem>>, vector<4x32x128xbf16>
    "tpu.trace_start"() <{level = 10 : i32, message = "hqd,hdo->hqo"}> : () -> ()
    %cst_21 = arith.constant dense<0.000000e+00> : vector<4x8x128xf32>
    %64 = tpu.matmul %62, %63, %cst_21 {dimension_numbers = #tpu.dot_dimension_numbers<[2], [1], [1], [2], [0, 0, 0, 1, 1, 2], [0], [0]>} : vector<4x8x32xbf16>, vector<4x32x128xbf16>, vector<4x8x128xf32> -> vector<4x8x128xf32>
    "tpu.trace_stop"() : () -> ()
    %cst_22 = arith.constant dense<0.000000e+00> : vector<8x128xf32>
    %65 = vector.multi_reduction <add>, %64, %cst_22 [0] : vector<4x8x128xf32> to vector<8x128xf32>
    %c0_23 = arith.constant 0 : index
    %c0_24 = arith.constant 0 : index
    %66 = vector.load %arg5[%c0_23, %c0_24] : memref<1x128xf32, #tpu.memory_space<vmem>>, vector<1x128xf32>
    %67 = vector.broadcast %66 : vector<1x128xf32> to vector<8x128xf32>
    %68 = arith.addf %65, %67 : vector<8x128xf32>
    %69 = arith.addf %19, %68 : vector<8x128xf32>
    %cst_25 = arith.constant dense<0.000000e+00> : vector<8xf32>
    %70 = vector.multi_reduction <add>, %69, %cst_25 [1] : vector<8x128xf32> to vector<8xf32>
    %71 = vector.shape_cast %70 : vector<8xf32> to vector<8x1xf32>
    %cst_26 = arith.constant 1.280000e+02 : f32
    %72 = vector.broadcast %cst_26 : f32 to vector<8x1xf32>
    %73 = arith.divf %71, %72 : vector<8x1xf32>
    %74 = vector.broadcast %73 : vector<8x1xf32> to vector<8x128xf32>
    %75 = arith.subf %69, %74 : vector<8x128xf32>
    %76 = arith.mulf %75, %75 : vector<8x128xf32>
    %cst_27 = arith.constant dense<0.000000e+00> : vector<8xf32>
    %77 = vector.multi_reduction <add>, %76, %cst_27 [1] : vector<8x128xf32> to vector<8xf32>
    %78 = vector.shape_cast %77 : vector<8xf32> to vector<8x1xf32>
    %cst_28 = arith.constant 1.280000e+02 : f32
    %79 = vector.broadcast %cst_28 : f32 to vector<8x1xf32>
    %80 = arith.divf %78, %79 : vector<8x1xf32>
    %81 = vector.broadcast %73 : vector<8x1xf32> to vector<8x128xf32>
    %82 = arith.subf %69, %81 : vector<8x128xf32>
    %cst_29 = arith.constant 9.99999997E-7 : f32
    %83 = vector.broadcast %cst_29 : f32 to vector<8x1xf32>
    %84 = arith.addf %80, %83 : vector<8x1xf32>
    %85 = math.rsqrt %84 : vector<8x1xf32>
    %86 = vector.broadcast %85 : vector<8x1xf32> to vector<8x128xf32>
    %87 = arith.mulf %82, %86 : vector<8x128xf32>
    %88 = arith.truncf %87 : vector<8x128xf32> to vector<8x128xbf16>
    %c0_30 = arith.constant 0 : index
    %c0_31 = arith.constant 0 : index
    %89 = vector.load %arg6[%c0_30, %c0_31] : memref<128x512xbf16, #tpu.memory_space<vmem>>, vector<128x512xbf16>
    %cst_32 = arith.constant dense<0.000000e+00> : vector<8x512xf32>
    %90 = tpu.matmul %88, %89, %cst_32 {dimension_numbers = #tpu.dot_dimension_numbers<[1], [0], [0], [1], [0, 0, 1, 1], [], []>} : vector<8x128xbf16>, vector<128x512xbf16>, vector<8x512xf32> -> vector<8x512xf32>
    %c0_33 = arith.constant 0 : index
    %c0_34 = arith.constant 0 : index
    %91 = vector.load %arg7[%c0_33, %c0_34] : memref<1x512xf32, #tpu.memory_space<vmem>>, vector<1x512xf32>
    %92 = vector.broadcast %91 : vector<1x512xf32> to vector<8x512xf32>
    %93 = arith.addf %90, %92 : vector<8x512xf32>
    %cst_35 = arith.constant 5.000000e-01 : f32
    %94 = vector.broadcast %cst_35 : f32 to vector<8x512xf32>
    %95 = arith.mulf %94, %93 : vector<8x512xf32>
    %cst_36 = arith.constant 0.707106769 : f32
    %96 = vector.broadcast %cst_36 : f32 to vector<8x512xf32>
    %97 = arith.mulf %93, %96 : vector<8x512xf32>
    %98 = math.absf %97 : vector<8x512xf32>
    %cst_37 = arith.constant 0.327591091 : f32
    %99 = vector.broadcast %cst_37 : f32 to vector<8x512xf32>
    %100 = arith.mulf %99, %98 : vector<8x512xf32>
    %cst_38 = arith.constant 1.000000e+00 : f32
    %101 = vector.broadcast %cst_38 : f32 to vector<8x512xf32>
    %102 = arith.addf %101, %100 : vector<8x512xf32>
    %cst_39 = arith.constant 1.000000e+00 : f32
    %103 = vector.broadcast %cst_39 : f32 to vector<8x512xf32>
    %104 = arith.divf %103, %102 : vector<8x512xf32>
    %cst_40 = arith.constant 1.06140542 : f32
    %105 = vector.broadcast %cst_40 : f32 to vector<8x512xf32>
    %106 = arith.mulf %105, %104 : vector<8x512xf32>
    %cst_41 = arith.constant -1.45315206 : f32
    %107 = vector.broadcast %cst_41 : f32 to vector<8x512xf32>
    %108 = arith.addf %106, %107 : vector<8x512xf32>
    %109 = arith.mulf %108, %104 : vector<8x512xf32>
    %cst_42 = arith.constant 1.42141378 : f32
    %110 = vector.broadcast %cst_42 : f32 to vector<8x512xf32>
    %111 = arith.addf %109, %110 : vector<8x512xf32>
    %112 = arith.mulf %111, %104 : vector<8x512xf32>
    %cst_43 = arith.constant -0.284496725 : f32
    %113 = vector.broadcast %cst_43 : f32 to vector<8x512xf32>
    %114 = arith.addf %112, %113 : vector<8x512xf32>
    %115 = arith.mulf %114, %104 : vector<8x512xf32>
    %cst_44 = arith.constant 0.254829586 : f32
    %116 = vector.broadcast %cst_44 : f32 to vector<8x512xf32>
    %117 = arith.addf %115, %116 : vector<8x512xf32>
    %118 = arith.mulf %117, %104 : vector<8x512xf32>
    %cst_45 = arith.constant 0.000000e+00 : f32
    %119 = vector.broadcast %cst_45 : f32 to vector<8x512xf32>
    %120 = arith.subf %119, %98 : vector<8x512xf32>
    %121 = arith.mulf %120, %98 : vector<8x512xf32>
    %122 = math.exp %121 : vector<8x512xf32>
    %123 = arith.mulf %118, %122 : vector<8x512xf32>
    %cst_46 = arith.constant 1.000000e+00 : f32
    %124 = vector.broadcast %cst_46 : f32 to vector<8x512xf32>
    %125 = arith.subf %124, %123 : vector<8x512xf32>
    %cst_47 = arith.constant 0.000000e+00 : f32
    %126 = vector.broadcast %cst_47 : f32 to vector<8x512xf32>
    %127 = arith.cmpf oge, %97, %126 : vector<8x512xf32>
    %cst_48 = arith.constant 0.000000e+00 : f32
    %128 = vector.broadcast %cst_48 : f32 to vector<8x512xf32>
    %129 = arith.subf %128, %125 : vector<8x512xf32>
    %130 = arith.select %127, %125, %129 : vector<8x512xi1>, vector<8x512xf32>
    %cst_49 = arith.constant 1.000000e+00 : f32
    %131 = vector.broadcast %cst_49 : f32 to vector<8x512xf32>
    %132 = arith.addf %131, %130 : vector<8x512xf32>
    %133 = arith.mulf %95, %132 : vector<8x512xf32>
    %134 = arith.truncf %133 : vector<8x512xf32> to vector<8x512xbf16>
    %c0_50 = arith.constant 0 : index
    %c0_51 = arith.constant 0 : index
    %135 = vector.load %arg8[%c0_50, %c0_51] : memref<512x128xbf16, #tpu.memory_space<vmem>>, vector<512x128xbf16>
    %cst_52 = arith.constant dense<0.000000e+00> : vector<8x128xf32>
    %136 = tpu.matmul %134, %135, %cst_52 {dimension_numbers = #tpu.dot_dimension_numbers<[1], [0], [0], [1], [0, 0, 1, 1], [], []>} : vector<8x512xbf16>, vector<512x128xbf16>, vector<8x128xf32> -> vector<8x128xf32>
    %c0_53 = arith.constant 0 : index
    %c0_54 = arith.constant 0 : index
    %137 = vector.load %arg9[%c0_53, %c0_54] : memref<1x128xf32, #tpu.memory_space<vmem>>, vector<1x128xf32>
    %138 = vector.broadcast %137 : vector<1x128xf32> to vector<8x128xf32>
    %139 = arith.addf %136, %138 : vector<8x128xf32>
    %140 = arith.addf %69, %139 : vector<8x128xf32>
    %c0_55 = arith.constant 0 : index
    %c0_56 = arith.constant 0 : index
    %c0_57 = arith.constant 0 : index
    %141 = vector.load %arg10[%c0_55, %c0_56, %c0_57] : memref<1x8x128xf32, #tpu.memory_space<vmem>>, vector<1x8x128xf32>
    %142 = vector.shape_cast %141 : vector<1x8x128xf32> to vector<8x128xf32>
    %143 = vector.shape_cast %140 : vector<8x128xf32> to vector<1x8x128xf32>
    tpu.vector_store %arg10[%c0_55, %c0_56, %c0_57], %143 {strides = array<i32>} : memref<1x8x128xf32, #tpu.memory_space<vmem>>, vector<1x8x128xf32>,
    return
  }
  func.func @transform_0(%arg0: i32) -> (i32, i32, i32) {
    %c0_i32 = arith.constant 0 : i32
    %c0_i32_0 = arith.constant 0 : i32
    %c0_i32_1 = arith.constant 0 : i32
    return %arg0, %c0_i32, %c0_i32_0 : i32, i32, i32
  }
  func.func @transform_1(%arg0: i32) -> (i32, i32) {
    %c0_i32 = arith.constant 0 : i32
    %c0_i32_0 = arith.constant 0 : i32
    %c0_i32_1 = arith.constant 0 : i32
    return %c0_i32, %c0_i32_0 : i32, i32
  }
  func.func @transform_2(%arg0: i32) -> (i32, i32) {
    %c0_i32 = arith.constant 0 : i32
    %c0_i32_0 = arith.constant 0 : i32
    %c0_i32_1 = arith.constant 0 : i32
    return %c0_i32, %c0_i32_0 : i32, i32
  }
  func.func @transform_3(%arg0: i32) -> (i32, i32, i32) {
    %c0_i32 = arith.constant 0 : i32
    %c0_i32_0 = arith.constant 0 : i32
    %c0_i32_1 = arith.constant 0 : i32
    %c0_i32_2 = arith.constant 0 : i32
    return %c0_i32, %c0_i32_0, %c0_i32_1 : i32, i32, i32
  }
  func.func @transform_4(%arg0: i32) -> (i32, i32) {
    %c0_i32 = arith.constant 0 : i32
    %c0_i32_0 = arith.constant 0 : i32
    %c0_i32_1 = arith.constant 0 : i32
    return %c0_i32, %c0_i32_0 : i32, i32
  }
  func.func @transform_5(%arg0: i32) -> (i32, i32) {
    %c0_i32 = arith.constant 0 : i32
    %c0_i32_0 = arith.constant 0 : i32
    %c0_i32_1 = arith.constant 0 : i32
    return %c0_i32, %c0_i32_0 : i32, i32
  }
  func.func @transform_6(%arg0: i32) -> (i32, i32) {
    %c0_i32 = arith.constant 0 : i32
    %c0_i32_0 = arith.constant 0 : i32
    %c0_i32_1 = arith.constant 0 : i32
    return %c0_i32, %c0_i32_0 : i32, i32
  }
  func.func @transform_7(%arg0: i32) -> (i32, i32) {
    %c0_i32 = arith.constant 0 : i32
    %c0_i32_0 = arith.constant 0 : i32
    %c0_i32_1 = arith.constant 0 : i32
    return %c0_i32, %c0_i32_0 : i32, i32
  }
  func.func @transform_8(%arg0: i32) -> (i32, i32) {
    %c0_i32 = arith.constant 0 : i32
    %c0_i32_0 = arith.constant 0 : i32
    %c0_i32_1 = arith.constant 0 : i32
    return %c0_i32, %c0_i32_0 : i32, i32
  }
  func.func @transform_9(%arg0: i32) -> (i32, i32, i32) {
    %c0_i32 = arith.constant 0 : i32
    %c0_i32_0 = arith.constant 0 : i32
    %c0_i32_1 = arith.constant 0 : i32
    return %arg0, %c0_i32, %c0_i32_0 : i32, i32, i32
  }
}

module attributes {stable_mosaic.version = 11 : i64} {
  func.func @encoder_block_kernel(%arg0: i32, %arg1: memref<1x8x128xf32, #tpu.memory_space<vmem>>, %arg2: memref<128x384xbf16, #tpu.memory_space<vmem>>, %arg3: memref<1x384xf32, #tpu.memory_space<vmem>>, %arg4: memref<4x32x128xbf16, #tpu.memory_space<vmem>>, %arg5: memref<1x128xf32, #tpu.memory_space<vmem>>, %arg6: memref<128x512xbf16, #tpu.memory_space<vmem>>, %arg7: memref<1x512xf32, #tpu.memory_space<vmem>>, %arg8: memref<512x128xbf16, #tpu.memory_space<vmem>>, %arg9: memref<1x128xf32, #tpu.memory_space<vmem>>, %arg10: memref<1x8x128xf32, #tpu.memory_space<vmem>>) attributes {dimension_semantics = [#tpu.dimension_semantics<parallel>], iteration_bounds = array<i64: 2>, scalar_prefetch = 0 : i64, scratch_operands = 0 : i64, tpu.core_type = #tpu.core_type<tc>, window_params = [{transform_indices = @transform_0, window_bounds = array<i64: 1, 8, 128>}, {pipeline_mode = #tpu.pipeline_mode<synchronous>, transform_indices = @transform_1, window_bounds = array<i64: 128, 384>}, {pipeline_mode = #tpu.pipeline_mode<synchronous>, transform_indices = @transform_2, window_bounds = array<i64: 1, 384>}, {pipeline_mode = #tpu.pipeline_mode<synchronous>, transform_indices = @transform_3, window_bounds = array<i64: 4, 32, 128>}, {pipeline_mode = #tpu.pipeline_mode<synchronous>, transform_indices = @transform_4, window_bounds = array<i64: 1, 128>}, {pipeline_mode = #tpu.pipeline_mode<synchronous>, transform_indices = @transform_5, window_bounds = array<i64: 128, 512>}, {pipeline_mode = #tpu.pipeline_mode<synchronous>, transform_indices = @transform_6, window_bounds = array<i64: 1, 512>}, {pipeline_mode = #tpu.pipeline_mode<synchronous>, transform_indices = @transform_7, window_bounds = array<i64: 512, 128>}, {pipeline_mode = #tpu.pipeline_mode<synchronous>, transform_indices = @transform_8, window_bounds = array<i64: 1, 128>}, {transform_indices = @transform_9, window_bounds = array<i64: 1, 8, 128>}]} {
    %c0 = arith.constant 0 : index
    %c0_0 = arith.constant 0 : index
    %c0_1 = arith.constant 0 : index
    %0 = vector.load %arg1[%c0, %c0_0, %c0_1] : memref<1x8x128xf32, #tpu.memory_space<vmem>>, vector<1x8x128xf32>
    %1 = vector.shape_cast %0 : vector<1x8x128xf32> to vector<8x128xf32>
    %cst = arith.constant dense<0.000000e+00> : vector<8xf32>
    %2 = vector.multi_reduction <add>, %1, %cst [1] : vector<8x128xf32> to vector<8xf32>
    %3 = vector.shape_cast %2 : vector<8xf32> to vector<8x1xf32>
    %cst_2 = arith.constant 1.280000e+02 : f32
    %4 = vector.broadcast %cst_2 : f32 to vector<8x1xf32>
    %5 = arith.divf %3, %4 : vector<8x1xf32>
    %6 = vector.broadcast %5 : vector<8x1xf32> to vector<8x128xf32>
    %7 = arith.subf %1, %6 : vector<8x128xf32>
    %8 = arith.mulf %7, %7 : vector<8x128xf32>
    %cst_3 = arith.constant dense<0.000000e+00> : vector<8xf32>
    %9 = vector.multi_reduction <add>, %8, %cst_3 [1] : vector<8x128xf32> to vector<8xf32>
    %10 = vector.shape_cast %9 : vector<8xf32> to vector<8x1xf32>
    %cst_4 = arith.constant 1.280000e+02 : f32
    %11 = vector.broadcast %cst_4 : f32 to vector<8x1xf32>
    %12 = arith.divf %10, %11 : vector<8x1xf32>
    %13 = vector.broadcast %5 : vector<8x1xf32> to vector<8x128xf32>
    %14 = arith.subf %1, %13 : vector<8x128xf32>
    %cst_5 = arith.constant 9.99999997E-7 : f32
    %15 = vector.broadcast %cst_5 : f32 to vector<8x1xf32>
    %16 = arith.addf %12, %15 : vector<8x1xf32>
    %17 = math.rsqrt %16 : vector<8x1xf32>
    %18 = vector.broadcast %17 : vector<8x1xf32> to vector<8x128xf32>
    %19 = arith.mulf %14, %18 : vector<8x128xf32>
    %20 = arith.truncf %19 : vector<8x128xf32> to vector<8x128xbf16>
    %c0_6 = arith.constant 0 : index
    %c0_7 = arith.constant 0 : index
    %21 = vector.load %arg2[%c0_6, %c0_7] : memref<128x384xbf16, #tpu.memory_space<vmem>>, vector<128x384xbf16>
    %cst_8 = arith.constant dense<0.000000e+00> : vector<8x384xf32>
    %22 = tpu.matmul %20, %21, %cst_8 {dimension_numbers = #tpu.dot_dimension_numbers<[1], [0], [0], [1], [0, 0, 1, 1], [], []>} : vector<8x128xbf16>, vector<128x384xbf16>, vector<8x384xf32> -> vector<8x384xf32>
    %c0_9 = arith.constant 0 : index
    %c0_10 = arith.constant 0 : index
    %23 = vector.load %arg3[%c0_9, %c0_10] : memref<1x384xf32, #tpu.memory_space<vmem>>, vector<1x384xf32>
    %24 = vector.broadcast %23 : vector<1x384xf32> to vector<8x384xf32>
    %25 = arith.addf %22, %24 : vector<8x384xf32>
    %26 = vector.extract_strided_slice %25 {offsets = [0, 0], sizes = [8, 128], strides = [1, 1]} : vector<8x384xf32> to vector<8x128xf32>
    %27 = arith.truncf %26 : vector<8x128xf32> to vector<8x128xbf16>
    %28 = vector.extract_strided_slice %27 {offsets = [0, 0], sizes = [8, 32], strides = [1, 1]} : vector<8x128xbf16> to vector<8x32xbf16>
    %29 = vector.shape_cast %28 : vector<8x32xbf16> to vector<1x8x32xbf16>
    %30 = vector.extract_strided_slice %27 {offsets = [0, 32], sizes = [8, 32], strides = [1, 1]} : vector<8x128xbf16> to vector<8x32xbf16>
    %31 = vector.shape_cast %30 : vector<8x32xbf16> to vector<1x8x32xbf16>
    %32 = vector.extract_strided_slice %27 {offsets = [0, 64], sizes = [8, 32], strides = [1, 1]} : vector<8x128xbf16> to vector<8x32xbf16>
    %33 = vector.shape_cast %32 : vector<8x32xbf16> to vector<1x8x32xbf16>
    %34 = vector.extract_strided_slice %27 {offsets = [0, 96], sizes = [8, 32], strides = [1, 1]} : vector<8x128xbf16> to vector<8x32xbf16>
    %35 = vector.shape_cast %34 : vector<8x32xbf16> to vector<1x8x32xbf16>
    %36 = tpu.concatenate %29, %31, %33, %35 in 0 : vector<1x8x32xbf16>, vector<1x8x32xbf16>, vector<1x8x32xbf16>, vector<1x8x32xbf16> -> vector<4x8x32xbf16>
    %37 = vector.extract_strided_slice %25 {offsets = [0, 128], sizes = [8, 128], strides = [1, 1]} : vector<8x384xf32> to vector<8x128xf32>
    %38 = arith.truncf %37 : vector<8x128xf32> to vector<8x128xbf16>
    %39 = vector.extract_strided_slice %38 {offsets = [0, 0], sizes = [8, 32], strides = [1, 1]} : vector<8x128xbf16> to vector<8x32xbf16>
    %40 = vector.shape_cast %39 : vector<8x32xbf16> to vector<1x8x32xbf16>
    %41 = vector.extract_strided_slice %38 {offsets = [0, 32], sizes = [8, 32], strides = [1, 1]} : vector<8x128xbf16> to vector<8x32xbf16>
    %42 = vector.shape_cast %41 : vector<8x32xbf16> to vector<1x8x32xbf16>
    %43 = vector.extract_strided_slice %38 {offsets = [0, 64], sizes = [8, 32], strides = [1, 1]} : vector<8x128xbf16> to vector<8x32xbf16>
    %44 = vector.shape_cast %43 : vector<8x32xbf16> to vector<1x8x32xbf16>
    %45 = vector.extract_strided_slice %38 {offsets = [0, 96], sizes = [8, 32], strides = [1, 1]} : vector<8x128xbf16> to vector<8x32xbf16>
    %46 = vector.shape_cast %45 : vector<8x32xbf16> to vector<1x8x32xbf16>
    %47 = tpu.concatenate %40, %42, %44, %46 in 0 : vector<1x8x32xbf16>, vector<1x8x32xbf16>, vector<1x8x32xbf16>, vector<1x8x32xbf16> -> vector<4x8x32xbf16>
    %48 = vector.extract_strided_slice %25 {offsets = [0, 256], sizes = [8, 128], strides = [1, 1]} : vector<8x384xf32> to vector<8x128xf32>
    %49 = arith.truncf %48 : vector<8x128xf32> to vector<8x128xbf16>
    %50 = vector.extract_strided_slice %49 {offsets = [0, 0], sizes = [8, 32], strides = [1, 1]} : vector<8x128xbf16> to vector<8x32xbf16>
    %51 = vector.shape_cast %50 : vector<8x32xbf16> to vector<1x8x32xbf16>
    %52 = vector.extract_strided_slice %49 {offsets = [0, 32], sizes = [8, 32], strides = [1, 1]} : vector<8x128xbf16> to vector<8x32xbf16>
    %53 = vector.shape_cast %52 : vector<8x32xbf16> to vector<1x8x32xbf16>
    %54 = vector.extract_strided_slice %49 {offsets = [0, 64], sizes = [8, 32], strides = [1, 1]} : vector<8x128xbf16> to vector<8x32xbf16>
    %55 = vector.shape_cast %54 : vector<8x32xbf16> to vector<1x8x32xbf16>
    %56 = vector.extract_strided_slice %49 {offsets = [0, 96], sizes = [8, 32], strides = [1, 1]} : vector<8x128xbf16> to vector<8x32xbf16>
    %57 = vector.shape_cast %56 : vector<8x32xbf16> to vector<1x8x32xbf16>
    %58 = tpu.concatenate %51, %53, %55, %57 in 0 : vector<1x8x32xbf16>, vector<1x8x32xbf16>, vector<1x8x32xbf16>, vector<1x8x32xbf16> -> vector<4x8x32xbf16>
    %cst_11 = arith.constant 0xFF800000 : f32
    %59 = vector.broadcast %cst_11 : f32 to vector<4x8x1xf32>
    %cst_12 = arith.constant 0.000000e+00 : f32
    %60 = vector.broadcast %cst_12 : f32 to vector<4x8x1xf32>
    %cst_13 = arith.constant 0.000000e+00 : f32
    %61 = vector.broadcast %cst_13 : f32 to vector<4x8x32xf32>
    "tpu.trace_start"() <{level = 10 : i32, message = "hqd,hkd->hqk"}> : () -> ()
    %cst_14 = arith.constant dense<0.000000e+00> : vector<4x8x8xf32>
    %62 = tpu.matmul %36, %47, %cst_14 {dimension_numbers = #tpu.dot_dimension_numbers<[2], [2], [1], [1], [0, 0, 0, 1, 1, 1], [0], [0]>} : vector<4x8x32xbf16>, vector<4x8x32xbf16>, vector<4x8x8xf32> -> vector<4x8x8xf32>
    "tpu.trace_stop"() : () -> ()
    %cst_15 = arith.constant dense<0xFF800000> : vector<4x8xf32>
    %63 = vector.multi_reduction <maximumf>, %62, %cst_15 [2] : vector<4x8x8xf32> to vector<4x8xf32>
    %64 = vector.shape_cast %63 : vector<4x8xf32> to vector<4x8x1xf32>
    %65 = arith.maximumf %59, %64 : vector<4x8x1xf32>
    %66 = arith.subf %59, %65 : vector<4x8x1xf32>
    %67 = math.exp %66 : vector<4x8x1xf32>
    %68 = vector.broadcast %65 : vector<4x8x1xf32> to vector<4x8x8xf32>
    %69 = arith.subf %62, %68 : vector<4x8x8xf32>
    %70 = math.exp %69 : vector<4x8x8xf32>
    %71 = arith.mulf %67, %60 : vector<4x8x1xf32>
    %cst_16 = arith.constant dense<0.000000e+00> : vector<4x8xf32>
    %72 = vector.multi_reduction <add>, %70, %cst_16 [2] : vector<4x8x8xf32> to vector<4x8xf32>
    %73 = vector.shape_cast %72 : vector<4x8xf32> to vector<4x8x1xf32>
    %74 = arith.addf %71, %73 : vector<4x8x1xf32>
    %75 = vector.broadcast %67 : vector<4x8x1xf32> to vector<4x8x32xf32>
    %76 = arith.mulf %75, %61 : vector<4x8x32xf32>
    %77 = arith.truncf %70 : vector<4x8x8xf32> to vector<4x8x8xbf16>
    "tpu.trace_start"() <{level = 10 : i32, message = "hqk,hkd->hqd"}> : () -> ()
    %cst_17 = arith.constant dense<0.000000e+00> : vector<4x8x32xf32>
    %78 = tpu.matmul %77, %58, %cst_17 {dimension_numbers = #tpu.dot_dimension_numbers<[2], [1], [1], [2], [0, 0, 0, 1, 1, 2], [0], [0]>} : vector<4x8x8xbf16>, vector<4x8x32xbf16>, vector<4x8x32xf32> -> vector<4x8x32xf32>
    "tpu.trace_stop"() : () -> ()
    %79 = arith.addf %76, %78 : vector<4x8x32xf32>
    %80 = tpu.reciprocal %74 {approx = true} : vector<4x8x1xf32> -> vector<4x8x1xf32>
    %81 = vector.broadcast %80 : vector<4x8x1xf32> to vector<4x8x32xf32>
    %82 = arith.mulf %79, %81 : vector<4x8x32xf32>
    %83 = arith.truncf %82 : vector<4x8x32xf32> to vector<4x8x32xbf16>
    %c0_18 = arith.constant 0 : index
    %c0_19 = arith.constant 0 : index
    %c0_20 = arith.constant 0 : index
    %84 = vector.load %arg4[%c0_18, %c0_19, %c0_20] : memref<4x32x128xbf16, #tpu.memory_space<vmem>>, vector<4x32x128xbf16>
    "tpu.trace_start"() <{level = 10 : i32, message = "hqd,hdo->hqo"}> : () -> ()
    %cst_21 = arith.constant dense<0.000000e+00> : vector<4x8x128xf32>
    %85 = tpu.matmul %83, %84, %cst_21 {dimension_numbers = #tpu.dot_dimension_numbers<[2], [1], [1], [2], [0, 0, 0, 1, 1, 2], [0], [0]>} : vector<4x8x32xbf16>, vector<4x32x128xbf16>, vector<4x8x128xf32> -> vector<4x8x128xf32>
    "tpu.trace_stop"() : () -> ()
    %cst_22 = arith.constant dense<0.000000e+00> : vector<8x128xf32>
    %86 = vector.multi_reduction <add>, %85, %cst_22 [0] : vector<4x8x128xf32> to vector<8x128xf32>
    %c0_23 = arith.constant 0 : index
    %c0_24 = arith.constant 0 : index
    %87 = vector.load %arg5[%c0_23, %c0_24] : memref<1x128xf32, #tpu.memory_space<vmem>>, vector<1x128xf32>
    %88 = vector.broadcast %87 : vector<1x128xf32> to vector<8x128xf32>
    %89 = arith.addf %86, %88 : vector<8x128xf32>
    %90 = arith.addf %19, %89 : vector<8x128xf32>
    %cst_25 = arith.constant dense<0.000000e+00> : vector<8xf32>
    %91 = vector.multi_reduction <add>, %90, %cst_25 [1] : vector<8x128xf32> to vector<8xf32>
    %92 = vector.shape_cast %91 : vector<8xf32> to vector<8x1xf32>
    %cst_26 = arith.constant 1.280000e+02 : f32
    %93 = vector.broadcast %cst_26 : f32 to vector<8x1xf32>
    %94 = arith.divf %92, %93 : vector<8x1xf32>
    %95 = vector.broadcast %94 : vector<8x1xf32> to vector<8x128xf32>
    %96 = arith.subf %90, %95 : vector<8x128xf32>
    %97 = arith.mulf %96, %96 : vector<8x128xf32>
    %cst_27 = arith.constant dense<0.000000e+00> : vector<8xf32>
    %98 = vector.multi_reduction <add>, %97, %cst_27 [1] : vector<8x128xf32> to vector<8xf32>
    %99 = vector.shape_cast %98 : vector<8xf32> to vector<8x1xf32>
    %cst_28 = arith.constant 1.280000e+02 : f32
    %100 = vector.broadcast %cst_28 : f32 to vector<8x1xf32>
    %101 = arith.divf %99, %100 : vector<8x1xf32>
    %102 = vector.broadcast %94 : vector<8x1xf32> to vector<8x128xf32>
    %103 = arith.subf %90, %102 : vector<8x128xf32>
    %cst_29 = arith.constant 9.99999997E-7 : f32
    %104 = vector.broadcast %cst_29 : f32 to vector<8x1xf32>
    %105 = arith.addf %101, %104 : vector<8x1xf32>
    %106 = math.rsqrt %105 : vector<8x1xf32>
    %107 = vector.broadcast %106 : vector<8x1xf32> to vector<8x128xf32>
    %108 = arith.mulf %103, %107 : vector<8x128xf32>
    %109 = arith.truncf %108 : vector<8x128xf32> to vector<8x128xbf16>
    %c0_30 = arith.constant 0 : index
    %c0_31 = arith.constant 0 : index
    %110 = vector.load %arg6[%c0_30, %c0_31] : memref<128x512xbf16, #tpu.memory_space<vmem>>, vector<128x512xbf16>
    %cst_32 = arith.constant dense<0.000000e+00> : vector<8x512xf32>
    %111 = tpu.matmul %109, %110, %cst_32 {dimension_numbers = #tpu.dot_dimension_numbers<[1], [0], [0], [1], [0, 0, 1, 1], [], []>} : vector<8x128xbf16>, vector<128x512xbf16>, vector<8x512xf32> -> vector<8x512xf32>
    %c0_33 = arith.constant 0 : index
    %c0_34 = arith.constant 0 : index
    %112 = vector.load %arg7[%c0_33, %c0_34] : memref<1x512xf32, #tpu.memory_space<vmem>>, vector<1x512xf32>
    %113 = vector.broadcast %112 : vector<1x512xf32> to vector<8x512xf32>
    %114 = arith.addf %111, %113 : vector<8x512xf32>
    %cst_35 = arith.constant 5.000000e-01 : f32
    %115 = vector.broadcast %cst_35 : f32 to vector<8x512xf32>
    %116 = arith.mulf %115, %114 : vector<8x512xf32>
    %cst_36 = arith.constant 0.707106769 : f32
    %117 = vector.broadcast %cst_36 : f32 to vector<8x512xf32>
    %118 = arith.mulf %114, %117 : vector<8x512xf32>
    %119 = math.absf %118 : vector<8x512xf32>
    %cst_37 = arith.constant 0.327591091 : f32
    %120 = vector.broadcast %cst_37 : f32 to vector<8x512xf32>
    %121 = arith.mulf %120, %119 : vector<8x512xf32>
    %cst_38 = arith.constant 1.000000e+00 : f32
    %122 = vector.broadcast %cst_38 : f32 to vector<8x512xf32>
    %123 = arith.addf %122, %121 : vector<8x512xf32>
    %cst_39 = arith.constant 1.000000e+00 : f32
    %124 = vector.broadcast %cst_39 : f32 to vector<8x512xf32>
    %125 = arith.divf %124, %123 : vector<8x512xf32>
    %cst_40 = arith.constant 1.06140542 : f32
    %126 = vector.broadcast %cst_40 : f32 to vector<8x512xf32>
    %127 = arith.mulf %126, %125 : vector<8x512xf32>
    %cst_41 = arith.constant -1.45315206 : f32
    %128 = vector.broadcast %cst_41 : f32 to vector<8x512xf32>
    %129 = arith.addf %127, %128 : vector<8x512xf32>
    %130 = arith.mulf %129, %125 : vector<8x512xf32>
    %cst_42 = arith.constant 1.42141378 : f32
    %131 = vector.broadcast %cst_42 : f32 to vector<8x512xf32>
    %132 = arith.addf %130, %131 : vector<8x512xf32>
    %133 = arith.mulf %132, %125 : vector<8x512xf32>
    %cst_43 = arith.constant -0.284496725 : f32
    %134 = vector.broadcast %cst_43 : f32 to vector<8x512xf32>
    %135 = arith.addf %133, %134 : vector<8x512xf32>
    %136 = arith.mulf %135, %125 : vector<8x512xf32>
    %cst_44 = arith.constant 0.254829586 : f32
    %137 = vector.broadcast %cst_44 : f32 to vector<8x512xf32>
    %138 = arith.addf %136, %137 : vector<8x512xf32>
    %139 = arith.mulf %138, %125 : vector<8x512xf32>
    %cst_45 = arith.constant 0.000000e+00 : f32
    %140 = vector.broadcast %cst_45 : f32 to vector<8x512xf32>
    %141 = arith.subf %140, %119 : vector<8x512xf32>
    %142 = arith.mulf %141, %119 : vector<8x512xf32>
    %143 = math.exp %142 : vector<8x512xf32>
    %144 = arith.mulf %139, %143 : vector<8x512xf32>
    %cst_46 = arith.constant 1.000000e+00 : f32
    %145 = vector.broadcast %cst_46 : f32 to vector<8x512xf32>
    %146 = arith.subf %145, %144 : vector<8x512xf32>
    %cst_47 = arith.constant 0.000000e+00 : f32
    %147 = vector.broadcast %cst_47 : f32 to vector<8x512xf32>
    %148 = arith.cmpf oge, %118, %147 : vector<8x512xf32>
    %cst_48 = arith.constant 0.000000e+00 : f32
    %149 = vector.broadcast %cst_48 : f32 to vector<8x512xf32>
    %150 = arith.subf %149, %146 : vector<8x512xf32>
    %151 = arith.select %148, %146, %150 : vector<8x512xi1>, vector<8x512xf32>
    %cst_49 = arith.constant 1.000000e+00 : f32
    %152 = vector.broadcast %cst_49 : f32 to vector<8x512xf32>
    %153 = arith.addf %152, %151 : vector<8x512xf32>
    %154 = arith.mulf %116, %153 : vector<8x512xf32>
    %155 = arith.truncf %154 : vector<8x512xf32> to vector<8x512xbf16>
    %c0_50 = arith.constant 0 : index
    %c0_51 = arith.constant 0 : index
    %156 = vector.load %arg8[%c0_50, %c0_51] : memref<512x128xbf16, #tpu.memory_space<vmem>>, vector<512x128xbf16>
    %cst_52 = arith.constant dense<0.000000e+00> : vector<8x128xf32>
    %157 = tpu.matmul %155, %156, %cst_52 {dimension_numbers = #tpu.dot_dimension_numbers<[1], [0], [0], [1], [0, 0, 1, 1], [], []>} : vector<8x512xbf16>, vector<512x128xbf16>, vector<8x128xf32> -> vector<8x128xf32>
    %c0_53 = arith.constant 0 : index
    %c0_54 = arith.constant 0 : index
    %158 = vector.load %arg9[%c0_53, %c0_54] : memref<1x128xf32, #tpu.memory_space<vmem>>, vector<1x128xf32>
    %159 = vector.broadcast %158 : vector<1x128xf32> to vector<8x128xf32>
    %160 = arith.addf %157, %159 : vector<8x128xf32>
    %161 = arith.addf %90, %160 : vector<8x128xf32>
    %c0_55 = arith.constant 0 : index
    %c0_56 = arith.constant 0 : index
    %c0_57 = arith.constant 0 : index
    %162 = vector.load %arg10[%c0_55, %c0_56, %c0_57] : memref<1x8x128xf32, #tpu.memory_space<vmem>>, vector<1x8x128xf32>
    %163 = vector.shape_cast %162 : vector<1x8x128xf32> to vector<8x128xf32>
    %164 = vector.shape_cast %161 : vector<8x128xf32> to vector<1x8x128xf32>
    tpu.vector_store %arg10[%c0_55, %c0_56, %c0_57], %164 {strides = array<i32>} : memref<1x8x128xf32, #tpu.memory_space<vmem>>, vector<1x8x128xf32>,
    return
  }
  func.func @transform_0(%arg0: i32) -> (i32, i32, i32) {
    %c0_i32 = arith.constant 0 : i32
    %c0_i32_0 = arith.constant 0 : i32
    %c0_i32_1 = arith.constant 0 : i32
    return %arg0, %c0_i32, %c0_i32_0 : i32, i32, i32
  }
  func.func @transform_1(%arg0: i32) -> (i32, i32) {
    %c0_i32 = arith.constant 0 : i32
    %c0_i32_0 = arith.constant 0 : i32
    %c0_i32_1 = arith.constant 0 : i32
    return %c0_i32, %c0_i32_0 : i32, i32
  }
  func.func @transform_2(%arg0: i32) -> (i32, i32) {
    %c0_i32 = arith.constant 0 : i32
    %c0_i32_0 = arith.constant 0 : i32
    %c0_i32_1 = arith.constant 0 : i32
    return %c0_i32, %c0_i32_0 : i32, i32
  }
  func.func @transform_3(%arg0: i32) -> (i32, i32, i32) {
    %c0_i32 = arith.constant 0 : i32
    %c0_i32_0 = arith.constant 0 : i32
    %c0_i32_1 = arith.constant 0 : i32
    %c0_i32_2 = arith.constant 0 : i32
    return %c0_i32, %c0_i32_0, %c0_i32_1 : i32, i32, i32
  }
  func.func @transform_4(%arg0: i32) -> (i32, i32) {
    %c0_i32 = arith.constant 0 : i32
    %c0_i32_0 = arith.constant 0 : i32
    %c0_i32_1 = arith.constant 0 : i32
    return %c0_i32, %c0_i32_0 : i32, i32
  }
  func.func @transform_5(%arg0: i32) -> (i32, i32) {
    %c0_i32 = arith.constant 0 : i32
    %c0_i32_0 = arith.constant 0 : i32
    %c0_i32_1 = arith.constant 0 : i32
    return %c0_i32, %c0_i32_0 : i32, i32
  }
  func.func @transform_6(%arg0: i32) -> (i32, i32) {
    %c0_i32 = arith.constant 0 : i32
    %c0_i32_0 = arith.constant 0 : i32
    %c0_i32_1 = arith.constant 0 : i32
    return %c0_i32, %c0_i32_0 : i32, i32
  }
  func.func @transform_7(%arg0: i32) -> (i32, i32) {
    %c0_i32 = arith.constant 0 : i32
    %c0_i32_0 = arith.constant 0 : i32
    %c0_i32_1 = arith.constant 0 : i32
    return %c0_i32, %c0_i32_0 : i32, i32
  }
  func.func @transform_8(%arg0: i32) -> (i32, i32) {
    %c0_i32 = arith.constant 0 : i32
    %c0_i32_0 = arith.constant 0 : i32
    %c0_i32_1 = arith.constant 0 : i32
    return %c0_i32, %c0_i32_0 : i32, i32
  }
  func.func @transform_9(%arg0: i32) -> (i32, i32, i32) {
    %c0_i32 = arith.constant 0 : i32
    %c0_i32_0 = arith.constant 0 : i32
    %c0_i32_1 = arith.constant 0 : i32
    return %arg0, %c0_i32, %c0_i32_0 : i32, i32, i32
  }
}

</mosaic_0001>

<llo_original>
// kernel: tpu_custom_call.1
$region0: #{tpu_custom_call.1}
  #allocation0 [shape = 'u32[]', space=smem, size = 0x4, offset = 0x4, fixed_abs, tag = 'smem constant byte address 0x4 - core index']
  #allocation1 [shape = 'u32[144,128]{1,0:T(1,128)}', space=vmem, size = 0x12000, scoped, tag = 'internal scratch']
  %s0 = inlined_call_operand.hbm [shape: f32[2,8,128], index: 0, kind: input, shape index: {}]
  %s1 = inlined_call_operand.hbm [shape: bf16[128,384], index: 1, kind: input, shape index: {}]
  %s2 = inlined_call_operand.vmem [shape: f32[1,384], index: 2, kind: input, shape index: {}]
  %s3 = inlined_call_operand.hbm [shape: bf16[4,32,128], index: 3, kind: input, shape index: {}]
  %s4 = inlined_call_operand.vmem [shape: f32[1,128], index: 4, kind: input, shape index: {}]
  %s5 = inlined_call_operand.hbm [shape: bf16[128,512], index: 5, kind: input, shape index: {}]
  %s6 = inlined_call_operand.vmem [shape: f32[1,512], index: 6, kind: input, shape index: {}]
  %s7 = inlined_call_operand.hbm [shape: bf16[512,128], index: 7, kind: input, shape index: {}]
  %s8 = inlined_call_operand.vmem [shape: f32[1,128], index: 8, kind: input, shape index: {}]
  %s9 = inlined_call_operand.hbm [shape: f32[2,8,128], index: 9, kind: output, shape index: {}]
  %s10 = sld [smem:[#allocation0]]
  $region89: #{tpu_custom_call.1} parent=0
    _
  %s12 = ssub.s32 1, %s10
  %s13 = scalar_select 0, %s12, %s10
  $region1: #{tpu_custom_call.1} parent=0
    #allocation2 [shape = 'u8[8192]{0}', space=vmem, size = 0x2000, scoped, tag = 'input window, operand 0']
    #allocation3 [shape = 's32[2]{0}', space=sflag, size = 0x8, scoped, tag = 'scoped memory for tpu_custom_call.1']
    #allocation4 [shape = 's32[2]{0}', space=sflag, size = 0x8, scoped, tag = 'scoped memory for tpu_custom_call.1']
    #allocation5 [shape = 'u8[98304]{0}', space=vmem, size = 0x18000, scoped, tag = 'input window, operand 1, single buffered']
    #allocation6 [shape = 's32[1]{0}', space=sflag, size = 0x4, scoped, tag = 'scoped memory for tpu_custom_call.1']
    #allocation7 [shape = 'u8[32768]{0}', space=vmem, size = 0x8000, scoped, tag = 'input window, operand 3, single buffered']
    #allocation8 [shape = 'u8[131072]{0}', space=vmem, size = 0x20000, scoped, tag = 'input window, operand 5, single buffered']
    #allocation9 [shape = 's32[1]{0}', space=sflag, size = 0x4, scoped, tag = 'scoped memory for tpu_custom_call.1']
    #allocation10 [shape = 'u8[131072]{0}', space=vmem, size = 0x20000, scoped, tag = 'input window, operand 7, single buffered']
    #allocation11 [shape = 'u8[8192]{0}', space=vmem, size = 0x2000, scoped, tag = 'output window, operand 0']
    %14 = vsyncpa [#allocation3], 0
    %s15 = scalar_lea.sflag [#allocation3], 1
    %16 = vsyncpa %s15, 0
    %17 = vsyncpa [#allocation6], 0
    %18 = vsyncpa [#allocation9], 0
    %19 = vsyncpa [#allocation4], 0
    %s20 = scalar_lea.sflag [#allocation4], 1
    %21 = vsyncpa %s20, 0
    loop: start=0, step=1, limit=4
    $region2: #{tpu_custom_call.1} parent=1 // loop_pre_header
      _
    $region3: #{tpu_custom_call.1} parent=1 // loop_header
      %s23 = sphi 0, %s27
      %p24 = scmp.ge.s32.totalorder %s23, 4
      %s33 = sphi 0, %s35
      %s36 = sphi 0, %s33
      %s37 = sphi 0, %s36
      %s53 = sphi 0, %s37
      %s57 = sphi 0, %s57
      %s59 = sphi 0, %s57
      %s60 = sphi 0, %s59
      %s74 = sphi 0, %s60
      %s78 = sphi 0, %s78
      %s80 = sphi 0, %s78
      %s81 = sphi 0, %s80
      %s95 = sphi 0, %s81
      %s99 = sphi 0, %s99
      %s101 = sphi 0, %s99
      %s102 = sphi 0, %s101
      %s116 = sphi 0, %s102
      %s120 = sphi 0, %s120
      %s122 = sphi 0, %s120
      %s123 = sphi 0, %s122
      %s137 = sphi 0, %s123
      %s141 = sphi 0, %s141
      %s143 = sphi 0, %s141
      %s144 = sphi 0, %s143
      %s158 = sphi 0, %s144
      %s162 = sphi 0, %s162
      %s164 = sphi 0, %s162
      %s165 = sphi 0, %s164
      %s179 = sphi 0, %s165
      %s183 = sphi 0, %s183
      %s185 = sphi 0, %s183
      %s186 = sphi 0, %s185
      %s200 = sphi 0, %s186
      %s204 = sphi 0, %s204
      %s206 = sphi 0, %s204
      %s207 = sphi 0, %s206
      %s221 = sphi 0, %s207
      %s227 = sphi 0, %s229
      %s230 = sphi 0, %s227
      %s231 = sphi 0, %s230
      %s247 = sphi 0, %s231
    $region4: #{tpu_custom_call.1} parent=1 // loop_header_branch
      %26 = sbr.rel (%p24) target = $region8
    $region5: #{tpu_custom_call.1} parent=1 // loop_body
      %s28 = ssub.s32 %s23, 1
      %s29 = ssub.s32 %s23, 2
      %s30 = sadd.s32 %s23, 1
      %s31 = ssub.s32 %s23, %s30
      %p32 = scmp.eq.s32.totalorder %s31, 0
      %s34 = sadd.s32 %s33, 1
      %s35 = scalar_select %p32, %s33, %s34
      %p38 = pneg %p32
      %p39 = scmp.eq.s32.totalorder %s23, 1
      %p40 = por %p38, %p39
      %p41 = scmp.ne.s32.totalorder %s33, %s36
      %p42 = scmp.eq.s32.totalorder %s23, 0
      %p43 = por %p41, %p42
      %p44 = scmp.ne.s32.totalorder %s33, %s36
      %p45 = scmp.eq.s32.totalorder %s28, 1
      %p46 = por %p44, %p45
      %p47 = scmp.ne.s32.totalorder %s36, %s37
      %p48 = scmp.eq.s32.totalorder %s28, 0
      %p49 = por %p47, %p48
      %p50 = scmp.ne.s32.totalorder %s36, %s37
      %p51 = scmp.eq.s32.totalorder %s29, 1
      %p52 = por %p50, %p51
      %p54 = scmp.ne.s32.totalorder %s37, %s53
      %p55 = scmp.eq.s32.totalorder %s29, 0
      %p56 = por %p54, %p55
      %s58 = sadd.s32 %s57, 1
      %p61 = scmp.eq.s32.totalorder %s23, 1
      %p62 = scmp.ne.s32.totalorder %s57, %s59
      %p63 = scmp.eq.s32.totalorder %s23, 0
      %p64 = por %p62, %p63
      %p65 = scmp.ne.s32.totalorder %s57, %s59
      %p66 = scmp.eq.s32.totalorder %s28, 1
      %p67 = por %p65, %p66
      %p68 = scmp.ne.s32.totalorder %s59, %s60
      %p69 = scmp.eq.s32.totalorder %s28, 0
      %p70 = por %p68, %p69
      %p71 = scmp.ne.s32.totalorder %s59, %s60
      %p72 = scmp.eq.s32.totalorder %s29, 1
      %p73 = por %p71, %p72
      %p75 = scmp.ne.s32.totalorder %s60, %s74
      %p76 = scmp.eq.s32.totalorder %s29, 0
      %p77 = por %p75, %p76
      %s79 = sadd.s32 %s78, 1
      %p82 = scmp.eq.s32.totalorder %s23, 1
      %p83 = scmp.ne.s32.totalorder %s78, %s80
      %p84 = scmp.eq.s32.totalorder %s23, 0
      %p85 = por %p83, %p84
      %p86 = scmp.ne.s32.totalorder %s78, %s80
      %p87 = scmp.eq.s32.totalorder %s28, 1
      %p88 = por %p86, %p87
      %p89 = scmp.ne.s32.totalorder %s80, %s81
      %p90 = scmp.eq.s32.totalorder %s28, 0
      %p91 = por %p89, %p90
      %p92 = scmp.ne.s32.totalorder %s80, %s81
      %p93 = scmp.eq.s32.totalorder %s29, 1
      %p94 = por %p92, %p93
      %p96 = scmp.ne.s32.totalorder %s81, %s95
      %p97 = scmp.eq.s32.totalorder %s29, 0
      %p98 = por %p96, %p97
      %s100 = sadd.s32 %s99, 1
      %p103 = scmp.eq.s32.totalorder %s23, 1
      %p104 = scmp.ne.s32.totalorder %s99, %s101
      %p105 = scmp.eq.s32.totalorder %s23, 0
      %p106 = por %p104, %p105
      %p107 = scmp.ne.s32.totalorder %s99, %s101
      %p108 = scmp.eq.s32.totalorder %s28, 1
      %p109 = por %p107, %p108
      %p110 = scmp.ne.s32.totalorder %s101, %s102
      %p111 = scmp.eq.s32.totalorder %s28, 0
      %p112 = por %p110, %p111
      %p113 = scmp.ne.s32.totalorder %s101, %s102
      %p114 = scmp.eq.s32.totalorder %s29, 1
      %p115 = por %p113, %p114
      %p117 = scmp.ne.s32.totalorder %s102, %s116
      %p118 = scmp.eq.s32.totalorder %s29, 0
      %p119 = por %p117, %p118
      %s121 = sadd.s32 %s120, 1
      %p124 = scmp.eq.s32.totalorder %s23, 1
      %p125 = scmp.ne.s32.totalorder %s120, %s122
      %p126 = scmp.eq.s32.totalorder %s23, 0
      %p127 = por %p125, %p126
      %p128 = scmp.ne.s32.totalorder %s120, %s122
      %p129 = scmp.eq.s32.totalorder %s28, 1
      %p130 = por %p128, %p129
      %p131 = scmp.ne.s32.totalorder %s122, %s123
      %p132 = scmp.eq.s32.totalorder %s28, 0
      %p133 = por %p131, %p132
      %p134 = scmp.ne.s32.totalorder %s122, %s123
      %p135 = scmp.eq.s32.totalorder %s29, 1
      %p136 = por %p134, %p135
      %p138 = scmp.ne.s32.totalorder %s123, %s137
      %p139 = scmp.eq.s32.totalorder %s29, 0
      %p140 = por %p138, %p139
      %s142 = sadd.s32 %s141, 1
      %p145 = scmp.eq.s32.totalorder %s23, 1
      %p146 = scmp.ne.s32.totalorder %s141, %s143
      %p147 = scmp.eq.s32.totalorder %s23, 0
      %p148 = por %p146, %p147
      %p149 = scmp.ne.s32.totalorder %s141, %s143
      %p150 = scmp.eq.s32.totalorder %s28, 1
      %p151 = por %p149, %p150
      %p152 = scmp.ne.s32.totalorder %s143, %s144
      %p153 = scmp.eq.s32.totalorder %s28, 0
      %p154 = por %p152, %p153
      %p155 = scmp.ne.s32.totalorder %s143, %s144
      %p156 = scmp.eq.s32.totalorder %s29, 1
      %p157 = por %p155, %p156
      %p159 = scmp.ne.s32.totalorder %s144, %s158
      %p160 = scmp.eq.s32.totalorder %s29, 0
      %p161 = por %p159, %p160
      %s163 = sadd.s32 %s162, 1
      %p166 = scmp.eq.s32.totalorder %s23, 1
      %p167 = scmp.ne.s32.totalorder %s162, %s164
      %p168 = scmp.eq.s32.totalorder %s23, 0
      %p169 = por %p167, %p168
      %p170 = scmp.ne.s32.totalorder %s162, %s164
      %p171 = scmp.eq.s32.totalorder %s28, 1
      %p172 = por %p170, %p171
      %p173 = scmp.ne.s32.totalorder %s164, %s165
      %p174 = scmp.eq.s32.totalorder %s28, 0
      %p175 = por %p173, %p174
      %p176 = scmp.ne.s32.totalorder %s164, %s165
      %p177 = scmp.eq.s32.totalorder %s29, 1
      %p178 = por %p176, %p177
      %p180 = scmp.ne.s32.totalorder %s165, %s179
      %p181 = scmp.eq.s32.totalorder %s29, 0
      %p182 = por %p180, %p181
      %s184 = sadd.s32 %s183, 1
      %p187 = scmp.eq.s32.totalorder %s23, 1
      %p188 = scmp.ne.s32.totalorder %s183, %s185
      %p189 = scmp.eq.s32.totalorder %s23, 0
      %p190 = por %p188, %p189
      %p191 = scmp.ne.s32.totalorder %s183, %s185
      %p192 = scmp.eq.s32.totalorder %s28, 1
      %p193 = por %p191, %p192
      %p194 = scmp.ne.s32.totalorder %s185, %s186
      %p195 = scmp.eq.s32.totalorder %s28, 0
      %p196 = por %p194, %p195
      %p197 = scmp.ne.s32.totalorder %s185, %s186
      %p198 = scmp.eq.s32.totalorder %s29, 1
      %p199 = por %p197, %p198
      %p201 = scmp.ne.s32.totalorder %s186, %s200
      %p202 = scmp.eq.s32.totalorder %s29, 0
      %p203 = por %p201, %p202
      %s205 = sadd.s32 %s204, 1
      %p208 = scmp.eq.s32.totalorder %s23, 1
      %p209 = scmp.ne.s32.totalorder %s204, %s206
      %p210 = scmp.eq.s32.totalorder %s23, 0
      %p211 = por %p209, %p210
      %p212 = scmp.ne.s32.totalorder %s204, %s206
      %p213 = scmp.eq.s32.totalorder %s28, 1
      %p214 = por %p212, %p213
      %p215 = scmp.ne.s32.totalorder %s206, %s207
      %p216 = scmp.eq.s32.totalorder %s28, 0
      %p217 = por %p215, %p216
      %p218 = scmp.ne.s32.totalorder %s206, %s207
      %p219 = scmp.eq.s32.totalorder %s29, 1
      %p220 = por %p218, %p219
      %p222 = scmp.ne.s32.totalorder %s207, %s221
      %p223 = scmp.eq.s32.totalorder %s29, 0
      %p224 = por %p222, %p223
      %s225 = ssub.s32 %s23, %s30
      %p226 = scmp.eq.s32.totalorder %s225, 0
      %s228 = sadd.s32 %s227, 1
      %s229 = scalar_select %p226, %s227, %s228
      %p232 = pneg %p226
      %p233 = scmp.eq.s32.totalorder %s23, 1
      %p234 = por %p232, %p233
      %p235 = scmp.ne.s32.totalorder %s227, %s230
      %p236 = scmp.eq.s32.totalorder %s23, 0
      %p237 = por %p235, %p236
      %p238 = scmp.ne.s32.totalorder %s227, %s230
      %p239 = scmp.eq.s32.totalorder %s28, 1
      %p240 = por %p238, %p239
      %p241 = scmp.ne.s32.totalorder %s230, %s231
      %p242 = scmp.eq.s32.totalorder %s28, 0
      %p243 = por %p241, %p242
      %p244 = scmp.ne.s32.totalorder %s230, %s231
      %p245 = scmp.eq.s32.totalorder %s29, 1
      %p246 = por %p244, %p245
      %p248 = scmp.ne.s32.totalorder %s231, %s247
      %p249 = scmp.eq.s32.totalorder %s29, 0
      %p250 = por %p248, %p249
      %p251 = scmp.le.s32.totalorder 1, %s23
      %p252 = scmp.lt.s32.totalorder %s23, 3
      %p253 = pnand %p251, %p252
      %p254 = pneg %p253
      // Predicated region
      $region9: #{tpu_custom_call.1} parent=5 // pred_check
        _
      $region10: #{tpu_custom_call.1} parent=5 // pred_check_branch
        %256 = sbr.rel (%p253) target = $region12
      $region11: #{tpu_custom_call.1} parent=5 // pred_region
        %s257 = ssub.s32 %s23, 1
        // Predicated region
        $region13: #{tpu_custom_call.1} parent=11 // pred_check
          %p258 = pneg %p70
        $region14: #{tpu_custom_call.1} parent=11 // pred_check_branch
          %260 = sbr.rel (%p258) target = $region16
        $region15: #{tpu_custom_call.1} parent=11 // pred_region
          %s262 = ssub.s32 3072, 3072
          %263 = vsyncadd [#allocation6], %s262
          %s264 = sshll.u32 [#allocation5], 4
          %s265 = int_to_ptr.vmem [resolvable:$true] %s264
          %270 = dma.hbm_to_vmem [thread:$0]  %s1, 3072, %s265, [#allocation6], 192, 192, 12
        $region16: #{tpu_custom_call.1} parent=11 // pred_fallthru
          _
        // Predicated region
        $region17: #{tpu_custom_call.1} parent=11 // pred_check
          %p271 = pneg %p91
        $region18: #{tpu_custom_call.1} parent=11 // pred_check_branch
          %273 = sbr.rel (%p271) target = $region20
        $region19: #{tpu_custom_call.1} parent=11 // pred_region
          _
        $region20: #{tpu_custom_call.1} parent=11 // pred_fallthru
          _
        // Predicated region
        $region21: #{tpu_custom_call.1} parent=11 // pred_check
          %p274 = pneg %p112
        $region22: #{tpu_custom_call.1} parent=11 // pred_check_branch
          %276 = sbr.rel (%p274) target = $region24
        $region23: #{tpu_custom_call.1} parent=11 // pred_region
          %s278 = ssub.s32 1024, 1024
          %279 = vsyncadd [#allocation6], %s278
          %s280 = sshll.u32 [#allocation7], 4
          %s281 = int_to_ptr.vmem [resolvable:$true] %s280
          %286 = dma.hbm_to_vmem [thread:$0]  %s3, 1024, %s281, [#allocation6], 64, 64, 4
        $region24: #{tpu_custom_call.1} parent=11 // pred_fallthru
          _
        // Predicated region
        $region25: #{tpu_custom_call.1} parent=11 // pred_check
          %p287 = pneg %p133
        $region26: #{tpu_custom_call.1} parent=11 // pred_check_branch
          %289 = sbr.rel (%p287) target = $region28
        $region27: #{tpu_custom_call.1} parent=11 // pred_region
          _
        $region28: #{tpu_custom_call.1} parent=11 // pred_fallthru
          _
        // Predicated region
        $region29: #{tpu_custom_call.1} parent=11 // pred_check
          %p290 = pneg %p154
        $region30: #{tpu_custom_call.1} parent=11 // pred_check_branch
          %292 = sbr.rel (%p290) target = $region32
        $region31: #{tpu_custom_call.1} parent=11 // pred_region
          %s294 = ssub.s32 4096, 4096
          %295 = vsyncadd [#allocation9], %s294
          %s296 = sshll.u32 [#allocation8], 4
          %s297 = int_to_ptr.vmem [resolvable:$true] %s296
          %302 = dma.hbm_to_vmem [thread:$0]  %s5, 4096, %s297, [#allocation9], 256, 256, 16
        $region32: #{tpu_custom_call.1} parent=11 // pred_fallthru
          _
        // Predicated region
        $region33: #{tpu_custom_call.1} parent=11 // pred_check
          %p303 = pneg %p175
        $region34: #{tpu_custom_call.1} parent=11 // pred_check_branch
          %305 = sbr.rel (%p303) target = $region36
        $region35: #{tpu_custom_call.1} parent=11 // pred_region
          _
        $region36: #{tpu_custom_call.1} parent=11 // pred_fallthru
          _
        // Predicated region
        $region37: #{tpu_custom_call.1} parent=11 // pred_check
          %p306 = pneg %p196
        $region38: #{tpu_custom_call.1} parent=11 // pred_check_branch
          %308 = sbr.rel (%p306) target = $region40
        $region39: #{tpu_custom_call.1} parent=11 // pred_region
          %s310 = ssub.s32 4096, 4096
          %311 = vsyncadd [#allocation9], %s310
          %s312 = sshll.u32 [#allocation10], 4
          %s313 = int_to_ptr.vmem [resolvable:$true] %s312
          %318 = dma.hbm_to_vmem [thread:$0]  %s7, 4096, %s313, [#allocation9], 64, 64, 4
        $region40: #{tpu_custom_call.1} parent=11 // pred_fallthru
          _
        // Predicated region
        $region41: #{tpu_custom_call.1} parent=11 // pred_check
          %p319 = pneg %p217
        $region42: #{tpu_custom_call.1} parent=11 // pred_check_branch
          %321 = sbr.rel (%p319) target = $region44
        $region43: #{tpu_custom_call.1} parent=11 // pred_region
          _
        $region44: #{tpu_custom_call.1} parent=11 // pred_fallthru
          _
      $region12: #{tpu_custom_call.1} parent=5 // pred_fallthru
        _
      %p322 = scmp.lt.s32.totalorder %s23, 2
      // Predicated region
      $region45: #{tpu_custom_call.1} parent=5 // pred_check
        %p323 = pneg %p322
      $region46: #{tpu_custom_call.1} parent=5 // pred_check_branch
        %325 = sbr.rel (%p323) target = $region48
      $region47: #{tpu_custom_call.1} parent=5 // pred_region
        // Predicated region
        $region49: #{tpu_custom_call.1} parent=47 // pred_check
          %p326 = pneg %p43
        $region50: #{tpu_custom_call.1} parent=47 // pred_check_branch
          %328 = sbr.rel (%p326) target = $region52
        $region51: #{tpu_custom_call.1} parent=47 // pred_region
          %s329 = sand.u32 %s33, 1
          %s330 = scalar_lea.sflag [#allocation3], %s329
          %s331 = sand.u32 %s33, 1
          %s332 = smul.addr %s331, 8
          %s333 = scalar_lea.vmem [#allocation2], %s332
          %s335 = ssub.s32 128, 128
          %336 = vsyncadd %s330, %s335
          %s337 = smul.addr %s23, 128
          %s338 = scalar_lea.hbm %s0, %s337
          %s340 = sshll.u32 %s333, 4
          %s341 = int_to_ptr.vmem [resolvable:$true] %s340
          %343 = dma.hbm_to_vmem [thread:$0]  %s338, 128, %s341, %s330
        $region52: #{tpu_custom_call.1} parent=47 // pred_fallthru
          _
      $region48: #{tpu_custom_call.1} parent=5 // pred_fallthru
        _
      %p344 = scmp.le.s32.totalorder 1, %s23
      %p345 = scmp.lt.s32.totalorder %s23, 3
      %p346 = pnand %p344, %p345
      %p347 = pneg %p346
      // Predicated region
      $region53: #{tpu_custom_call.1} parent=5 // pred_check
        _
      $region54: #{tpu_custom_call.1} parent=5 // pred_check_branch
        %349 = sbr.rel (%p346) target = $region56
      $region55: #{tpu_custom_call.1} parent=5 // pred_region
        %s350 = ssub.s32 %s23, 1
        %s351 = sand.u32 %s36, 1
        %s352 = scalar_lea.sflag [#allocation3], %s351
        %s353 = sand.u32 %s36, 1
        %s354 = smul.addr %s353, 8
        %s355 = scalar_lea.vmem [#allocation2], %s354
        // Predicated region
        $region57: #{tpu_custom_call.1} parent=55 // pred_check
          %p356 = pneg %p49
        $region58: #{tpu_custom_call.1} parent=55 // pred_check_branch
          %358 = sbr.rel (%p356) target = $region60
        $region59: #{tpu_custom_call.1} parent=55 // pred_region
          %359 = dma.done %s352, 128
        $region60: #{tpu_custom_call.1} parent=55 // pred_fallthru
          _
        // Predicated region
        $region61: #{tpu_custom_call.1} parent=55 // pred_check
          %p360 = pneg %p70
        $region62: #{tpu_custom_call.1} parent=55 // pred_check_branch
          %362 = sbr.rel (%p360) target = $region64
        $region63: #{tpu_custom_call.1} parent=55 // pred_region
          %363 = dma.done [#allocation6], 3072
        $region64: #{tpu_custom_call.1} parent=55 // pred_fallthru
          _
        // Predicated region
        $region65: #{tpu_custom_call.1} parent=55 // pred_check
          %p364 = pneg %p112
        $region66: #{tpu_custom_call.1} parent=55 // pred_check_branch
          %366 = sbr.rel (%p364) target = $region68
        $region67: #{tpu_custom_call.1} parent=55 // pred_region
          %367 = dma.done [#allocation6], 1024
        $region68: #{tpu_custom_call.1} parent=55 // pred_fallthru
          _
        // Predicated region
        $region69: #{tpu_custom_call.1} parent=55 // pred_check
          %p368 = pneg %p154
        $region70: #{tpu_custom_call.1} parent=55 // pred_check_branch
          %370 = sbr.rel (%p368) target = $region72
        $region71: #{tpu_custom_call.1} parent=55 // pred_region
          %371 = dma.done [#allocation9], 4096
        $region72: #{tpu_custom_call.1} parent=55 // pred_fallthru
          _
        // Predicated region
        $region73: #{tpu_custom_call.1} parent=55 // pred_check
          %p372 = pneg %p196
        $region74: #{tpu_custom_call.1} parent=55 // pred_check_branch
          %374 = sbr.rel (%p372) target = $region76
        $region75: #{tpu_custom_call.1} parent=55 // pred_region
          %375 = dma.done [#allocation9], 4096
        $region76: #{tpu_custom_call.1} parent=55 // pred_fallthru
          _
        %s376 = sand.u32 %s36, 1
        %s377 = scalar_lea.sflag [#allocation3], %s376
        %s378 = sand.u32 %s36, 1
        %s379 = smul.addr %s378, 8
        %s380 = scalar_lea.vmem [#allocation2], %s379
        %p381 = pneg %p49
        %p382 = pneg %p46
        %p383 = pneg %p70
        %p384 = pneg %p67
        %p385 = pneg %p91
        %p386 = pneg %p88
        %p387 = pneg %p112
        %p388 = pneg %p109
        %p389 = pneg %p133
        %p390 = pneg %p130
        %p391 = pneg %p154
        %p392 = pneg %p151
        %p393 = pneg %p175
        %p394 = pneg %p172
        %p395 = pneg %p196
        %p396 = pneg %p193
        %p397 = pneg %p217
        %p398 = pneg %p214
        %p399 = pneg %p243
        %p400 = pneg %p240
        %s401 = sand.u32 %s230, 1
        %s402 = scalar_lea.sflag [#allocation4], %s401
        %s403 = sand.u32 %s230, 1
        %s404 = smul.addr %s403, 8
        %s405 = scalar_lea.vmem [#allocation11], %s404
        %v407 = vld [vmem:[%s355] sm:$0xff]
        %408 = vadd.xlane.f32.xlu0 %v407
        %v409 = vpop.xlane.xlu0 %408
        %v410 = vrcp.pop 128.0
        %v411 = vmul.f32 %v409, %v410
        %v412 = vsub.f32 %v407, %v411
        %v413 = vmul.f32 %v412, %v412
        %414 = vadd.xlane.f32.xlu0 %v413
        %v415 = vpop.xlane.xlu0 %414
        %v416 = vmul.f32 %v415, %v410
        %v417 = vadd.f32 %v416, 1e-06
        %v418 = vrsqrt.pop %v417
        %v419 = vmul.f32 %v412, %v418
        %v420 = vpack.c.bf16 %v419, %v419
        %v421 = vld [vmem:[#allocation5] sm:$0xff]
        %v422 = vld [vmem:[#allocation5 + $0x8] sm:$0xf]
        %v423 = vld [vmem:[#allocation5 + $0xc] sm:$0xff]
        %v424 = vld [vmem:[#allocation5 + $0x14] sm:$0xf]
        %v425 = vld [vmem:[#allocation5 + $0x18] sm:$0xff]
        %v426 = vld [vmem:[#allocation5 + $0x20] sm:$0xf]
        %v427 = vld [vmem:[#allocation5 + $0x24] sm:$0xff]
        %v428 = vld [vmem:[#allocation5 + $0x2c] sm:$0xf]
        %v429 = vld [vmem:[#allocation5 + $0x30] sm:$0xff]
        %v430 = vld [vmem:[#allocation5 + $0x38] sm:$0xf]
        %v431 = vld [vmem:[#allocation5 + $0x3c] sm:$0xff]
        %v432 = vld [vmem:[#allocation5 + $0x44] sm:$0xf]
        %v433 = vld [vmem:[#allocation5 + $0x48] sm:$0xff]
        %v434 = vld [vmem:[#allocation5 + $0x50] sm:$0xf]
        %v435 = vld [vmem:[#allocation5 + $0x54] sm:$0xff]
        %v436 = vld [vmem:[#allocation5 + $0x5c] sm:$0xf]
        %v437 = vld [vmem:[#allocation5 + $0x60] sm:$0xff]
        %v438 = vld [vmem:[#allocation5 + $0x68] sm:$0xf]
        %v439 = vld [vmem:[#allocation5 + $0x6c] sm:$0xff]
        %v440 = vld [vmem:[#allocation5 + $0x74] sm:$0xf]
        %v441 = vld [vmem:[#allocation5 + $0x78] sm:$0xff]
        %v442 = vld [vmem:[#allocation5 + $0x80] sm:$0xf]
        %v443 = vld [vmem:[#allocation5 + $0x84] sm:$0xff]
        %v444 = vld [vmem:[#allocation5 + $0x8c] sm:$0xf]
        %v445 = vld [vmem:[#allocation5 + $0x90] sm:$0xff]
        %v446 = vld [vmem:[#allocation5 + $0x98] sm:$0xf]
        %v447 = vld [vmem:[#allocation5 + $0x9c] sm:$0xff]
        %v448 = vld [vmem:[#allocation5 + $0xa4] sm:$0xf]
        %v449 = vld [vmem:[#allocation5 + $0xa8] sm:$0xff]
        %v450 = vld [vmem:[#allocation5 + $0xb0] sm:$0xf]
        %v451 = vld [vmem:[#allocation5 + $0xb4] sm:$0xff]
        %v452 = vld [vmem:[#allocation5 + $0xbc] sm:$0xf]
        %v453 = vld [vmem:[%s2] sm:$0x7]
        %v455 = vlaneseq
        %v456 = vshrl.u32 %v455, 7
        %v457 = vsub.s32 0, %v456
        %v458 = vrot.slane %v453, %v457
        %v459 = vlaneseq
        %v460 = vshrl.u32 %v459, 7
        %v461 = vsub.s32 1, %v460
        %v462 = vrot.slane %v453, %v461
        %v463 = vlaneseq
        %v464 = vshrl.u32 %v463, 7
        %v465 = vsub.s32 2, %v464
        %v466 = vrot.slane %v453, %v465
        %v502 = vunpack.c.l.b16 %v421
        %v503 = vunpack.c.h.b16 %v421
        %v504 = vunpack.c.l.b16 %v422
        %v505 = vunpack.c.l.b16 %v423
        %v506 = vunpack.c.h.b16 %v423
        %v507 = vunpack.c.l.b16 %v424
        %v508 = vunpack.c.l.b16 %v425
        %v509 = vunpack.c.h.b16 %v425
        %v510 = vunpack.c.l.b16 %v426
        %v511 = vunpack.c.l.b16 %v427
        %v512 = vunpack.c.h.b16 %v427
        %v513 = vunpack.c.l.b16 %v428
        %v514 = vunpack.c.l.b16 %v429
        %v515 = vunpack.c.h.b16 %v429
        %v516 = vunpack.c.l.b16 %v430
        %v517 = vunpack.c.l.b16 %v431
        %v518 = vunpack.c.h.b16 %v431
        %v519 = vunpack.c.l.b16 %v432
        %v520 = vunpack.c.l.b16 %v433
        %v521 = vunpack.c.h.b16 %v433
        %v522 = vunpack.c.l.b16 %v434
        %v523 = vunpack.c.l.b16 %v435
        %v524 = vunpack.c.h.b16 %v435
        %v525 = vunpack.c.l.b16 %v436
        %v526 = vunpack.c.l.b16 %v437
        %v527 = vunpack.c.h.b16 %v437
        %v528 = vunpack.c.l.b16 %v438
        %v529 = vunpack.c.l.b16 %v439
        %v530 = vunpack.c.h.b16 %v439
        %v531 = vunpack.c.l.b16 %v440
        %v532 = vunpack.c.l.b16 %v441
        %v533 = vunpack.c.h.b16 %v441
        %v534 = vunpack.c.l.b16 %v442
        %v535 = vunpack.c.l.b16 %v443
        %v536 = vunpack.c.h.b16 %v443
        %v537 = vunpack.c.l.b16 %v444
        %v538 = vunpack.c.l.b16 %v445
        %v539 = vunpack.c.h.b16 %v445
        %v540 = vunpack.c.l.b16 %v446
        %v541 = vunpack.c.l.b16 %v447
        %v542 = vunpack.c.h.b16 %v447
        %v543 = vunpack.c.l.b16 %v448
        %v544 = vunpack.c.l.b16 %v449
        %v545 = vunpack.c.h.b16 %v449
        %v546 = vunpack.c.l.b16 %v450
        %v547 = vunpack.c.l.b16 %v451
        %v548 = vunpack.c.h.b16 %v451
        %v549 = vunpack.c.l.b16 %v452
        %v550 = vpack.c.b16 %v505, %v502
        %v551 = vpack.c.b16 %v506, %v503
        %v552 = vpack.c.b16 %v507, %v504
        %v553 = vpack.c.b16 %v511, %v508
        %v554 = vpack.c.b16 %v512, %v509
        %v555 = vpack.c.b16 %v513, %v510
        %v556 = vpack.c.b16 %v517, %v514
        %v557 = vpack.c.b16 %v518, %v515
        %v558 = vpack.c.b16 %v519, %v516
        %v559 = vpack.c.b16 %v523, %v520
        %v560 = vpack.c.b16 %v524, %v521
        %v561 = vpack.c.b16 %v525, %v522
        %v562 = vpack.c.b16 %v529, %v526
        %v563 = vpack.c.b16 %v530, %v527
        %v564 = vpack.c.b16 %v531, %v528
        %v565 = vpack.c.b16 %v535, %v532
        %v566 = vpack.c.b16 %v536, %v533
        %v567 = vpack.c.b16 %v537, %v534
        %v568 = vpack.c.b16 %v541, %v538
        %v569 = vpack.c.b16 %v542, %v539
        %v570 = vpack.c.b16 %v543, %v540
        %v571 = vpack.c.b16 %v547, %v544
        %v572 = vpack.c.b16 %v548, %v545
        %v573 = vpack.c.b16 %v549, %v546
        %598 = vmatprep.subr.bf16.mxu0 %v551
        %599 = vmatpush1.bf16.msra.mxu0 %v550
        %600 = vmatprep.subr.bf16.mxu0 %v554
        %601 = vmatpush1.bf16.msra.mxu0 %v553
        %602 = vmatprep.subr.bf16.mxu0 %v557
        %603 = vmatpush1.bf16.msra.mxu0 %v556
        %604 = vmatprep.subr.bf16.mxu0 %v560
        %605 = vmatpush1.bf16.msra.mxu0 %v559
        %606 = vmatprep.subr.bf16.mxu0 %v563
        %607 = vmatpush1.bf16.msra.mxu0 %v562
        %608 = vmatprep.subr.bf16.mxu0 %v566
        %609 = vmatpush1.bf16.msra.mxu0 %v565
        %610 = vmatprep.subr.bf16.mxu0 %v569
        %611 = vmatpush1.bf16.msra.mxu0 %v568
        %612 = vmatprep.subr.bf16.mxu0 %v572
        %613 = vmatpush1.bf16.msra.mxu0 %v571
        %614 = vmatprep.subr.bf16.mxu0 0
        %615 = vmatpush1.bf16.msra.mxu0 0
        %616 = vmatprep.subr.bf16.mxu0 0
        %617 = vmatpush1.bf16.msra.mxu0 0
        %618 = vmatprep.subr.bf16.mxu0 0
        %619 = vmatpush1.bf16.msra.mxu0 0
        %620 = vmatprep.subr.bf16.mxu0 0
        %621 = vmatpush1.bf16.msra.mxu0 0
        %622 = vmatprep.subr.bf16.mxu0 0
        %623 = vmatpush1.bf16.msra.mxu0 0
        %624 = vmatprep.subr.bf16.mxu0 0
        %625 = vmatpush1.bf16.msra.mxu0 0
        %626 = vmatprep.subr.bf16.mxu0 0
        %627 = vmatpush1.bf16.msra.mxu0 0
        %628 = vmatprep.subr.bf16.mxu0 0
        %629 = vmatpush1.bf16.msra.mxu0 0
        %630 = vmatprep.mubr.bf16.mxu0 0
        %631 = vmatmul.mubr.bf16.gmra.mrb[0].mxu0 %v420
        %v632 = vpop.f32.mrb[0].mxu0
        %v633 = vadd.f32 %v458, %v632
        %v634 = vpop.f32.mrb[0].mxu0
        %v635 = vadd.f32 %v462, %v634
        %v636 = vpop.f32.mrb[0].mxu0
        %v637 = vpop.f32.mrb[0].mxu0
        %638 = vdwg.mxu0
        %639 = vmatprep.subr.bf16.mxu0 0
        %640 = vmatpush1.bf16.msra.mxu0 %v552
        %641 = vmatprep.subr.bf16.mxu0 0
        %642 = vmatpush1.bf16.msra.mxu0 %v555
        %643 = vmatprep.subr.bf16.mxu0 0
        %644 = vmatpush1.bf16.msra.mxu0 %v558
        %645 = vmatprep.subr.bf16.mxu0 0
        %646 = vmatpush1.bf16.msra.mxu0 %v561
        %647 = vmatprep.subr.bf16.mxu0 0
        %648 = vmatpush1.bf16.msra.mxu0 %v564
        %649 = vmatprep.subr.bf16.mxu0 0
        %650 = vmatpush1.bf16.msra.mxu0 %v567
        %651 = vmatprep.subr.bf16.mxu0 0
        %652 = vmatpush1.bf16.msra.mxu0 %v570
        %653 = vmatprep.subr.bf16.mxu0 0
        %654 = vmatpush1.bf16.msra.mxu0 %v573
        %655 = vmatprep.subr.bf16.mxu0 0
        %656 = vmatpush1.bf16.msra.mxu0 0
        %657 = vmatprep.subr.bf16.mxu0 0
        %658 = vmatpush1.bf16.msra.mxu0 0
        %659 = vmatprep.subr.bf16.mxu0 0
        %660 = vmatpush1.bf16.msra.mxu0 0
        %661 = vmatprep.subr.bf16.mxu0 0
        %662 = vmatpush1.bf16.msra.mxu0 0
        %663 = vmatprep.subr.bf16.mxu0 0
        %664 = vmatpush1.bf16.msra.mxu0 0
        %665 = vmatprep.subr.bf16.mxu0 0
        %666 = vmatpush1.bf16.msra.mxu0 0
        %667 = vmatprep.subr.bf16.mxu0 0
        %668 = vmatpush1.bf16.msra.mxu0 0
        %669 = vmatprep.subr.bf16.mxu0 0
        %670 = vmatpush1.bf16.msra.mxu0 0
        %671 = vmatprep.mubr.bf16.mxu0 0
        %672 = vmatmul.mubr.bf16.gmra.mrb[0].mxu0 %v420
        %v673 = vpop.f32.mrb[0].mxu0
        %v674 = vadd.f32 %v466, %v673
        %v675 = vpop.f32.mrb[0].mxu0
        %v676 = vpop.f32.mrb[0].mxu0
        %v677 = vpop.f32.mrb[0].mxu0
        %678 = vdwg.mxu0
        %v679 = vpack.c.bf16 %v633, %v633
        %681 = vrot.lane.b32.xlu0 %v679, 96
        %v682 = vpop.permute.xlu0 %681
        %683 = vrot.lane.b32.xlu0 %v679, 64
        %v684 = vpop.permute.xlu0 %683
        %685 = vrot.lane.b32.xlu0 %v679, 32
        %v686 = vpop.permute.xlu0 %685
        %v688 = vunpack.c.l.s4 1983009808
        %v689 = vunpack.c.0.s8 %v688
        %v690 = vlaneseq
        %v691 = vshrl.u32 %v690, 7
        %v692 = vsub.s32 %v689, %v691
        %v693 = vrot.slane %v679, %v692
        %v696 = vunpack.c.l.s4 1983009808
        %v697 = vunpack.c.0.s8 %v696
        %v698 = vlaneseq
        %v699 = vshrl.u32 %v698, 7
        %v700 = vsub.s32 %v697, %v699
        %v701 = vrot.slane %v684, %v700
        %v702 = vcombine.low %v693, %v701
        %v703 = vcombine.high %v693, %v701
        %v705 = vunpack.c.l.s4 1934713408
        %v706 = vunpack.c.0.s8 %v705
        %v707 = vlaneseq
        %v708 = vshrl.u32 %v707, 7
        %v709 = vsub.s32 %v706, %v708
        %v710 = vrot.slane %v702, %v709
        %v712 = vunpack.c.l.s4 1934713408
        %v713 = vunpack.c.0.s8 %v712
        %v714 = vlaneseq
        %v715 = vshrl.u32 %v714, 7
        %v716 = vsub.s32 %v713, %v715
        %v717 = vrot.slane %v703, %v716
        %v718 = vcombine.high %v710, 0
        %v719 = vcombine.high %v717, 0
        %v722 = vunpack.c.l.s4 1983009808
        %v723 = vunpack.c.0.s8 %v722
        %v724 = vlaneseq
        %v725 = vshrl.u32 %v724, 7
        %v726 = vsub.s32 %v723, %v725
        %v727 = vrot.slane %v682, %v726
        %v730 = vunpack.c.l.s4 1983009808
        %v731 = vunpack.c.0.s8 %v730
        %v732 = vlaneseq
        %v733 = vshrl.u32 %v732, 7
        %v734 = vsub.s32 %v731, %v733
        %v735 = vrot.slane %v686, %v734
        %v736 = vcombine.low %v727, %v735
        %v737 = vcombine.high %v727, %v735
        %v739 = vunpack.c.l.s4 1934713408
        %v740 = vunpack.c.0.s8 %v739
        %v741 = vlaneseq
        %v742 = vshrl.u32 %v741, 7
        %v743 = vsub.s32 %v740, %v742
        %v744 = vrot.slane %v736, %v743
        %v746 = vunpack.c.l.s4 1934713408
        %v747 = vunpack.c.0.s8 %v746
        %v748 = vlaneseq
        %v749 = vshrl.u32 %v748, 7
        %v750 = vsub.s32 %v747, %v749
        %v751 = vrot.slane %v737, %v750
        %v752 = vcombine.high %v744, 0
        %v753 = vcombine.high %v751, 0
        %v756 = vpack.i.b16 %v744, %v710
        %v758 = vshrl.u32 %v710, 16
        %v759 = vshrl.u32 %v744, 16
        %v760 = vpack.i.b16 %v759, %v758
        %v764 = vpack.i.b16 %v752, %v718
        %v766 = vshrl.u32 %v718, 16
        %v767 = vshrl.u32 %v752, 16
        %v768 = vpack.i.b16 %v767, %v766
        %v772 = vpack.i.b16 %v751, %v717
        %v774 = vshrl.u32 %v717, 16
        %v775 = vshrl.u32 %v751, 16
        %v776 = vpack.i.b16 %v775, %v774
        %v780 = vpack.i.b16 %v753, %v719
        %v782 = vshrl.u32 %v719, 16
        %v783 = vshrl.u32 %v753, 16
        %v784 = vpack.i.b16 %v783, %v782
        %v786 = vcombine.low %v756, %v772
        %v788 = vunpack.c.l.s4 1983009808
        %v789 = vunpack.c.0.s8 %v788
        %v790 = vlaneseq
        %v791 = vshrl.u32 %v790, 7
        %v792 = vsub.s32 %v789, %v791
        %v793 = vrot.slane %v786, %v792
        %v794 = vcombine.low %v764, %v780
        %v796 = vunpack.c.l.s4 1983009808
        %v797 = vunpack.c.0.s8 %v796
        %v798 = vlaneseq
        %v799 = vshrl.u32 %v798, 7
        %v800 = vsub.s32 %v797, %v799
        %v801 = vrot.slane %v794, %v800
        %v802 = vcombine.low %v793, %v801
        %v804 = vunpack.c.l.s4 1934713408
        %v805 = vunpack.c.0.s8 %v804
        %v806 = vlaneseq
        %v807 = vshrl.u32 %v806, 7
        %v808 = vsub.s32 %v805, %v807
        %v809 = vrot.slane %v802, %v808
        %v810 = vcombine.high %v809, 0
        %v811 = vcombine.low %v760, %v776
        %v813 = vunpack.c.l.s4 1983009808
        %v814 = vunpack.c.0.s8 %v813
        %v815 = vlaneseq
        %v816 = vshrl.u32 %v815, 7
        %v817 = vsub.s32 %v814, %v816
        %v818 = vrot.slane %v811, %v817
        %v819 = vcombine.low %v768, %v784
        %v821 = vunpack.c.l.s4 1983009808
        %v822 = vunpack.c.0.s8 %v821
        %v823 = vlaneseq
        %v824 = vshrl.u32 %v823, 7
        %v825 = vsub.s32 %v822, %v824
        %v826 = vrot.slane %v819, %v825
        %v827 = vcombine.low %v818, %v826
        %v829 = vunpack.c.l.s4 1934713408
        %v830 = vunpack.c.0.s8 %v829
        %v831 = vlaneseq
        %v832 = vshrl.u32 %v831, 7
        %v833 = vsub.s32 %v830, %v832
        %v834 = vrot.slane %v827, %v833
        %v835 = vcombine.high %v834, 0
        %v838 = vpack.i.b16 %v834, %v809
        %v839 = vshrl.u32 %v809, 16
        %v840 = vshrl.u32 %v834, 16
        %v841 = vpack.i.b16 %v840, %v839
        %v844 = vpack.i.b16 %v835, %v810
        %v845 = vshrl.u32 %v810, 16
        %v846 = vshrl.u32 %v835, 16
        %v847 = vpack.i.b16 %v846, %v845
        %v848 = vpack.c.bf16 %v635, %v635
        %850 = vrot.lane.b32.xlu0 %v848, 96
        %v851 = vpop.permute.xlu0 %850
        %852 = vrot.lane.b32.xlu0 %v848, 64
        %v853 = vpop.permute.xlu0 %852
        %854 = vrot.lane.b32.xlu0 %v848, 32
        %v855 = vpop.permute.xlu0 %854
        %v857 = vunpack.c.l.s4 1983009808
        %v858 = vunpack.c.0.s8 %v857
        %v859 = vlaneseq
        %v860 = vshrl.u32 %v859, 7
        %v861 = vsub.s32 %v858, %v860
        %v862 = vrot.slane %v848, %v861
        %v865 = vunpack.c.l.s4 1983009808
        %v866 = vunpack.c.0.s8 %v865
        %v867 = vlaneseq
        %v868 = vshrl.u32 %v867, 7
        %v869 = vsub.s32 %v866, %v868
        %v870 = vrot.slane %v853, %v869
        %v871 = vcombine.low %v862, %v870
        %v872 = vcombine.high %v862, %v870
        %v874 = vunpack.c.l.s4 1934713408
        %v875 = vunpack.c.0.s8 %v874
        %v876 = vlaneseq
        %v877 = vshrl.u32 %v876, 7
        %v878 = vsub.s32 %v875, %v877
        %v879 = vrot.slane %v871, %v878
        %v881 = vunpack.c.l.s4 1934713408
        %v882 = vunpack.c.0.s8 %v881
        %v883 = vlaneseq
        %v884 = vshrl.u32 %v883, 7
        %v885 = vsub.s32 %v882, %v884
        %v886 = vrot.slane %v872, %v885
        %v887 = vcombine.high %v879, 0
        %v888 = vcombine.high %v886, 0
        %v891 = vunpack.c.l.s4 1983009808
        %v892 = vunpack.c.0.s8 %v891
        %v893 = vlaneseq
        %v894 = vshrl.u32 %v893, 7
        %v895 = vsub.s32 %v892, %v894
        %v896 = vrot.slane %v851, %v895
        %v899 = vunpack.c.l.s4 1983009808
        %v900 = vunpack.c.0.s8 %v899
        %v901 = vlaneseq
        %v902 = vshrl.u32 %v901, 7
        %v903 = vsub.s32 %v900, %v902
        %v904 = vrot.slane %v855, %v903
        %v905 = vcombine.low %v896, %v904
        %v906 = vcombine.high %v896, %v904
        %v908 = vunpack.c.l.s4 1934713408
        %v909 = vunpack.c.0.s8 %v908
        %v910 = vlaneseq
        %v911 = vshrl.u32 %v910, 7
        %v912 = vsub.s32 %v909, %v911
        %v913 = vrot.slane %v905, %v912
        %v915 = vunpack.c.l.s4 1934713408
        %v916 = vunpack.c.0.s8 %v915
        %v917 = vlaneseq
        %v918 = vshrl.u32 %v917, 7
        %v919 = vsub.s32 %v916, %v918
        %v920 = vrot.slane %v906, %v919
        %v921 = vcombine.high %v913, 0
        %v922 = vcombine.high %v920, 0
        %v925 = vpack.i.b16 %v913, %v879
        %v927 = vshrl.u32 %v879, 16
        %v928 = vshrl.u32 %v913, 16
        %v929 = vpack.i.b16 %v928, %v927
        %v933 = vpack.i.b16 %v921, %v887
        %v935 = vshrl.u32 %v887, 16
        %v936 = vshrl.u32 %v921, 16
        %v937 = vpack.i.b16 %v936, %v935
        %v941 = vpack.i.b16 %v920, %v886
        %v943 = vshrl.u32 %v886, 16
        %v944 = vshrl.u32 %v920, 16
        %v945 = vpack.i.b16 %v944, %v943
        %v949 = vpack.i.b16 %v922, %v888
        %v951 = vshrl.u32 %v888, 16
        %v952 = vshrl.u32 %v922, 16
        %v953 = vpack.i.b16 %v952, %v951
        %v955 = vcombine.low %v925, %v941
        %v957 = vunpack.c.l.s4 1983009808
        %v958 = vunpack.c.0.s8 %v957
        %v959 = vlaneseq
        %v960 = vshrl.u32 %v959, 7
        %v961 = vsub.s32 %v958, %v960
        %v962 = vrot.slane %v955, %v961
        %v963 = vcombine.low %v933, %v949
        %v965 = vunpack.c.l.s4 1983009808
        %v966 = vunpack.c.0.s8 %v965
        %v967 = vlaneseq
        %v968 = vshrl.u32 %v967, 7
        %v969 = vsub.s32 %v966, %v968
        %v970 = vrot.slane %v963, %v969
        %v971 = vcombine.low %v962, %v970
        %v973 = vunpack.c.l.s4 1934713408
        %v974 = vunpack.c.0.s8 %v973
        %v975 = vlaneseq
        %v976 = vshrl.u32 %v975, 7
        %v977 = vsub.s32 %v974, %v976
        %v978 = vrot.slane %v971, %v977
        %v979 = vcombine.high %v978, 0
        %v980 = vcombine.low %v929, %v945
        %v982 = vunpack.c.l.s4 1983009808
        %v983 = vunpack.c.0.s8 %v982
        %v984 = vlaneseq
        %v985 = vshrl.u32 %v984, 7
        %v986 = vsub.s32 %v983, %v985
        %v987 = vrot.slane %v980, %v986
        %v988 = vcombine.low %v937, %v953
        %v990 = vunpack.c.l.s4 1983009808
        %v991 = vunpack.c.0.s8 %v990
        %v992 = vlaneseq
        %v993 = vshrl.u32 %v992, 7
        %v994 = vsub.s32 %v991, %v993
        %v995 = vrot.slane %v988, %v994
        %v996 = vcombine.low %v987, %v995
        %v998 = vunpack.c.l.s4 1934713408
        %v999 = vunpack.c.0.s8 %v998
        %v1000 = vlaneseq
        %v1001 = vshrl.u32 %v1000, 7
        %v1002 = vsub.s32 %v999, %v1001
        %v1003 = vrot.slane %v996, %v1002
        %v1004 = vcombine.high %v1003, 0
        %v1007 = vpack.i.b16 %v1003, %v978
        %v1008 = vshrl.u32 %v978, 16
        %v1009 = vshrl.u32 %v1003, 16
        %v1010 = vpack.i.b16 %v1009, %v1008
        %v1013 = vpack.i.b16 %v1004, %v979
        %v1014 = vshrl.u32 %v979, 16
        %v1015 = vshrl.u32 %v1004, 16
        %v1016 = vpack.i.b16 %v1015, %v1014
        %v1017 = vpack.c.bf16 %v674, %v674
        %1019 = vrot.lane.b32.xlu0 %v1017, 96
        %v1020 = vpop.permute.xlu0 %1019
        %1021 = vrot.lane.b32.xlu0 %v1017, 64
        %v1022 = vpop.permute.xlu0 %1021
        %1023 = vrot.lane.b32.xlu0 %v1017, 32
        %v1024 = vpop.permute.xlu0 %1023
        %v1026 = vunpack.c.l.s4 1983009808
        %v1027 = vunpack.c.0.s8 %v1026
        %v1028 = vlaneseq
        %v1029 = vshrl.u32 %v1028, 7
        %v1030 = vsub.s32 %v1027, %v1029
        %v1031 = vrot.slane %v1017, %v1030
        %v1034 = vunpack.c.l.s4 1983009808
        %v1035 = vunpack.c.0.s8 %v1034
        %v1036 = vlaneseq
        %v1037 = vshrl.u32 %v1036, 7
        %v1038 = vsub.s32 %v1035, %v1037
        %v1039 = vrot.slane %v1022, %v1038
        %v1040 = vcombine.low %v1031, %v1039
        %v1041 = vcombine.high %v1031, %v1039
        %v1043 = vunpack.c.l.s4 1934713408
        %v1044 = vunpack.c.0.s8 %v1043
        %v1045 = vlaneseq
        %v1046 = vshrl.u32 %v1045, 7
        %v1047 = vsub.s32 %v1044, %v1046
        %v1048 = vrot.slane %v1040, %v1047
        %v1050 = vunpack.c.l.s4 1934713408
        %v1051 = vunpack.c.0.s8 %v1050
        %v1052 = vlaneseq
        %v1053 = vshrl.u32 %v1052, 7
        %v1054 = vsub.s32 %v1051, %v1053
        %v1055 = vrot.slane %v1041, %v1054
        %v1056 = vcombine.high %v1048, 0
        %v1057 = vcombine.high %v1055, 0
        %v1060 = vunpack.c.l.s4 1983009808
        %v1061 = vunpack.c.0.s8 %v1060
        %v1062 = vlaneseq
        %v1063 = vshrl.u32 %v1062, 7
        %v1064 = vsub.s32 %v1061, %v1063
        %v1065 = vrot.slane %v1020, %v1064
        %v1068 = vunpack.c.l.s4 1983009808
        %v1069 = vunpack.c.0.s8 %v1068
        %v1070 = vlaneseq
        %v1071 = vshrl.u32 %v1070, 7
        %v1072 = vsub.s32 %v1069, %v1071
        %v1073 = vrot.slane %v1024, %v1072
        %v1074 = vcombine.low %v1065, %v1073
        %v1075 = vcombine.high %v1065, %v1073
        %v1077 = vunpack.c.l.s4 1934713408
        %v1078 = vunpack.c.0.s8 %v1077
        %v1079 = vlaneseq
        %v1080 = vshrl.u32 %v1079, 7
        %v1081 = vsub.s32 %v1078, %v1080
        %v1082 = vrot.slane %v1074, %v1081
        %v1084 = vunpack.c.l.s4 1934713408
        %v1085 = vunpack.c.0.s8 %v1084
        %v1086 = vlaneseq
        %v1087 = vshrl.u32 %v1086, 7
        %v1088 = vsub.s32 %v1085, %v1087
        %v1089 = vrot.slane %v1075, %v1088
        %v1090 = vcombine.high %v1082, 0
        %v1091 = vcombine.high %v1089, 0
        %v1094 = vpack.i.b16 %v1082, %v1048
        %v1096 = vshrl.u32 %v1048, 16
        %v1097 = vshrl.u32 %v1082, 16
        %v1098 = vpack.i.b16 %v1097, %v1096
        %v1102 = vpack.i.b16 %v1090, %v1056
        %v1104 = vshrl.u32 %v1056, 16
        %v1105 = vshrl.u32 %v1090, 16
        %v1106 = vpack.i.b16 %v1105, %v1104
        %v1110 = vpack.i.b16 %v1089, %v1055
        %v1112 = vshrl.u32 %v1055, 16
        %v1113 = vshrl.u32 %v1089, 16
        %v1114 = vpack.i.b16 %v1113, %v1112
        %v1118 = vpack.i.b16 %v1091, %v1057
        %v1120 = vshrl.u32 %v1057, 16
        %v1121 = vshrl.u32 %v1091, 16
        %v1122 = vpack.i.b16 %v1121, %v1120
        %v1124 = vcombine.low %v1094, %v1110
        %v1126 = vunpack.c.l.s4 1983009808
        %v1127 = vunpack.c.0.s8 %v1126
        %v1128 = vlaneseq
        %v1129 = vshrl.u32 %v1128, 7
        %v1130 = vsub.s32 %v1127, %v1129
        %v1131 = vrot.slane %v1124, %v1130
        %v1132 = vcombine.low %v1102, %v1118
        %v1134 = vunpack.c.l.s4 1983009808
        %v1135 = vunpack.c.0.s8 %v1134
        %v1136 = vlaneseq
        %v1137 = vshrl.u32 %v1136, 7
        %v1138 = vsub.s32 %v1135, %v1137
        %v1139 = vrot.slane %v1132, %v1138
        %v1140 = vcombine.low %v1131, %v1139
        %v1142 = vunpack.c.l.s4 1934713408
        %v1143 = vunpack.c.0.s8 %v1142
        %v1144 = vlaneseq
        %v1145 = vshrl.u32 %v1144, 7
        %v1146 = vsub.s32 %v1143, %v1145
        %v1147 = vrot.slane %v1140, %v1146
        %v1148 = vcombine.high %v1147, 0
        %v1149 = vcombine.low %v1098, %v1114
        %v1151 = vunpack.c.l.s4 1983009808
        %v1152 = vunpack.c.0.s8 %v1151
        %v1153 = vlaneseq
        %v1154 = vshrl.u32 %v1153, 7
        %v1155 = vsub.s32 %v1152, %v1154
        %v1156 = vrot.slane %v1149, %v1155
        %v1157 = vcombine.low %v1106, %v1122
        %v1159 = vunpack.c.l.s4 1983009808
        %v1160 = vunpack.c.0.s8 %v1159
        %v1161 = vlaneseq
        %v1162 = vshrl.u32 %v1161, 7
        %v1163 = vsub.s32 %v1160, %v1162
        %v1164 = vrot.slane %v1157, %v1163
        %v1165 = vcombine.low %v1156, %v1164
        %v1167 = vunpack.c.l.s4 1934713408
        %v1168 = vunpack.c.0.s8 %v1167
        %v1169 = vlaneseq
        %v1170 = vshrl.u32 %v1169, 7
        %v1171 = vsub.s32 %v1168, %v1170
        %v1172 = vrot.slane %v1165, %v1171
        %v1173 = vcombine.high %v1172, 0
        %v1176 = vpack.i.b16 %v1172, %v1147
        %v1177 = vshrl.u32 %v1147, 16
        %v1178 = vshrl.u32 %v1172, 16
        %v1179 = vpack.i.b16 %v1178, %v1177
        %v1182 = vpack.i.b16 %v1173, %v1148
        %v1183 = vshrl.u32 %v1148, 16
        %v1184 = vshrl.u32 %v1173, 16
        %v1185 = vpack.i.b16 %v1184, %v1183
        %vm1186 = vcmask 261120
        %v1188 = vsel %vm1186, %v838, 0
        %v1191 = vsel %vm1186, %v1007, 0
        %1193 = vmatprep.subr.bf16.mxu0 0
        %1194 = vmatpush1.bf16.xpose.msra.mxu0 %v1191
        %1195 = vmatprep.subr.bf16.mxu0 0
        %1196 = vmatpush1.bf16.xpose.msra.mxu0 0
        %1197 = vmatprep.subr.bf16.mxu0 0
        %1198 = vmatpush1.bf16.xpose.msra.mxu0 0
        %1199 = vmatprep.subr.bf16.mxu0 0
        %1200 = vmatpush1.bf16.xpose.msra.mxu0 0
        %1201 = vmatprep.subr.bf16.mxu0 0
        %1202 = vmatpush1.bf16.xpose.msra.mxu0 0
        %1203 = vmatprep.subr.bf16.mxu0 0
        %1204 = vmatpush1.bf16.xpose.msra.mxu0 0
        %1205 = vmatprep.subr.bf16.mxu0 0
        %1206 = vmatpush1.bf16.xpose.msra.mxu0 0
        %1207 = vmatprep.subr.bf16.mxu0 0
        %1208 = vmatpush1.bf16.xpose.msra.mxu0 0
        %1209 = vmatprep.subr.bf16.mxu0 0
        %1210 = vmatpush1.bf16.xpose.msra.mxu0 0
        %1211 = vmatprep.subr.bf16.mxu0 0
        %1212 = vmatpush1.bf16.xpose.msra.mxu0 0
        %1213 = vmatprep.subr.bf16.mxu0 0
        %1214 = vmatpush1.bf16.xpose.msra.mxu0 0
        %1215 = vmatprep.subr.bf16.mxu0 0
        %1216 = vmatpush1.bf16.xpose.msra.mxu0 0
        %1217 = vmatprep.subr.bf16.mxu0 0
        %1218 = vmatpush1.bf16.xpose.msra.mxu0 0
        %1219 = vmatprep.subr.bf16.mxu0 0
        %1220 = vmatpush1.bf16.xpose.msra.mxu0 0
        %1221 = vmatprep.subr.bf16.mxu0 0
        %1222 = vmatpush1.bf16.xpose.msra.mxu0 0
        %1223 = vmatprep.subr.bf16.mxu0 0
        %1224 = vmatpush1.bf16.xpose.msra.mxu0 0
        %1225 = vmatprep.mubr.bf16.mxu0 0
        %1226 = vmatmul.mubr.bf16.gmra.mrb[0].mxu0 %v1188
        %v1227 = vpop.f32.mrb[0].mxu0
        %v1228 = vadd.f32 0.0, %v1227
        %v1229 = vpop.f32.mrb[0].mxu0
        %v1230 = vpop.f32.mrb[0].mxu0
        %v1231 = vpop.f32.mrb[0].mxu0
        %1232 = vdwg.mxu0
        %v1234 = vsel %vm1186, %v841, 0
        %v1237 = vsel %vm1186, %v1010, 0
        %1239 = vmatprep.subr.bf16.mxu0 0
        %1240 = vmatpush1.bf16.xpose.msra.mxu0 %v1237
        %1241 = vmatprep.subr.bf16.mxu0 0
        %1242 = vmatpush1.bf16.xpose.msra.mxu0 0
        %1243 = vmatprep.subr.bf16.mxu0 0
        %1244 = vmatpush1.bf16.xpose.msra.mxu0 0
        %1245 = vmatprep.subr.bf16.mxu0 0
        %1246 = vmatpush1.bf16.xpose.msra.mxu0 0
        %1247 = vmatprep.subr.bf16.mxu0 0
        %1248 = vmatpush1.bf16.xpose.msra.mxu0 0
        %1249 = vmatprep.subr.bf16.mxu0 0
        %1250 = vmatpush1.bf16.xpose.msra.mxu0 0
        %1251 = vmatprep.subr.bf16.mxu0 0
        %1252 = vmatpush1.bf16.xpose.msra.mxu0 0
        %1253 = vmatprep.subr.bf16.mxu0 0
        %1254 = vmatpush1.bf16.xpose.msra.mxu0 0
        %1255 = vmatprep.subr.bf16.mxu0 0
        %1256 = vmatpush1.bf16.xpose.msra.mxu0 0
        %1257 = vmatprep.subr.bf16.mxu0 0
        %1258 = vmatpush1.bf16.xpose.msra.mxu0 0
        %1259 = vmatprep.subr.bf16.mxu0 0
        %1260 = vmatpush1.bf16.xpose.msra.mxu0 0
        %1261 = vmatprep.subr.bf16.mxu0 0
        %1262 = vmatpush1.bf16.xpose.msra.mxu0 0
        %1263 = vmatprep.subr.bf16.mxu0 0
        %1264 = vmatpush1.bf16.xpose.msra.mxu0 0
        %1265 = vmatprep.subr.bf16.mxu0 0
        %1266 = vmatpush1.bf16.xpose.msra.mxu0 0
        %1267 = vmatprep.subr.bf16.mxu0 0
        %1268 = vmatpush1.bf16.xpose.msra.mxu0 0
        %1269 = vmatprep.subr.bf16.mxu0 0
        %1270 = vmatpush1.bf16.xpose.msra.mxu0 0
        %1271 = vmatprep.mubr.bf16.mxu0 0
        %1272 = vmatmul.mubr.bf16.gmra.mrb[0].mxu0 %v1234
        %v1273 = vpop.f32.mrb[0].mxu0
        %v1274 = vadd.f32 0.0, %v1273
        %v1275 = vpop.f32.mrb[0].mxu0
        %v1276 = vpop.f32.mrb[0].mxu0
        %v1277 = vpop.f32.mrb[0].mxu0
        %1278 = vdwg.mxu0
        %v1280 = vsel %vm1186, %v844, 0
        %v1283 = vsel %vm1186, %v1013, 0
        %1285 = vmatprep.subr.bf16.mxu0 0
        %1286 = vmatpush1.bf16.xpose.msra.mxu0 %v1283
        %1287 = vmatprep.subr.bf16.mxu0 0
        %1288 = vmatpush1.bf16.xpose.msra.mxu0 0
        %1289 = vmatprep.subr.bf16.mxu0 0
        %1290 = vmatpush1.bf16.xpose.msra.mxu0 0
        %1291 = vmatprep.subr.bf16.mxu0 0
        %1292 = vmatpush1.bf16.xpose.msra.mxu0 0
        %1293 = vmatprep.subr.bf16.mxu0 0
        %1294 = vmatpush1.bf16.xpose.msra.mxu0 0
        %1295 = vmatprep.subr.bf16.mxu0 0
        %1296 = vmatpush1.bf16.xpose.msra.mxu0 0
        %1297 = vmatprep.subr.bf16.mxu0 0
        %1298 = vmatpush1.bf16.xpose.msra.mxu0 0
        %1299 = vmatprep.subr.bf16.mxu0 0
        %1300 = vmatpush1.bf16.xpose.msra.mxu0 0
        %1301 = vmatprep.subr.bf16.mxu0 0
        %1302 = vmatpush1.bf16.xpose.msra.mxu0 0
        %1303 = vmatprep.subr.bf16.mxu0 0
        %1304 = vmatpush1.bf16.xpose.msra.mxu0 0
        %1305 = vmatprep.subr.bf16.mxu0 0
        %1306 = vmatpush1.bf16.xpose.msra.mxu0 0
        %1307 = vmatprep.subr.bf16.mxu0 0
        %1308 = vmatpush1.bf16.xpose.msra.mxu0 0
        %1309 = vmatprep.subr.bf16.mxu0 0
        %1310 = vmatpush1.bf16.xpose.msra.mxu0 0
        %1311 = vmatprep.subr.bf16.mxu0 0
        %1312 = vmatpush1.bf16.xpose.msra.mxu0 0
        %1313 = vmatprep.subr.bf16.mxu0 0
        %1314 = vmatpush1.bf16.xpose.msra.mxu0 0
        %1315 = vmatprep.subr.bf16.mxu0 0
        %1316 = vmatpush1.bf16.xpose.msra.mxu0 0
        %1317 = vmatprep.mubr.bf16.mxu0 0
        %1318 = vmatmul.mubr.bf16.gmra.mrb[0].mxu0 %v1280
        %v1319 = vpop.f32.mrb[0].mxu0
        %v1320 = vadd.f32 0.0, %v1319
        %v1321 = vpop.f32.mrb[0].mxu0
        %v1322 = vpop.f32.mrb[0].mxu0
        %v1323 = vpop.f32.mrb[0].mxu0
        %1324 = vdwg.mxu0
        %v1326 = vsel %vm1186, %v847, 0
        %v1329 = vsel %vm1186, %v1016, 0
        %1331 = vmatprep.subr.bf16.mxu0 0
        %1332 = vmatpush1.bf16.xpose.msra.mxu0 %v1329
        %1333 = vmatprep.subr.bf16.mxu0 0
        %1334 = vmatpush1.bf16.xpose.msra.mxu0 0
        %1335 = vmatprep.subr.bf16.mxu0 0
        %1336 = vmatpush1.bf16.xpose.msra.mxu0 0
        %1337 = vmatprep.subr.bf16.mxu0 0
        %1338 = vmatpush1.bf16.xpose.msra.mxu0 0
        %1339 = vmatprep.subr.bf16.mxu0 0
        %1340 = vmatpush1.bf16.xpose.msra.mxu0 0
        %1341 = vmatprep.subr.bf16.mxu0 0
        %1342 = vmatpush1.bf16.xpose.msra.mxu0 0
        %1343 = vmatprep.subr.bf16.mxu0 0
        %1344 = vmatpush1.bf16.xpose.msra.mxu0 0
        %1345 = vmatprep.subr.bf16.mxu0 0
        %1346 = vmatpush1.bf16.xpose.msra.mxu0 0
        %1347 = vmatprep.subr.bf16.mxu0 0
        %1348 = vmatpush1.bf16.xpose.msra.mxu0 0
        %1349 = vmatprep.subr.bf16.mxu0 0
        %1350 = vmatpush1.bf16.xpose.msra.mxu0 0
        %1351 = vmatprep.subr.bf16.mxu0 0
        %1352 = vmatpush1.bf16.xpose.msra.mxu0 0
        %1353 = vmatprep.subr.bf16.mxu0 0
        %1354 = vmatpush1.bf16.xpose.msra.mxu0 0
        %1355 = vmatprep.subr.bf16.mxu0 0
        %1356 = vmatpush1.bf16.xpose.msra.mxu0 0
        %1357 = vmatprep.subr.bf16.mxu0 0
        %1358 = vmatpush1.bf16.xpose.msra.mxu0 0
        %1359 = vmatprep.subr.bf16.mxu0 0
        %1360 = vmatpush1.bf16.xpose.msra.mxu0 0
        %1361 = vmatprep.subr.bf16.mxu0 0
        %1362 = vmatpush1.bf16.xpose.msra.mxu0 0
        %1363 = vmatprep.mubr.bf16.mxu0 0
        %1364 = vmatmul.mubr.bf16.gmra.mrb[0].mxu0 %v1326
        %v1365 = vpop.f32.mrb[0].mxu0
        %v1366 = vadd.f32 0.0, %v1365
        %v1367 = vpop.f32.mrb[0].mxu0
        %v1368 = vpop.f32.mrb[0].mxu0
        %v1369 = vpop.f32.mrb[0].mxu0
        %1370 = vdwg.mxu0
        %vm1371 = vcmask 64512
        %v1372 = vsel %vm1371, %v1228, -inf
        %1373 = vmax.xlane.f32.xlu0 %v1372
        %v1374 = vpop.xlane.xlu0 %1373
        %v1375 = vsel %vm1371, %v1274, -inf
        %1376 = vmax.xlane.f32.xlu0 %v1375
        %v1377 = vpop.xlane.xlu0 %1376
        %v1378 = vsel %vm1371, %v1320, -inf
        %1379 = vmax.xlane.f32.xlu0 %v1378
        %v1380 = vpop.xlane.xlu0 %1379
        %v1381 = vsel %vm1371, %v1366, -inf
        %1382 = vmax.xlane.f32.xlu0 %v1381
        %v1383 = vpop.xlane.xlu0 %1382
        %v1384 = vsub.f32 -inf, %v1374
        %v1385 = vsub.f32 -inf, %v1377
        %v1386 = vsub.f32 -inf, %v1380
        %v1387 = vsub.f32 -inf, %v1383
        %v1388 = vmul.f32 %v1384, 1.442695
        %v1389 = vpow.pop %v1388
        %v1390 = vmul.f32 %v1385, 1.442695
        %v1391 = vpow.pop %v1390
        %v1392 = vmul.f32 %v1386, 1.442695
        %v1393 = vpow.pop %v1392
        %v1394 = vmul.f32 %v1387, 1.442695
        %v1395 = vpow.pop %v1394
        %v1396 = vsub.f32 %v1228, %v1374
        %v1397 = vsub.f32 %v1274, %v1377
        %v1398 = vsub.f32 %v1320, %v1380
        %v1399 = vsub.f32 %v1366, %v1383
        %v1400 = vmul.f32 %v1396, 1.442695
        %v1401 = vpow.pop %v1400
        %v1402 = vmul.f32 %v1397, 1.442695
        %v1403 = vpow.pop %v1402
        %v1404 = vmul.f32 %v1398, 1.442695
        %v1405 = vpow.pop %v1404
        %v1406 = vmul.f32 %v1399, 1.442695
        %v1407 = vpow.pop %v1406
        %v1408 = vmul.f32 %v1389, 0.0
        %v1409 = vmul.f32 %v1391, 0.0
        %v1410 = vmul.f32 %v1393, 0.0
        %v1411 = vmul.f32 %v1395, 0.0
        %v1412 = vsel %vm1371, %v1401, 0.0
        %1413 = vadd.xlane.f32.xlu0 %v1412
        %v1414 = vpop.xlane.xlu0 %1413
        %v1415 = vsel %vm1371, %v1403, 0.0
        %1416 = vadd.xlane.f32.xlu0 %v1415
        %v1417 = vpop.xlane.xlu0 %1416
        %v1418 = vsel %vm1371, %v1405, 0.0
        %1419 = vadd.xlane.f32.xlu0 %v1418
        %v1420 = vpop.xlane.xlu0 %1419
        %v1421 = vsel %vm1371, %v1407, 0.0
        %1422 = vadd.xlane.f32.xlu0 %v1421
        %v1423 = vpop.xlane.xlu0 %1422
        %v1424 = vadd.f32 %v1408, %v1414
        %v1425 = vadd.f32 %v1409, %v1417
        %v1426 = vadd.f32 %v1410, %v1420
        %v1427 = vadd.f32 %v1411, %v1423
        %v1428 = vpack.c.bf16 %v1401, %v1401
        %v1429 = vpack.c.bf16 %v1403, %v1403
        %v1430 = vpack.c.bf16 %v1405, %v1405
        %v1431 = vpack.c.bf16 %v1407, %v1407
        %v1433 = vsel %vm1371, %v1428, 0
        %vm1435 = vcmask 1043456
        %v1437 = vsel %vm1435, %v1176, 0
        %1439 = vmatprep.subr.bf16.mxu0 0
        %1440 = vmatpush1.bf16.msra.mxu0 %v1437
        %1441 = vmatprep.subr.bf16.mxu0 0
        %1442 = vmatpush1.bf16.msra.mxu0 0
        %1443 = vmatprep.subr.bf16.mxu0 0
        %1444 = vmatpush1.bf16.msra.mxu0 0
        %1445 = vmatprep.subr.bf16.mxu0 0
        %1446 = vmatpush1.bf16.msra.mxu0 0
        %1447 = vmatprep.subr.bf16.mxu0 0
        %1448 = vmatpush1.bf16.msra.mxu0 0
        %1449 = vmatprep.subr.bf16.mxu0 0
        %1450 = vmatpush1.bf16.msra.mxu0 0
        %1451 = vmatprep.subr.bf16.mxu0 0
        %1452 = vmatpush1.bf16.msra.mxu0 0
        %1453 = vmatprep.subr.bf16.mxu0 0
        %1454 = vmatpush1.bf16.msra.mxu0 0
        %1455 = vmatprep.subr.bf16.mxu0 0
        %1456 = vmatpush1.bf16.msra.mxu0 0
        %1457 = vmatprep.subr.bf16.mxu0 0
        %1458 = vmatpush1.bf16.msra.mxu0 0
        %1459 = vmatprep.subr.bf16.mxu0 0
        %1460 = vmatpush1.bf16.msra.mxu0 0
        %1461 = vmatprep.subr.bf16.mxu0 0
        %1462 = vmatpush1.bf16.msra.mxu0 0
        %1463 = vmatprep.subr.bf16.mxu0 0
        %1464 = vmatpush1.bf16.msra.mxu0 0
        %1465 = vmatprep.subr.bf16.mxu0 0
        %1466 = vmatpush1.bf16.msra.mxu0 0
        %1467 = vmatprep.subr.bf16.mxu0 0
        %1468 = vmatpush1.bf16.msra.mxu0 0
        %1469 = vmatprep.subr.bf16.mxu0 0
        %1470 = vmatpush1.bf16.msra.mxu0 0
        %1471 = vmatprep.mubr.bf16.mxu0 0
        %1472 = vmatmul.mubr.bf16.gmra.mrb[0].mxu0 %v1433
        %v1473 = vpop.f32.mrb[0].mxu0
        %v1474 = vadd.f32 0.0, %v1473
        %v1475 = vpop.f32.mrb[0].mxu0
        %v1476 = vpop.f32.mrb[0].mxu0
        %v1477 = vpop.f32.mrb[0].mxu0
        %1478 = vdwg.mxu0
        %v1480 = vsel %vm1371, %v1429, 0
        %v1483 = vsel %vm1435, %v1179, 0
        %1485 = vmatprep.subr.bf16.mxu0 0
        %1486 = vmatpush1.bf16.msra.mxu0 %v1483
        %1487 = vmatprep.subr.bf16.mxu0 0
        %1488 = vmatpush1.bf16.msra.mxu0 0
        %1489 = vmatprep.subr.bf16.mxu0 0
        %1490 = vmatpush1.bf16.msra.mxu0 0
        %1491 = vmatprep.subr.bf16.mxu0 0
        %1492 = vmatpush1.bf16.msra.mxu0 0
        %1493 = vmatprep.subr.bf16.mxu0 0
        %1494 = vmatpush1.bf16.msra.mxu0 0
        %1495 = vmatprep.subr.bf16.mxu0 0
        %1496 = vmatpush1.bf16.msra.mxu0 0
        %1497 = vmatprep.subr.bf16.mxu0 0
        %1498 = vmatpush1.bf16.msra.mxu0 0
        %1499 = vmatprep.subr.bf16.mxu0 0
        %1500 = vmatpush1.bf16.msra.mxu0 0
        %1501 = vmatprep.subr.bf16.mxu0 0
        %1502 = vmatpush1.bf16.msra.mxu0 0
        %1503 = vmatprep.subr.bf16.mxu0 0
        %1504 = vmatpush1.bf16.msra.mxu0 0
        %1505 = vmatprep.subr.bf16.mxu0 0
        %1506 = vmatpush1.bf16.msra.mxu0 0
        %1507 = vmatprep.subr.bf16.mxu0 0
        %1508 = vmatpush1.bf16.msra.mxu0 0
        %1509 = vmatprep.subr.bf16.mxu0 0
        %1510 = vmatpush1.bf16.msra.mxu0 0
        %1511 = vmatprep.subr.bf16.mxu0 0
        %1512 = vmatpush1.bf16.msra.mxu0 0
        %1513 = vmatprep.subr.bf16.mxu0 0
        %1514 = vmatpush1.bf16.msra.mxu0 0
        %1515 = vmatprep.subr.bf16.mxu0 0
        %1516 = vmatpush1.bf16.msra.mxu0 0
        %1517 = vmatprep.mubr.bf16.mxu0 0
        %1518 = vmatmul.mubr.bf16.gmra.mrb[0].mxu0 %v1480
        %v1519 = vpop.f32.mrb[0].mxu0
        %v1520 = vadd.f32 0.0, %v1519
        %v1521 = vpop.f32.mrb[0].mxu0
        %v1522 = vpop.f32.mrb[0].mxu0
        %v1523 = vpop.f32.mrb[0].mxu0
        %1524 = vdwg.mxu0
        %v1526 = vsel %vm1371, %v1430, 0
        %v1529 = vsel %vm1435, %v1182, 0
        %1531 = vmatprep.subr.bf16.mxu0 0
        %1532 = vmatpush1.bf16.msra.mxu0 %v1529
        %1533 = vmatprep.subr.bf16.mxu0 0
        %1534 = vmatpush1.bf16.msra.mxu0 0
        %1535 = vmatprep.subr.bf16.mxu0 0
        %1536 = vmatpush1.bf16.msra.mxu0 0
        %1537 = vmatprep.subr.bf16.mxu0 0
        %1538 = vmatpush1.bf16.msra.mxu0 0
        %1539 = vmatprep.subr.bf16.mxu0 0
        %1540 = vmatpush1.bf16.msra.mxu0 0
        %1541 = vmatprep.subr.bf16.mxu0 0
        %1542 = vmatpush1.bf16.msra.mxu0 0
        %1543 = vmatprep.subr.bf16.mxu0 0
        %1544 = vmatpush1.bf16.msra.mxu0 0
        %1545 = vmatprep.subr.bf16.mxu0 0
        %1546 = vmatpush1.bf16.msra.mxu0 0
        %1547 = vmatprep.subr.bf16.mxu0 0
        %1548 = vmatpush1.bf16.msra.mxu0 0
        %1549 = vmatprep.subr.bf16.mxu0 0
        %1550 = vmatpush1.bf16.msra.mxu0 0
        %1551 = vmatprep.subr.bf16.mxu0 0
        %1552 = vmatpush1.bf16.msra.mxu0 0
        %1553 = vmatprep.subr.bf16.mxu0 0
        %1554 = vmatpush1.bf16.msra.mxu0 0
        %1555 = vmatprep.subr.bf16.mxu0 0
        %1556 = vmatpush1.bf16.msra.mxu0 0
        %1557 = vmatprep.subr.bf16.mxu0 0
        %1558 = vmatpush1.bf16.msra.mxu0 0
        %1559 = vmatprep.subr.bf16.mxu0 0
        %1560 = vmatpush1.bf16.msra.mxu0 0
        %1561 = vmatprep.subr.bf16.mxu0 0
        %1562 = vmatpush1.bf16.msra.mxu0 0
        %1563 = vmatprep.mubr.bf16.mxu0 0
        %1564 = vmatmul.mubr.bf16.gmra.mrb[0].mxu0 %v1526
        %v1565 = vpop.f32.mrb[0].mxu0
        %v1566 = vadd.f32 0.0, %v1565
        %v1567 = vpop.f32.mrb[0].mxu0
        %v1568 = vpop.f32.mrb[0].mxu0
        %v1569 = vpop.f32.mrb[0].mxu0
        %1570 = vdwg.mxu0
        %v1572 = vsel %vm1371, %v1431, 0
        %v1575 = vsel %vm1435, %v1185, 0
        %1577 = vmatprep.subr.bf16.mxu0 0
        %1578 = vmatpush1.bf16.msra.mxu0 %v1575
        %1579 = vmatprep.subr.bf16.mxu0 0
        %1580 = vmatpush1.bf16.msra.mxu0 0
        %1581 = vmatprep.subr.bf16.mxu0 0
        %1582 = vmatpush1.bf16.msra.mxu0 0
        %1583 = vmatprep.subr.bf16.mxu0 0
        %1584 = vmatpush1.bf16.msra.mxu0 0
        %1585 = vmatprep.subr.bf16.mxu0 0
        %1586 = vmatpush1.bf16.msra.mxu0 0
        %1587 = vmatprep.subr.bf16.mxu0 0
        %1588 = vmatpush1.bf16.msra.mxu0 0
        %1589 = vmatprep.subr.bf16.mxu0 0
        %1590 = vmatpush1.bf16.msra.mxu0 0
        %1591 = vmatprep.subr.bf16.mxu0 0
        %1592 = vmatpush1.bf16.msra.mxu0 0
        %1593 = vmatprep.subr.bf16.mxu0 0
        %1594 = vmatpush1.bf16.msra.mxu0 0
        %1595 = vmatprep.subr.bf16.mxu0 0
        %1596 = vmatpush1.bf16.msra.mxu0 0
        %1597 = vmatprep.subr.bf16.mxu0 0
        %1598 = vmatpush1.bf16.msra.mxu0 0
        %1599 = vmatprep.subr.bf16.mxu0 0
        %1600 = vmatpush1.bf16.msra.mxu0 0
        %1601 = vmatprep.subr.bf16.mxu0 0
        %1602 = vmatpush1.bf16.msra.mxu0 0
        %1603 = vmatprep.subr.bf16.mxu0 0
        %1604 = vmatpush1.bf16.msra.mxu0 0
        %1605 = vmatprep.subr.bf16.mxu0 0
        %1606 = vmatpush1.bf16.msra.mxu0 0
        %1607 = vmatprep.subr.bf16.mxu0 0
        %1608 = vmatpush1.bf16.msra.mxu0 0
        %1609 = vmatprep.mubr.bf16.mxu0 0
        %1610 = vmatmul.mubr.bf16.gmra.mrb[0].mxu0 %v1572
        %v1611 = vpop.f32.mrb[0].mxu0
        %v1612 = vadd.f32 0.0, %v1611
        %v1613 = vpop.f32.mrb[0].mxu0
        %v1614 = vpop.f32.mrb[0].mxu0
        %v1615 = vpop.f32.mrb[0].mxu0
        %1616 = vdwg.mxu0
        %v1617 = vadd.f32 %v1408, %v1474
        %v1618 = vadd.f32 %v1409, %v1520
        %v1619 = vadd.f32 %v1410, %v1566
        %v1620 = vadd.f32 %v1411, %v1612
        %v1621 = vrcp.pop %v1424
        %v1622 = vrcp.pop %v1425
        %v1623 = vrcp.pop %v1426
        %v1624 = vrcp.pop %v1427
        %v1625 = vmul.f32 %v1617, %v1621
        %v1626 = vmul.f32 %v1618, %v1622
        %v1627 = vmul.f32 %v1619, %v1623
        %v1628 = vmul.f32 %v1620, %v1624
        %v1629 = vpack.c.bf16 %v1625, %v1625
        %v1630 = vpack.c.bf16 %v1626, %v1626
        %v1631 = vpack.c.bf16 %v1627, %v1627
        %v1632 = vpack.c.bf16 %v1628, %v1628
        %v1633 = vld [vmem:[#allocation7] sm:$0xf]
        %v1634 = vld [vmem:[#allocation7 + $0x4] sm:$0xf]
        %v1635 = vld [vmem:[#allocation7 + $0x8] sm:$0xf]
        %v1636 = vld [vmem:[#allocation7 + $0xc] sm:$0xf]
        %v1637 = vld [vmem:[#allocation7 + $0x10] sm:$0xf]
        %v1638 = vld [vmem:[#allocation7 + $0x14] sm:$0xf]
        %v1639 = vld [vmem:[#allocation7 + $0x18] sm:$0xf]
        %v1640 = vld [vmem:[#allocation7 + $0x1c] sm:$0xf]
        %v1641 = vld [vmem:[#allocation7 + $0x20] sm:$0xf]
        %v1642 = vld [vmem:[#allocation7 + $0x24] sm:$0xf]
        %v1643 = vld [vmem:[#allocation7 + $0x28] sm:$0xf]
        %v1644 = vld [vmem:[#allocation7 + $0x2c] sm:$0xf]
        %v1645 = vld [vmem:[#allocation7 + $0x30] sm:$0xf]
        %v1646 = vld [vmem:[#allocation7 + $0x34] sm:$0xf]
        %v1647 = vld [vmem:[#allocation7 + $0x38] sm:$0xf]
        %v1648 = vld [vmem:[#allocation7 + $0x3c] sm:$0xf]
        %v1653 = vunpack.c.l.b16 %v1633
        %v1654 = vunpack.c.l.b16 %v1634
        %v1655 = vunpack.c.l.b16 %v1635
        %v1656 = vunpack.c.l.b16 %v1636
        %v1657 = vpack.c.b16 %v1654, %v1653
        %v1658 = vpack.c.b16 %v1656, %v1655
        %v1662 = vsel %vm1186, %v1629, 0
        %1664 = vmatprep.subr.bf16.mxu0 0
        %1665 = vmatpush1.bf16.msra.mxu0 %v1657
        %1666 = vmatprep.subr.bf16.mxu0 0
        %1667 = vmatpush1.bf16.msra.mxu0 %v1658
        %1668 = vmatprep.subr.bf16.mxu0 0
        %1669 = vmatpush1.bf16.msra.mxu0 0
        %1670 = vmatprep.subr.bf16.mxu0 0
        %1671 = vmatpush1.bf16.msra.mxu0 0
        %1672 = vmatprep.subr.bf16.mxu0 0
        %1673 = vmatpush1.bf16.msra.mxu0 0
        %1674 = vmatprep.subr.bf16.mxu0 0
        %1675 = vmatpush1.bf16.msra.mxu0 0
        %1676 = vmatprep.subr.bf16.mxu0 0
        %1677 = vmatpush1.bf16.msra.mxu0 0
        %1678 = vmatprep.subr.bf16.mxu0 0
        %1679 = vmatpush1.bf16.msra.mxu0 0
        %1680 = vmatprep.subr.bf16.mxu0 0
        %1681 = vmatpush1.bf16.msra.mxu0 0
        %1682 = vmatprep.subr.bf16.mxu0 0
        %1683 = vmatpush1.bf16.msra.mxu0 0
        %1684 = vmatprep.subr.bf16.mxu0 0
        %1685 = vmatpush1.bf16.msra.mxu0 0
        %1686 = vmatprep.subr.bf16.mxu0 0
        %1687 = vmatpush1.bf16.msra.mxu0 0
        %1688 = vmatprep.subr.bf16.mxu0 0
        %1689 = vmatpush1.bf16.msra.mxu0 0
        %1690 = vmatprep.subr.bf16.mxu0 0
        %1691 = vmatpush1.bf16.msra.mxu0 0
        %1692 = vmatprep.subr.bf16.mxu0 0
        %1693 = vmatpush1.bf16.msra.mxu0 0
        %1694 = vmatprep.subr.bf16.mxu0 0
        %1695 = vmatpush1.bf16.msra.mxu0 0
        %1696 = vmatprep.mubr.bf16.mxu0 0
        %1697 = vmatmul.mubr.bf16.gmra.mrb[0].mxu0 %v1662
        %v1698 = vpop.f32.mrb[0].mxu0
        %v1699 = vadd.f32 0.0, %v1698
        %v1700 = vpop.f32.mrb[0].mxu0
        %v1701 = vpop.f32.mrb[0].mxu0
        %v1702 = vpop.f32.mrb[0].mxu0
        %1703 = vdwg.mxu0
        %v1708 = vunpack.c.l.b16 %v1637
        %v1709 = vunpack.c.l.b16 %v1638
        %v1710 = vunpack.c.l.b16 %v1639
        %v1711 = vunpack.c.l.b16 %v1640
        %v1712 = vpack.c.b16 %v1709, %v1708
        %v1713 = vpack.c.b16 %v1711, %v1710
        %v1717 = vsel %vm1186, %v1630, 0
        %1719 = vmatprep.subr.bf16.mxu0 0
        %1720 = vmatpush1.bf16.msra.mxu0 %v1712
        %1721 = vmatprep.subr.bf16.mxu0 0
        %1722 = vmatpush1.bf16.msra.mxu0 %v1713
        %1723 = vmatprep.subr.bf16.mxu0 0
        %1724 = vmatpush1.bf16.msra.mxu0 0
        %1725 = vmatprep.subr.bf16.mxu0 0
        %1726 = vmatpush1.bf16.msra.mxu0 0
        %1727 = vmatprep.subr.bf16.mxu0 0
        %1728 = vmatpush1.bf16.msra.mxu0 0
        %1729 = vmatprep.subr.bf16.mxu0 0
        %1730 = vmatpush1.bf16.msra.mxu0 0
        %1731 = vmatprep.subr.bf16.mxu0 0
        %1732 = vmatpush1.bf16.msra.mxu0 0
        %1733 = vmatprep.subr.bf16.mxu0 0
        %1734 = vmatpush1.bf16.msra.mxu0 0
        %1735 = vmatprep.subr.bf16.mxu0 0
        %1736 = vmatpush1.bf16.msra.mxu0 0
        %1737 = vmatprep.subr.bf16.mxu0 0
        %1738 = vmatpush1.bf16.msra.mxu0 0
        %1739 = vmatprep.subr.bf16.mxu0 0
        %1740 = vmatpush1.bf16.msra.mxu0 0
        %1741 = vmatprep.subr.bf16.mxu0 0
        %1742 = vmatpush1.bf16.msra.mxu0 0
        %1743 = vmatprep.subr.bf16.mxu0 0
        %1744 = vmatpush1.bf16.msra.mxu0 0
        %1745 = vmatprep.subr.bf16.mxu0 0
        %1746 = vmatpush1.bf16.msra.mxu0 0
        %1747 = vmatprep.subr.bf16.mxu0 0
        %1748 = vmatpush1.bf16.msra.mxu0 0
        %1749 = vmatprep.subr.bf16.mxu0 0
        %1750 = vmatpush1.bf16.msra.mxu0 0
        %1751 = vmatprep.mubr.bf16.mxu0 0
        %1752 = vmatmul.mubr.bf16.gmra.mrb[0].mxu0 %v1717
        %v1753 = vpop.f32.mrb[0].mxu0
        %v1754 = vadd.f32 0.0, %v1753
        %v1755 = vpop.f32.mrb[0].mxu0
        %v1756 = vpop.f32.mrb[0].mxu0
        %v1757 = vpop.f32.mrb[0].mxu0
        %1758 = vdwg.mxu0
        %v1763 = vunpack.c.l.b16 %v1641
        %v1764 = vunpack.c.l.b16 %v1642
        %v1765 = vunpack.c.l.b16 %v1643
        %v1766 = vunpack.c.l.b16 %v1644
        %v1767 = vpack.c.b16 %v1764, %v1763
        %v1768 = vpack.c.b16 %v1766, %v1765
        %v1772 = vsel %vm1186, %v1631, 0
        %1774 = vmatprep.subr.bf16.mxu0 0
        %1775 = vmatpush1.bf16.msra.mxu0 %v1767
        %1776 = vmatprep.subr.bf16.mxu0 0
        %1777 = vmatpush1.bf16.msra.mxu0 %v1768
        %1778 = vmatprep.subr.bf16.mxu0 0
        %1779 = vmatpush1.bf16.msra.mxu0 0
        %1780 = vmatprep.subr.bf16.mxu0 0
        %1781 = vmatpush1.bf16.msra.mxu0 0
        %1782 = vmatprep.subr.bf16.mxu0 0
        %1783 = vmatpush1.bf16.msra.mxu0 0
        %1784 = vmatprep.subr.bf16.mxu0 0
        %1785 = vmatpush1.bf16.msra.mxu0 0
        %1786 = vmatprep.subr.bf16.mxu0 0
        %1787 = vmatpush1.bf16.msra.mxu0 0
        %1788 = vmatprep.subr.bf16.mxu0 0
        %1789 = vmatpush1.bf16.msra.mxu0 0
        %1790 = vmatprep.subr.bf16.mxu0 0
        %1791 = vmatpush1.bf16.msra.mxu0 0
        %1792 = vmatprep.subr.bf16.mxu0 0
        %1793 = vmatpush1.bf16.msra.mxu0 0
        %1794 = vmatprep.subr.bf16.mxu0 0
        %1795 = vmatpush1.bf16.msra.mxu0 0
        %1796 = vmatprep.subr.bf16.mxu0 0
        %1797 = vmatpush1.bf16.msra.mxu0 0
        %1798 = vmatprep.subr.bf16.mxu0 0
        %1799 = vmatpush1.bf16.msra.mxu0 0
        %1800 = vmatprep.subr.bf16.mxu0 0
        %1801 = vmatpush1.bf16.msra.mxu0 0
        %1802 = vmatprep.subr.bf16.mxu0 0
        %1803 = vmatpush1.bf16.msra.mxu0 0
        %1804 = vmatprep.subr.bf16.mxu0 0
        %1805 = vmatpush1.bf16.msra.mxu0 0
        %1806 = vmatprep.mubr.bf16.mxu0 0
        %1807 = vmatmul.mubr.bf16.gmra.mrb[0].mxu0 %v1772
        %v1808 = vpop.f32.mrb[0].mxu0
        %v1809 = vadd.f32 0.0, %v1808
        %v1810 = vpop.f32.mrb[0].mxu0
        %v1811 = vpop.f32.mrb[0].mxu0
        %v1812 = vpop.f32.mrb[0].mxu0
        %1813 = vdwg.mxu0
        %v1818 = vunpack.c.l.b16 %v1645
        %v1819 = vunpack.c.l.b16 %v1646
        %v1820 = vunpack.c.l.b16 %v1647
        %v1821 = vunpack.c.l.b16 %v1648
        %v1822 = vpack.c.b16 %v1819, %v1818
        %v1823 = vpack.c.b16 %v1821, %v1820
        %v1827 = vsel %vm1186, %v1632, 0
        %1829 = vmatprep.subr.bf16.mxu0 0
        %1830 = vmatpush1.bf16.msra.mxu0 %v1822
        %1831 = vmatprep.subr.bf16.mxu0 0
        %1832 = vmatpush1.bf16.msra.mxu0 %v1823
        %1833 = vmatprep.subr.bf16.mxu0 0
        %1834 = vmatpush1.bf16.msra.mxu0 0
        %1835 = vmatprep.subr.bf16.mxu0 0
        %1836 = vmatpush1.bf16.msra.mxu0 0
        %1837 = vmatprep.subr.bf16.mxu0 0
        %1838 = vmatpush1.bf16.msra.mxu0 0
        %1839 = vmatprep.subr.bf16.mxu0 0
        %1840 = vmatpush1.bf16.msra.mxu0 0
        %1841 = vmatprep.subr.bf16.mxu0 0
        %1842 = vmatpush1.bf16.msra.mxu0 0
        %1843 = vmatprep.subr.bf16.mxu0 0
        %1844 = vmatpush1.bf16.msra.mxu0 0
        %1845 = vmatprep.subr.bf16.mxu0 0
        %1846 = vmatpush1.bf16.msra.mxu0 0
        %1847 = vmatprep.subr.bf16.mxu0 0
        %1848 = vmatpush1.bf16.msra.mxu0 0
        %1849 = vmatprep.subr.bf16.mxu0 0
        %1850 = vmatpush1.bf16.msra.mxu0 0
        %1851 = vmatprep.subr.bf16.mxu0 0
        %1852 = vmatpush1.bf16.msra.mxu0 0
        %1853 = vmatprep.subr.bf16.mxu0 0
        %1854 = vmatpush1.bf16.msra.mxu0 0
        %1855 = vmatprep.subr.bf16.mxu0 0
        %1856 = vmatpush1.bf16.msra.mxu0 0
        %1857 = vmatprep.subr.bf16.mxu0 0
        %1858 = vmatpush1.bf16.msra.mxu0 0
        %1859 = vmatprep.subr.bf16.mxu0 0
        %1860 = vmatpush1.bf16.msra.mxu0 0
        %1861 = vmatprep.mubr.bf16.mxu0 0
        %1862 = vmatmul.mubr.bf16.gmra.mrb[0].mxu0 %v1827
        %v1863 = vpop.f32.mrb[0].mxu0
        %v1864 = vadd.f32 0.0, %v1863
        %v1865 = vpop.f32.mrb[0].mxu0
        %v1866 = vpop.f32.mrb[0].mxu0
        %v1867 = vpop.f32.mrb[0].mxu0
        %1868 = vdwg.mxu0
        %v1869 = vadd.f32 %v1699, %v1754
        %v1870 = vadd.f32 %v1869, %v1809
        %v1871 = vadd.f32 %v1870, %v1864
        %v1872 = vld [vmem:[%s4] sm:$0x1]
        %v1874 = vlaneseq
        %v1875 = vshrl.u32 %v1874, 7
        %v1876 = vsub.s32 0, %v1875
        %v1877 = vrot.slane %v1872, %v1876
        %v1879 = vadd.f32 %v1871, %v1877
        %v1880 = vadd.f32 %v419, %v1879
        %1881 = vadd.xlane.f32.xlu0 %v1880
        %v1882 = vpop.xlane.xlu0 %1881
        %v1883 = vmul.f32 %v1882, %v410
        %v1884 = vsub.f32 %v1880, %v1883
        %v1885 = vmul.f32 %v1884, %v1884
        %1886 = vadd.xlane.f32.xlu0 %v1885
        %v1887 = vpop.xlane.xlu0 %1886
        %v1888 = vmul.f32 %v1887, %v410
        %v1889 = vadd.f32 %v1888, 1e-06
        %v1890 = vrsqrt.pop %v1889
        %v1891 = vmul.f32 %v1884, %v1890
        %v1892 = vpack.c.bf16 %v1891, %v1891
        %v1893 = vld [vmem:[#allocation8] sm:$0xff]
        %v1894 = vld [vmem:[#allocation8 + $0x8] sm:$0xff]
        %v1895 = vld [vmem:[#allocation8 + $0x10] sm:$0xff]
        %v1896 = vld [vmem:[#allocation8 + $0x18] sm:$0xff]
        %v1897 = vld [vmem:[#allocation8 + $0x20] sm:$0xff]
        %v1898 = vld [vmem:[#allocation8 + $0x28] sm:$0xff]
        %v1899 = vld [vmem:[#allocation8 + $0x30] sm:$0xff]
        %v1900 = vld [vmem:[#allocation8 + $0x38] sm:$0xff]
        %v1901 = vld [vmem:[#allocation8 + $0x40] sm:$0xff]
        %v1902 = vld [vmem:[#allocation8 + $0x48] sm:$0xff]
        %v1903 = vld [vmem:[#allocation8 + $0x50] sm:$0xff]
        %v1904 = vld [vmem:[#allocation8 + $0x58] sm:$0xff]
        %v1905 = vld [vmem:[#allocation8 + $0x60] sm:$0xff]
        %v1906 = vld [vmem:[#allocation8 + $0x68] sm:$0xff]
        %v1907 = vld [vmem:[#allocation8 + $0x70] sm:$0xff]
        %v1908 = vld [vmem:[#allocation8 + $0x78] sm:$0xff]
        %v1909 = vld [vmem:[#allocation8 + $0x80] sm:$0xff]
        %v1910 = vld [vmem:[#allocation8 + $0x88] sm:$0xff]
        %v1911 = vld [vmem:[#allocation8 + $0x90] sm:$0xff]
        %v1912 = vld [vmem:[#allocation8 + $0x98] sm:$0xff]
        %v1913 = vld [vmem:[#allocation8 + $0xa0] sm:$0xff]
        %v1914 = vld [vmem:[#allocation8 + $0xa8] sm:$0xff]
        %v1915 = vld [vmem:[#allocation8 + $0xb0] sm:$0xff]
        %v1916 = vld [vmem:[#allocation8 + $0xb8] sm:$0xff]
        %v1917 = vld [vmem:[#allocation8 + $0xc0] sm:$0xff]
        %v1918 = vld [vmem:[#allocation8 + $0xc8] sm:$0xff]
        %v1919 = vld [vmem:[#allocation8 + $0xd0] sm:$0xff]
        %v1920 = vld [vmem:[#allocation8 + $0xd8] sm:$0xff]
        %v1921 = vld [vmem:[#allocation8 + $0xe0] sm:$0xff]
        %v1922 = vld [vmem:[#allocation8 + $0xe8] sm:$0xff]
        %v1923 = vld [vmem:[#allocation8 + $0xf0] sm:$0xff]
        %v1924 = vld [vmem:[#allocation8 + $0xf8] sm:$0xff]
        %v1925 = vld [vmem:[%s6] sm:$0xf]
        %v1927 = vlaneseq
        %v1928 = vshrl.u32 %v1927, 7
        %v1929 = vsub.s32 0, %v1928
        %v1930 = vrot.slane %v1925, %v1929
        %v1931 = vlaneseq
        %v1932 = vshrl.u32 %v1931, 7
        %v1933 = vsub.s32 1, %v1932
        %v1934 = vrot.slane %v1925, %v1933
        %v1935 = vlaneseq
        %v1936 = vshrl.u32 %v1935, 7
        %v1937 = vsub.s32 2, %v1936
        %v1938 = vrot.slane %v1925, %v1937
        %v1939 = vlaneseq
        %v1940 = vshrl.u32 %v1939, 7
        %v1941 = vsub.s32 3, %v1940
        %v1942 = vrot.slane %v1925, %v1941
        %v1979 = vunpack.c.l.b16 %v1893
        %v1980 = vunpack.c.h.b16 %v1893
        %v1981 = vunpack.c.l.b16 %v1894
        %v1982 = vunpack.c.h.b16 %v1894
        %v1983 = vunpack.c.l.b16 %v1895
        %v1984 = vunpack.c.h.b16 %v1895
        %v1985 = vunpack.c.l.b16 %v1896
        %v1986 = vunpack.c.h.b16 %v1896
        %v1987 = vunpack.c.l.b16 %v1897
        %v1988 = vunpack.c.h.b16 %v1897
        %v1989 = vunpack.c.l.b16 %v1898
        %v1990 = vunpack.c.h.b16 %v1898
        %v1991 = vunpack.c.l.b16 %v1899
        %v1992 = vunpack.c.h.b16 %v1899
        %v1993 = vunpack.c.l.b16 %v1900
        %v1994 = vunpack.c.h.b16 %v1900
        %v1995 = vunpack.c.l.b16 %v1901
        %v1996 = vunpack.c.h.b16 %v1901
        %v1997 = vunpack.c.l.b16 %v1902
        %v1998 = vunpack.c.h.b16 %v1902
        %v1999 = vunpack.c.l.b16 %v1903
        %v2000 = vunpack.c.h.b16 %v1903
        %v2001 = vunpack.c.l.b16 %v1904
        %v2002 = vunpack.c.h.b16 %v1904
        %v2003 = vunpack.c.l.b16 %v1905
        %v2004 = vunpack.c.h.b16 %v1905
        %v2005 = vunpack.c.l.b16 %v1906
        %v2006 = vunpack.c.h.b16 %v1906
        %v2007 = vunpack.c.l.b16 %v1907
        %v2008 = vunpack.c.h.b16 %v1907
        %v2009 = vunpack.c.l.b16 %v1908
        %v2010 = vunpack.c.h.b16 %v1908
        %v2011 = vunpack.c.l.b16 %v1909
        %v2012 = vunpack.c.h.b16 %v1909
        %v2013 = vunpack.c.l.b16 %v1910
        %v2014 = vunpack.c.h.b16 %v1910
        %v2015 = vunpack.c.l.b16 %v1911
        %v2016 = vunpack.c.h.b16 %v1911
        %v2017 = vunpack.c.l.b16 %v1912
        %v2018 = vunpack.c.h.b16 %v1912
        %v2019 = vunpack.c.l.b16 %v1913
        %v2020 = vunpack.c.h.b16 %v1913
        %v2021 = vunpack.c.l.b16 %v1914
        %v2022 = vunpack.c.h.b16 %v1914
        %v2023 = vunpack.c.l.b16 %v1915
        %v2024 = vunpack.c.h.b16 %v1915
        %v2025 = vunpack.c.l.b16 %v1916
        %v2026 = vunpack.c.h.b16 %v1916
        %v2027 = vunpack.c.l.b16 %v1917
        %v2028 = vunpack.c.h.b16 %v1917
        %v2029 = vunpack.c.l.b16 %v1918
        %v2030 = vunpack.c.h.b16 %v1918
        %v2031 = vunpack.c.l.b16 %v1919
        %v2032 = vunpack.c.h.b16 %v1919
        %v2033 = vunpack.c.l.b16 %v1920
        %v2034 = vunpack.c.h.b16 %v1920
        %v2035 = vunpack.c.l.b16 %v1921
        %v2036 = vunpack.c.h.b16 %v1921
        %v2037 = vunpack.c.l.b16 %v1922
        %v2038 = vunpack.c.h.b16 %v1922
        %v2039 = vunpack.c.l.b16 %v1923
        %v2040 = vunpack.c.h.b16 %v1923
        %v2041 = vunpack.c.l.b16 %v1924
        %v2042 = vunpack.c.h.b16 %v1924
        %v2043 = vpack.c.b16 %v1983, %v1979
        %v2044 = vpack.c.b16 %v1984, %v1980
        %v2045 = vpack.c.b16 %v1985, %v1981
        %v2046 = vpack.c.b16 %v1986, %v1982
        %v2047 = vpack.c.b16 %v1991, %v1987
        %v2048 = vpack.c.b16 %v1992, %v1988
        %v2049 = vpack.c.b16 %v1993, %v1989
        %v2050 = vpack.c.b16 %v1994, %v1990
        %v2051 = vpack.c.b16 %v1999, %v1995
        %v2052 = vpack.c.b16 %v2000, %v1996
        %v2053 = vpack.c.b16 %v2001, %v1997
        %v2054 = vpack.c.b16 %v2002, %v1998
        %v2055 = vpack.c.b16 %v2007, %v2003
        %v2056 = vpack.c.b16 %v2008, %v2004
        %v2057 = vpack.c.b16 %v2009, %v2005
        %v2058 = vpack.c.b16 %v2010, %v2006
        %v2059 = vpack.c.b16 %v2015, %v2011
        %v2060 = vpack.c.b16 %v2016, %v2012
        %v2061 = vpack.c.b16 %v2017, %v2013
        %v2062 = vpack.c.b16 %v2018, %v2014
        %v2063 = vpack.c.b16 %v2023, %v2019
        %v2064 = vpack.c.b16 %v2024, %v2020
        %v2065 = vpack.c.b16 %v2025, %v2021
        %v2066 = vpack.c.b16 %v2026, %v2022
        %v2067 = vpack.c.b16 %v2031, %v2027
        %v2068 = vpack.c.b16 %v2032, %v2028
        %v2069 = vpack.c.b16 %v2033, %v2029
        %v2070 = vpack.c.b16 %v2034, %v2030
        %v2071 = vpack.c.b16 %v2039, %v2035
        %v2072 = vpack.c.b16 %v2040, %v2036
        %v2073 = vpack.c.b16 %v2041, %v2037
        %v2074 = vpack.c.b16 %v2042, %v2038
        %2107 = vmatprep.subr.bf16.mxu0 %v2044
        %2108 = vmatpush1.bf16.msra.mxu0 %v2043
        %2109 = vmatprep.subr.bf16.mxu0 %v2048
        %2110 = vmatpush1.bf16.msra.mxu0 %v2047
        %2111 = vmatprep.subr.bf16.mxu0 %v2052
        %2112 = vmatpush1.bf16.msra.mxu0 %v2051
        %2113 = vmatprep.subr.bf16.mxu0 %v2056
        %2114 = vmatpush1.bf16.msra.mxu0 %v2055
        %2115 = vmatprep.subr.bf16.mxu0 %v2060
        %2116 = vmatpush1.bf16.msra.mxu0 %v2059
        %2117 = vmatprep.subr.bf16.mxu0 %v2064
        %2118 = vmatpush1.bf16.msra.mxu0 %v2063
        %2119 = vmatprep.subr.bf16.mxu0 %v2068
        %2120 = vmatpush1.bf16.msra.mxu0 %v2067
        %2121 = vmatprep.subr.bf16.mxu0 %v2072
        %2122 = vmatpush1.bf16.msra.mxu0 %v2071
        %2123 = vmatprep.subr.bf16.mxu0 0
        %2124 = vmatpush1.bf16.msra.mxu0 0
        %2125 = vmatprep.subr.bf16.mxu0 0
        %2126 = vmatpush1.bf16.msra.mxu0 0
        %2127 = vmatprep.subr.bf16.mxu0 0
        %2128 = vmatpush1.bf16.msra.mxu0 0
        %2129 = vmatprep.subr.bf16.mxu0 0
        %2130 = vmatpush1.bf16.msra.mxu0 0
        %2131 = vmatprep.subr.bf16.mxu0 0
        %2132 = vmatpush1.bf16.msra.mxu0 0
        %2133 = vmatprep.subr.bf16.mxu0 0
        %2134 = vmatpush1.bf16.msra.mxu0 0
        %2135 = vmatprep.subr.bf16.mxu0 0
        %2136 = vmatpush1.bf16.msra.mxu0 0
        %2137 = vmatprep.subr.bf16.mxu0 0
        %2138 = vmatpush1.bf16.msra.mxu0 0
        %2139 = vmatprep.mubr.bf16.mxu0 0
        %2140 = vmatmul.mubr.bf16.gmra.mrb[0].mxu0 %v1892
        %v2141 = vpop.f32.mrb[0].mxu0
        %v2142 = vadd.f32 %v1930, %v2141
        %v2143 = vpop.f32.mrb[0].mxu0
        %v2144 = vadd.f32 %v1934, %v2143
        %v2145 = vpop.f32.mrb[0].mxu0
        %v2146 = vpop.f32.mrb[0].mxu0
        %2147 = vdwg.mxu0
        %2148 = vmatprep.subr.bf16.mxu0 %v2046
        %2149 = vmatpush1.bf16.msra.mxu0 %v2045
        %2150 = vmatprep.subr.bf16.mxu0 %v2050
        %2151 = vmatpush1.bf16.msra.mxu0 %v2049
        %2152 = vmatprep.subr.bf16.mxu0 %v2054
        %2153 = vmatpush1.bf16.msra.mxu0 %v2053
        %2154 = vmatprep.subr.bf16.mxu0 %v2058
        %2155 = vmatpush1.bf16.msra.mxu0 %v2057
        %2156 = vmatprep.subr.bf16.mxu0 %v2062
        %2157 = vmatpush1.bf16.msra.mxu0 %v2061
        %2158 = vmatprep.subr.bf16.mxu0 %v2066
        %2159 = vmatpush1.bf16.msra.mxu0 %v2065
        %2160 = vmatprep.subr.bf16.mxu0 %v2070
        %2161 = vmatpush1.bf16.msra.mxu0 %v2069
        %2162 = vmatprep.subr.bf16.mxu0 %v2074
        %2163 = vmatpush1.bf16.msra.mxu0 %v2073
        %2164 = vmatprep.subr.bf16.mxu0 0
        %2165 = vmatpush1.bf16.msra.mxu0 0
        %2166 = vmatprep.subr.bf16.mxu0 0
        %2167 = vmatpush1.bf16.msra.mxu0 0
        %2168 = vmatprep.subr.bf16.mxu0 0
        %2169 = vmatpush1.bf16.msra.mxu0 0
        %2170 = vmatprep.subr.bf16.mxu0 0
        %2171 = vmatpush1.bf16.msra.mxu0 0
        %2172 = vmatprep.subr.bf16.mxu0 0
        %2173 = vmatpush1.bf16.msra.mxu0 0
        %2174 = vmatprep.subr.bf16.mxu0 0
        %2175 = vmatpush1.bf16.msra.mxu0 0
        %2176 = vmatprep.subr.bf16.mxu0 0
        %2177 = vmatpush1.bf16.msra.mxu0 0
        %2178 = vmatprep.subr.bf16.mxu0 0
        %2179 = vmatpush1.bf16.msra.mxu0 0
        %2180 = vmatprep.mubr.bf16.mxu0 0
        %2181 = vmatmul.mubr.bf16.gmra.mrb[0].mxu0 %v1892
        %v2182 = vpop.f32.mrb[0].mxu0
        %v2183 = vadd.f32 %v1938, %v2182
        %v2184 = vpop.f32.mrb[0].mxu0
        %v2185 = vadd.f32 %v1942, %v2184
        %v2186 = vpop.f32.mrb[0].mxu0
        %v2187 = vpop.f32.mrb[0].mxu0
        %2188 = vdwg.mxu0
        %v2189 = vmul.f32 %v2142, 0.5
        %v2190 = vmul.f32 %v2144, 0.5
        %v2191 = vmul.f32 %v2183, 0.5
        %v2192 = vmul.f32 %v2185, 0.5
        %v2193 = vmul.f32 %v2142, 0.70710677
        %v2194 = vmul.f32 %v2144, 0.70710677
        %v2195 = vmul.f32 %v2183, 0.70710677
        %v2196 = vmul.f32 %v2185, 0.70710677
        %v2197 = vand.u32 2147483647, %v2193
        %v2198 = vand.u32 2147483647, %v2194
        %v2199 = vand.u32 2147483647, %v2195
        %v2200 = vand.u32 2147483647, %v2196
        %v2201 = vmul.f32 %v2197, 0.3275911
        %v2202 = vmul.f32 %v2198, 0.3275911
        %v2203 = vmul.f32 %v2199, 0.3275911
        %v2204 = vmul.f32 %v2200, 0.3275911
        %v2205 = vadd.f32 %v2201, 1.0
        %v2206 = vadd.f32 %v2202, 1.0
        %v2207 = vadd.f32 %v2203, 1.0
        %v2208 = vadd.f32 %v2204, 1.0
        %v2209 = vrcp.pop %v2205
        %v2210 = vmul.f32 1.0, %v2209
        %v2211 = vrcp.pop %v2206
        %v2212 = vmul.f32 1.0, %v2211
        %v2213 = vrcp.pop %v2207
        %v2214 = vmul.f32 1.0, %v2213
        %v2215 = vrcp.pop %v2208
        %v2216 = vmul.f32 1.0, %v2215
        %v2217 = vmul.f32 %v2210, 1.0614054
        %v2218 = vmul.f32 %v2212, 1.0614054
        %v2219 = vmul.f32 %v2214, 1.0614054
        %v2220 = vmul.f32 %v2216, 1.0614054
        %v2221 = vadd.f32 %v2217, -1.4531521
        %v2222 = vadd.f32 %v2218, -1.4531521
        %v2223 = vadd.f32 %v2219, -1.4531521
        %v2224 = vadd.f32 %v2220, -1.4531521
        %v2225 = vmul.f32 %v2221, %v2210
        %v2226 = vmul.f32 %v2222, %v2212
        %v2227 = vmul.f32 %v2223, %v2214
        %v2228 = vmul.f32 %v2224, %v2216
        %v2229 = vadd.f32 %v2225, 1.4214138
        %v2230 = vadd.f32 %v2226, 1.4214138
        %v2231 = vadd.f32 %v2227, 1.4214138
        %v2232 = vadd.f32 %v2228, 1.4214138
        %v2233 = vmul.f32 %v2229, %v2210
        %v2234 = vmul.f32 %v2230, %v2212
        %v2235 = vmul.f32 %v2231, %v2214
        %v2236 = vmul.f32 %v2232, %v2216
        %v2237 = vadd.f32 %v2233, -0.28449672
        %v2238 = vadd.f32 %v2234, -0.28449672
        %v2239 = vadd.f32 %v2235, -0.28449672
        %v2240 = vadd.f32 %v2236, -0.28449672
        %v2241 = vmul.f32 %v2237, %v2210
        %v2242 = vmul.f32 %v2238, %v2212
        %v2243 = vmul.f32 %v2239, %v2214
        %v2244 = vmul.f32 %v2240, %v2216
        %v2245 = vadd.f32 %v2241, 0.2548296
        %v2246 = vadd.f32 %v2242, 0.2548296
        %v2247 = vadd.f32 %v2243, 0.2548296
        %v2248 = vadd.f32 %v2244, 0.2548296
        %v2249 = vmul.f32 %v2245, %v2210
        %v2250 = vmul.f32 %v2246, %v2212
        %v2251 = vmul.f32 %v2247, %v2214
        %v2252 = vmul.f32 %v2248, %v2216
        %v2253 = vsub.f32 0.0, %v2197
        %v2254 = vsub.f32 0.0, %v2198
        %v2255 = vsub.f32 0.0, %v2199
        %v2256 = vsub.f32 0.0, %v2200
        %v2257 = vmul.f32 %v2253, %v2197
        %v2258 = vmul.f32 %v2254, %v2198
        %v2259 = vmul.f32 %v2255, %v2199
        %v2260 = vmul.f32 %v2256, %v2200
        %v2261 = vmul.f32 %v2257, 1.442695
        %v2262 = vpow.pop %v2261
        %v2263 = vmul.f32 %v2258, 1.442695
        %v2264 = vpow.pop %v2263
        %v2265 = vmul.f32 %v2259, 1.442695
        %v2266 = vpow.pop %v2265
        %v2267 = vmul.f32 %v2260, 1.442695
        %v2268 = vpow.pop %v2267
        %v2269 = vmul.f32 %v2249, %v2262
        %v2270 = vmul.f32 %v2250, %v2264
        %v2271 = vmul.f32 %v2251, %v2266
        %v2272 = vmul.f32 %v2252, %v2268
        %v2273 = vsub.f32 1.0, %v2269
        %v2274 = vsub.f32 1.0, %v2270
        %v2275 = vsub.f32 1.0, %v2271
        %v2276 = vsub.f32 1.0, %v2272
        %vm2277 = vcmp.ge.f32.partialorder %v2193, 0.0
        %vm2278 = vcmp.ge.f32.partialorder %v2194, 0.0
        %vm2279 = vcmp.ge.f32.partialorder %v2195, 0.0
        %vm2280 = vcmp.ge.f32.partialorder %v2196, 0.0
        %v2281 = vsub.f32 0.0, %v2273
        %v2282 = vsub.f32 0.0, %v2274
        %v2283 = vsub.f32 0.0, %v2275
        %v2284 = vsub.f32 0.0, %v2276
        %v2285 = vsel %vm2277, %v2273, %v2281
        %v2286 = vsel %vm2278, %v2274, %v2282
        %v2287 = vsel %vm2279, %v2275, %v2283
        %v2288 = vsel %vm2280, %v2276, %v2284
        %v2289 = vadd.f32 %v2285, 1.0
        %v2290 = vadd.f32 %v2286, 1.0
        %v2291 = vadd.f32 %v2287, 1.0
        %v2292 = vadd.f32 %v2288, 1.0
        %v2293 = vmul.f32 %v2189, %v2289
        %v2294 = vmul.f32 %v2190, %v2290
        %v2295 = vmul.f32 %v2191, %v2291
        %v2296 = vmul.f32 %v2192, %v2292
        %v2297 = vpack.c.bf16 %v2293, %v2293
        %v2298 = vpack.c.bf16 %v2294, %v2294
        %v2299 = vpack.c.bf16 %v2295, %v2295
        %v2300 = vpack.c.bf16 %v2296, %v2296
        %v2301 = vld [vmem:[#allocation10] sm:$0xf]
        %v2302 = vld [vmem:[#allocation10 + $0x4] sm:$0xf]
        %v2303 = vld [vmem:[#allocation10 + $0x8] sm:$0xf]
        %v2304 = vld [vmem:[#allocation10 + $0xc] sm:$0xf]
        %v2305 = vld [vmem:[#allocation10 + $0x10] sm:$0xf]
        %v2306 = vld [vmem:[#allocation10 + $0x14] sm:$0xf]
        %v2307 = vld [vmem:[#allocation10 + $0x18] sm:$0xf]
        %v2308 = vld [vmem:[#allocation10 + $0x1c] sm:$0xf]
        %v2309 = vld [vmem:[#allocation10 + $0x20] sm:$0xf]
        %v2310 = vld [vmem:[#allocation10 + $0x24] sm:$0xf]
        %v2311 = vld [vmem:[#allocation10 + $0x28] sm:$0xf]
        %v2312 = vld [vmem:[#allocation10 + $0x2c] sm:$0xf]
        %v2313 = vld [vmem:[#allocation10 + $0x30] sm:$0xf]
        %v2314 = vld [vmem:[#allocation10 + $0x34] sm:$0xf]
        %v2315 = vld [vmem:[#allocation10 + $0x38] sm:$0xf]
        %v2316 = vld [vmem:[#allocation10 + $0x3c] sm:$0xf]
        %v2317 = vld [vmem:[#allocation10 + $0x40] sm:$0xf]
        %v2318 = vld [vmem:[#allocation10 + $0x44] sm:$0xf]
        %v2319 = vld [vmem:[#allocation10 + $0x48] sm:$0xf]
        %v2320 = vld [vmem:[#allocation10 + $0x4c] sm:$0xf]
        %v2321 = vld [vmem:[#allocation10 + $0x50] sm:$0xf]
        %v2322 = vld [vmem:[#allocation10 + $0x54] sm:$0xf]
        %v2323 = vld [vmem:[#allocation10 + $0x58] sm:$0xf]
        %v2324 = vld [vmem:[#allocation10 + $0x5c] sm:$0xf]
        %v2325 = vld [vmem:[#allocation10 + $0x60] sm:$0xf]
        %v2326 = vld [vmem:[#allocation10 + $0x64] sm:$0xf]
        %v2327 = vld [vmem:[#allocation10 + $0x68] sm:$0xf]
        %v2328 = vld [vmem:[#allocation10 + $0x6c] sm:$0xf]
        %v2329 = vld [vmem:[#allocation10 + $0x70] sm:$0xf]
        %v2330 = vld [vmem:[#allocation10 + $0x74] sm:$0xf]
        %v2331 = vld [vmem:[#allocation10 + $0x78] sm:$0xf]
        %v2332 = vld [vmem:[#allocation10 + $0x7c] sm:$0xf]
        %v2333 = vld [vmem:[#allocation10 + $0x80] sm:$0xf]
        %v2334 = vld [vmem:[#allocation10 + $0x84] sm:$0xf]
        %v2335 = vld [vmem:[#allocation10 + $0x88] sm:$0xf]
        %v2336 = vld [vmem:[#allocation10 + $0x8c] sm:$0xf]
        %v2337 = vld [vmem:[#allocation10 + $0x90] sm:$0xf]
        %v2338 = vld [vmem:[#allocation10 + $0x94] sm:$0xf]
        %v2339 = vld [vmem:[#allocation10 + $0x98] sm:$0xf]
        %v2340 = vld [vmem:[#allocation10 + $0x9c] sm:$0xf]
        %v2341 = vld [vmem:[#allocation10 + $0xa0] sm:$0xf]
        %v2342 = vld [vmem:[#allocation10 + $0xa4] sm:$0xf]
        %v2343 = vld [vmem:[#allocation10 + $0xa8] sm:$0xf]
        %v2344 = vld [vmem:[#allocation10 + $0xac] sm:$0xf]
        %v2345 = vld [vmem:[#allocation10 + $0xb0] sm:$0xf]
        %v2346 = vld [vmem:[#allocation10 + $0xb4] sm:$0xf]
        %v2347 = vld [vmem:[#allocation10 + $0xb8] sm:$0xf]
        %v2348 = vld [vmem:[#allocation10 + $0xbc] sm:$0xf]
        %v2349 = vld [vmem:[#allocation10 + $0xc0] sm:$0xf]
        %v2350 = vld [vmem:[#allocation10 + $0xc4] sm:$0xf]
        %v2351 = vld [vmem:[#allocation10 + $0xc8] sm:$0xf]
        %v2352 = vld [vmem:[#allocation10 + $0xcc] sm:$0xf]
        %v2353 = vld [vmem:[#allocation10 + $0xd0] sm:$0xf]
        %v2354 = vld [vmem:[#allocation10 + $0xd4] sm:$0xf]
        %v2355 = vld [vmem:[#allocation10 + $0xd8] sm:$0xf]
        %v2356 = vld [vmem:[#allocation10 + $0xdc] sm:$0xf]
        %v2357 = vld [vmem:[#allocation10 + $0xe0] sm:$0xf]
        %v2358 = vld [vmem:[#allocation10 + $0xe4] sm:$0xf]
        %v2359 = vld [vmem:[#allocation10 + $0xe8] sm:$0xf]
        %v2360 = vld [vmem:[#allocation10 + $0xec] sm:$0xf]
        %v2361 = vld [vmem:[#allocation10 + $0xf0] sm:$0xf]
        %v2362 = vld [vmem:[#allocation10 + $0xf4] sm:$0xf]
        %v2363 = vld [vmem:[#allocation10 + $0xf8] sm:$0xf]
        %v2364 = vld [vmem:[#allocation10 + $0xfc] sm:$0xf]
        %v2365 = vld [vmem:[%s8] sm:$0x1]
        %v2367 = vlaneseq
        %v2368 = vshrl.u32 %v2367, 7
        %v2369 = vsub.s32 0, %v2368
        %v2370 = vrot.slane %v2365, %v2369
        %v2436 = vunpack.c.l.b16 %v2301
        %v2437 = vunpack.c.l.b16 %v2302
        %v2438 = vunpack.c.l.b16 %v2303
        %v2439 = vunpack.c.l.b16 %v2304
        %v2440 = vunpack.c.l.b16 %v2305
        %v2441 = vunpack.c.l.b16 %v2306
        %v2442 = vunpack.c.l.b16 %v2307
        %v2443 = vunpack.c.l.b16 %v2308
        %v2444 = vunpack.c.l.b16 %v2309
        %v2445 = vunpack.c.l.b16 %v2310
        %v2446 = vunpack.c.l.b16 %v2311
        %v2447 = vunpack.c.l.b16 %v2312
        %v2448 = vunpack.c.l.b16 %v2313
        %v2449 = vunpack.c.l.b16 %v2314
        %v2450 = vunpack.c.l.b16 %v2315
        %v2451 = vunpack.c.l.b16 %v2316
        %v2452 = vunpack.c.l.b16 %v2317
        %v2453 = vunpack.c.l.b16 %v2318
        %v2454 = vunpack.c.l.b16 %v2319
        %v2455 = vunpack.c.l.b16 %v2320
        %v2456 = vunpack.c.l.b16 %v2321
        %v2457 = vunpack.c.l.b16 %v2322
        %v2458 = vunpack.c.l.b16 %v2323
        %v2459 = vunpack.c.l.b16 %v2324
        %v2460 = vunpack.c.l.b16 %v2325
        %v2461 = vunpack.c.l.b16 %v2326
        %v2462 = vunpack.c.l.b16 %v2327
        %v2463 = vunpack.c.l.b16 %v2328
        %v2464 = vunpack.c.l.b16 %v2329
        %v2465 = vunpack.c.l.b16 %v2330
        %v2466 = vunpack.c.l.b16 %v2331
        %v2467 = vunpack.c.l.b16 %v2332
        %v2468 = vunpack.c.l.b16 %v2333
        %v2469 = vunpack.c.l.b16 %v2334
        %v2470 = vunpack.c.l.b16 %v2335
        %v2471 = vunpack.c.l.b16 %v2336
        %v2472 = vunpack.c.l.b16 %v2337
        %v2473 = vunpack.c.l.b16 %v2338
        %v2474 = vunpack.c.l.b16 %v2339
        %v2475 = vunpack.c.l.b16 %v2340
        %v2476 = vunpack.c.l.b16 %v2341
        %v2477 = vunpack.c.l.b16 %v2342
        %v2478 = vunpack.c.l.b16 %v2343
        %v2479 = vunpack.c.l.b16 %v2344
        %v2480 = vunpack.c.l.b16 %v2345
        %v2481 = vunpack.c.l.b16 %v2346
        %v2482 = vunpack.c.l.b16 %v2347
        %v2483 = vunpack.c.l.b16 %v2348
        %v2484 = vunpack.c.l.b16 %v2349
        %v2485 = vunpack.c.l.b16 %v2350
        %v2486 = vunpack.c.l.b16 %v2351
        %v2487 = vunpack.c.l.b16 %v2352
        %v2488 = vunpack.c.l.b16 %v2353
        %v2489 = vunpack.c.l.b16 %v2354
        %v2490 = vunpack.c.l.b16 %v2355
        %v2491 = vunpack.c.l.b16 %v2356
        %v2492 = vunpack.c.l.b16 %v2357
        %v2493 = vunpack.c.l.b16 %v2358
        %v2494 = vunpack.c.l.b16 %v2359
        %v2495 = vunpack.c.l.b16 %v2360
        %v2496 = vunpack.c.l.b16 %v2361
        %v2497 = vunpack.c.l.b16 %v2362
        %v2498 = vunpack.c.l.b16 %v2363
        %v2499 = vunpack.c.l.b16 %v2364
        %v2500 = vpack.c.b16 %v2437, %v2436
        %v2501 = vpack.c.b16 %v2439, %v2438
        %v2502 = vpack.c.b16 %v2441, %v2440
        %v2503 = vpack.c.b16 %v2443, %v2442
        %v2504 = vpack.c.b16 %v2445, %v2444
        %v2505 = vpack.c.b16 %v2447, %v2446
        %v2506 = vpack.c.b16 %v2449, %v2448
        %v2507 = vpack.c.b16 %v2451, %v2450
        %v2508 = vpack.c.b16 %v2453, %v2452
        %v2509 = vpack.c.b16 %v2455, %v2454
        %v2510 = vpack.c.b16 %v2457, %v2456
        %v2511 = vpack.c.b16 %v2459, %v2458
        %v2512 = vpack.c.b16 %v2461, %v2460
        %v2513 = vpack.c.b16 %v2463, %v2462
        %v2514 = vpack.c.b16 %v2465, %v2464
        %v2515 = vpack.c.b16 %v2467, %v2466
        %v2516 = vpack.c.b16 %v2469, %v2468
        %v2517 = vpack.c.b16 %v2471, %v2470
        %v2518 = vpack.c.b16 %v2473, %v2472
        %v2519 = vpack.c.b16 %v2475, %v2474
        %v2520 = vpack.c.b16 %v2477, %v2476
        %v2521 = vpack.c.b16 %v2479, %v2478
        %v2522 = vpack.c.b16 %v2481, %v2480
        %v2523 = vpack.c.b16 %v2483, %v2482
        %v2524 = vpack.c.b16 %v2485, %v2484
        %v2525 = vpack.c.b16 %v2487, %v2486
        %v2526 = vpack.c.b16 %v2489, %v2488
        %v2527 = vpack.c.b16 %v2491, %v2490
        %v2528 = vpack.c.b16 %v2493, %v2492
        %v2529 = vpack.c.b16 %v2495, %v2494
        %v2530 = vpack.c.b16 %v2497, %v2496
        %v2531 = vpack.c.b16 %v2499, %v2498
        %2564 = vmatprep.subr.bf16.mxu0 0
        %2565 = vmatpush1.bf16.msra.mxu0 %v2500
        %2566 = vmatprep.subr.bf16.mxu0 0
        %2567 = vmatpush1.bf16.msra.mxu0 %v2501
        %2568 = vmatprep.subr.bf16.mxu0 0
        %2569 = vmatpush1.bf16.msra.mxu0 %v2502
        %2570 = vmatprep.subr.bf16.mxu0 0
        %2571 = vmatpush1.bf16.msra.mxu0 %v2503
        %2572 = vmatprep.subr.bf16.mxu0 0
        %2573 = vmatpush1.bf16.msra.mxu0 %v2504
        %2574 = vmatprep.subr.bf16.mxu0 0
        %2575 = vmatpush1.bf16.msra.mxu0 %v2505
        %2576 = vmatprep.subr.bf16.mxu0 0
        %2577 = vmatpush1.bf16.msra.mxu0 %v2506
        %2578 = vmatprep.subr.bf16.mxu0 0
        %2579 = vmatpush1.bf16.msra.mxu0 %v2507
        %2580 = vmatprep.subr.bf16.mxu0 0
        %2581 = vmatpush1.bf16.msra.mxu0 %v2508
        %2582 = vmatprep.subr.bf16.mxu0 0
        %2583 = vmatpush1.bf16.msra.mxu0 %v2509
        %2584 = vmatprep.subr.bf16.mxu0 0
        %2585 = vmatpush1.bf16.msra.mxu0 %v2510
        %2586 = vmatprep.subr.bf16.mxu0 0
        %2587 = vmatpush1.bf16.msra.mxu0 %v2511
        %2588 = vmatprep.subr.bf16.mxu0 0
        %2589 = vmatpush1.bf16.msra.mxu0 %v2512
        %2590 = vmatprep.subr.bf16.mxu0 0
        %2591 = vmatpush1.bf16.msra.mxu0 %v2513
        %2592 = vmatprep.subr.bf16.mxu0 0
        %2593 = vmatpush1.bf16.msra.mxu0 %v2514
        %2594 = vmatprep.subr.bf16.mxu0 0
        %2595 = vmatpush1.bf16.msra.mxu0 %v2515
        %2596 = vmatprep.mubr.bf16.mxu0 %v2298
        %2597 = vmatmul.mubr.bf16.gmra.mrb[0].mxu0 %v2297
        %v2598 = vpop.f32.mrb[0].mxu0
        %v2599 = vadd.f32 %v2370, %v2598
        %v2600 = vpop.f32.mrb[0].mxu0
        %v2601 = vpop.f32.mrb[0].mxu0
        %v2602 = vpop.f32.mrb[0].mxu0
        %2603 = vdwg.mxu0
        %2604 = vmatprep.subr.bf16.mxu0 0
        %2605 = vmatpush1.bf16.msra.mxu0 %v2516
        %2606 = vmatprep.subr.bf16.mxu0 0
        %2607 = vmatpush1.bf16.msra.mxu0 %v2517
        %2608 = vmatprep.subr.bf16.mxu0 0
        %2609 = vmatpush1.bf16.msra.mxu0 %v2518
        %2610 = vmatprep.subr.bf16.mxu0 0
        %2611 = vmatpush1.bf16.msra.mxu0 %v2519
        %2612 = vmatprep.subr.bf16.mxu0 0
        %2613 = vmatpush1.bf16.msra.mxu0 %v2520
        %2614 = vmatprep.subr.bf16.mxu0 0
        %2615 = vmatpush1.bf16.msra.mxu0 %v2521
        %2616 = vmatprep.subr.bf16.mxu0 0
        %2617 = vmatpush1.bf16.msra.mxu0 %v2522
        %2618 = vmatprep.subr.bf16.mxu0 0
        %2619 = vmatpush1.bf16.msra.mxu0 %v2523
        %2620 = vmatprep.subr.bf16.mxu0 0
        %2621 = vmatpush1.bf16.msra.mxu0 %v2524
        %2622 = vmatprep.subr.bf16.mxu0 0
        %2623 = vmatpush1.bf16.msra.mxu0 %v2525
        %2624 = vmatprep.subr.bf16.mxu0 0
        %2625 = vmatpush1.bf16.msra.mxu0 %v2526
        %2626 = vmatprep.subr.bf16.mxu0 0
        %2627 = vmatpush1.bf16.msra.mxu0 %v2527
        %2628 = vmatprep.subr.bf16.mxu0 0
        %2629 = vmatpush1.bf16.msra.mxu0 %v2528
        %2630 = vmatprep.subr.bf16.mxu0 0
        %2631 = vmatpush1.bf16.msra.mxu0 %v2529
        %2632 = vmatprep.subr.bf16.mxu0 0
        %2633 = vmatpush1.bf16.msra.mxu0 %v2530
        %2634 = vmatprep.subr.bf16.mxu0 0
        %2635 = vmatpush1.bf16.msra.mxu0 %v2531
        %2636 = vmatprep.mubr.bf16.mxu0 %v2300
        %2637 = vmatmul.mubr.bf16.gmra.mrb[0].mxu0 %v2299
        %v2638 = vpop.f32.mrb[0].mxu0
        %v2639 = vadd.f32 %v2599, %v2638
        %v2640 = vpop.f32.mrb[0].mxu0
        %v2641 = vpop.f32.mrb[0].mxu0
        %v2642 = vpop.f32.mrb[0].mxu0
        %2643 = vdwg.mxu0
        %v2644 = vadd.f32 %v1880, %v2639
        %2645 = vst [vmem:[%s405] sm:$0xff] %v2644
        %s2646 = sand.u32 %s230, 1
        %s2647 = scalar_lea.sflag [#allocation4], %s2646
        %s2648 = sand.u32 %s230, 1
        %s2649 = smul.addr %s2648, 8
        %s2650 = scalar_lea.vmem [#allocation11], %s2649
        // Predicated region
        $region77: #{tpu_custom_call.1} parent=55 // pred_check
          %p2651 = pneg %p240
        $region78: #{tpu_custom_call.1} parent=55 // pred_check_branch
          %2653 = sbr.rel (%p2651) target = $region80
        $region79: #{tpu_custom_call.1} parent=55 // pred_region
          %s2655 = ssub.s32 128, 128
          %2656 = vsyncadd %s2647, %s2655
          %s2657 = smul.addr %s28, 128
          %s2658 = scalar_lea.hbm %s9, %s2657
          %s2660 = sshll.u32 %s2650, 4
          %s2661 = int_to_ptr.vmem [resolvable:$true] %s2660
          %2663 = dma.vmem_to_hbm [thread:$0]  %s2661, 128, %s2658, %s2647
        $region80: #{tpu_custom_call.1} parent=55 // pred_fallthru
          _
      $region56: #{tpu_custom_call.1} parent=5 // pred_fallthru
        _
      %p2664 = scmp.le.s32.totalorder 2, %s23
      // Predicated region
      $region81: #{tpu_custom_call.1} parent=5 // pred_check
        %p2665 = pneg %p2664
      $region82: #{tpu_custom_call.1} parent=5 // pred_check_branch
        %2667 = sbr.rel (%p2665) target = $region84
      $region83: #{tpu_custom_call.1} parent=5 // pred_region
        %s2668 = ssub.s32 %s23, 2
        // Predicated region
        $region85: #{tpu_custom_call.1} parent=83 // pred_check
          %p2669 = pneg %p246
        $region86: #{tpu_custom_call.1} parent=83 // pred_check_branch
          %2671 = sbr.rel (%p2669) target = $region88
        $region87: #{tpu_custom_call.1} parent=83 // pred_region
          %s2672 = sand.u32 %s231, 1
          %s2673 = scalar_lea.sflag [#allocation4], %s2672
          %s2674 = sand.u32 %s231, 1
          %s2675 = smul.addr %s2674, 8
          %s2676 = scalar_lea.vmem [#allocation11], %s2675
          %2677 = dma.done %s2673, 128
        $region88: #{tpu_custom_call.1} parent=83 // pred_fallthru
          _
      $region84: #{tpu_custom_call.1} parent=5 // pred_fallthru
        _
    $region6: #{tpu_custom_call.1} parent=1 // loop_footer
      %s27 = sadd.s32 1, %s23
    $region7: #{tpu_custom_call.1} parent=1 // loop_footer_branch
      %22 = sbr.rel target = $region3
    $region8: #{tpu_custom_call.1} parent=1 // loop_exit
      _
    %2678 = vsyncpa [#allocation3], 1
    %s2679 = scalar_lea.sflag [#allocation3], 1
    %2680 = vsyncpa %s2679, 1
    %2681 = vsyncpa [#allocation6], 1
    %2682 = vsyncpa [#allocation9], 1
    %2683 = vsyncpa [#allocation4], 1
    %s2684 = scalar_lea.sflag [#allocation4], 1
    %2685 = vsyncpa %s2684, 1

// kernel: tpu_custom_call.1
$region0: #{tpu_custom_call.1}
  #allocation0 [shape = 'u32[]', space=smem, size = 0x4, offset = 0x4, fixed_abs, tag = 'smem constant byte address 0x4 - core index']
  #allocation1 [shape = 'u32[144,128]{1,0:T(1,128)}', space=vmem, size = 0x12000, scoped, tag = 'internal scratch']
  %s0 = inlined_call_operand.hbm [shape: f32[2,8,128], index: 0, kind: input, shape index: {}]
  %s1 = inlined_call_operand.hbm [shape: bf16[128,384], index: 1, kind: input, shape index: {}]
  %s2 = inlined_call_operand.vmem [shape: f32[1,384], index: 2, kind: input, shape index: {}]
  %s3 = inlined_call_operand.hbm [shape: bf16[4,32,128], index: 3, kind: input, shape index: {}]
  %s4 = inlined_call_operand.vmem [shape: f32[1,128], index: 4, kind: input, shape index: {}]
  %s5 = inlined_call_operand.hbm [shape: bf16[128,512], index: 5, kind: input, shape index: {}]
  %s6 = inlined_call_operand.vmem [shape: f32[1,512], index: 6, kind: input, shape index: {}]
  %s7 = inlined_call_operand.hbm [shape: bf16[512,128], index: 7, kind: input, shape index: {}]
  %s8 = inlined_call_operand.vmem [shape: f32[1,128], index: 8, kind: input, shape index: {}]
  %s9 = inlined_call_operand.hbm [shape: f32[2,8,128], index: 9, kind: output, shape index: {}]
  %s10 = sld [smem:[#allocation0]]
  $region89: #{tpu_custom_call.1} parent=0
    _
  %s12 = ssub.s32 1, %s10
  %s13 = scalar_select 0, %s12, %s10
  $region1: #{tpu_custom_call.1} parent=0
    #allocation2 [shape = 'u8[8192]{0}', space=vmem, size = 0x2000, scoped, tag = 'input window, operand 0']
    #allocation3 [shape = 's32[2]{0}', space=sflag, size = 0x8, scoped, tag = 'scoped memory for tpu_custom_call.1']
    #allocation4 [shape = 's32[2]{0}', space=sflag, size = 0x8, scoped, tag = 'scoped memory for tpu_custom_call.1']
    #allocation5 [shape = 'u8[98304]{0}', space=vmem, size = 0x18000, scoped, tag = 'input window, operand 1, single buffered']
    #allocation6 [shape = 's32[1]{0}', space=sflag, size = 0x4, scoped, tag = 'scoped memory for tpu_custom_call.1']
    #allocation7 [shape = 'u8[32768]{0}', space=vmem, size = 0x8000, scoped, tag = 'input window, operand 3, single buffered']
    #allocation8 [shape = 'u8[131072]{0}', space=vmem, size = 0x20000, scoped, tag = 'input window, operand 5, single buffered']
    #allocation9 [shape = 's32[1]{0}', space=sflag, size = 0x4, scoped, tag = 'scoped memory for tpu_custom_call.1']
    #allocation10 [shape = 'u8[131072]{0}', space=vmem, size = 0x20000, scoped, tag = 'input window, operand 7, single buffered']
    #allocation11 [shape = 'u8[8192]{0}', space=vmem, size = 0x2000, scoped, tag = 'output window, operand 0']
    %14 = vsyncpa [#allocation3], 0
    %s15 = scalar_lea.sflag [#allocation3], 1
    %16 = vsyncpa %s15, 0
    %17 = vsyncpa [#allocation6], 0
    %18 = vsyncpa [#allocation9], 0
    %19 = vsyncpa [#allocation4], 0
    %s20 = scalar_lea.sflag [#allocation4], 1
    %21 = vsyncpa %s20, 0
    loop: start=0, step=1, limit=4
    $region2: #{tpu_custom_call.1} parent=1 // loop_pre_header
      _
    $region3: #{tpu_custom_call.1} parent=1 // loop_header
      %s23 = sphi 0, %s27
      %p24 = scmp.ge.s32.totalorder %s23, 4
      %s33 = sphi 0, %s35
      %s36 = sphi 0, %s33
      %s37 = sphi 0, %s36
      %s53 = sphi 0, %s37
      %s57 = sphi 0, %s57
      %s59 = sphi 0, %s57
      %s60 = sphi 0, %s59
      %s74 = sphi 0, %s60
      %s78 = sphi 0, %s78
      %s80 = sphi 0, %s78
      %s81 = sphi 0, %s80
      %s95 = sphi 0, %s81
      %s99 = sphi 0, %s99
      %s101 = sphi 0, %s99
      %s102 = sphi 0, %s101
      %s116 = sphi 0, %s102
      %s120 = sphi 0, %s120
      %s122 = sphi 0, %s120
      %s123 = sphi 0, %s122
      %s137 = sphi 0, %s123
      %s141 = sphi 0, %s141
      %s143 = sphi 0, %s141
      %s144 = sphi 0, %s143
      %s158 = sphi 0, %s144
      %s162 = sphi 0, %s162
      %s164 = sphi 0, %s162
      %s165 = sphi 0, %s164
      %s179 = sphi 0, %s165
      %s183 = sphi 0, %s183
      %s185 = sphi 0, %s183
      %s186 = sphi 0, %s185
      %s200 = sphi 0, %s186
      %s204 = sphi 0, %s204
      %s206 = sphi 0, %s204
      %s207 = sphi 0, %s206
      %s221 = sphi 0, %s207
      %s227 = sphi 0, %s229
      %s230 = sphi 0, %s227
      %s231 = sphi 0, %s230
      %s247 = sphi 0, %s231
    $region4: #{tpu_custom_call.1} parent=1 // loop_header_branch
      %26 = sbr.rel (%p24) target = $region8
    $region5: #{tpu_custom_call.1} parent=1 // loop_body
      %s28 = ssub.s32 %s23, 1
      %s29 = ssub.s32 %s23, 2
      %s30 = sadd.s32 %s23, 1
      %s31 = ssub.s32 %s23, %s30
      %p32 = scmp.eq.s32.totalorder %s31, 0
      %s34 = sadd.s32 %s33, 1
      %s35 = scalar_select %p32, %s33, %s34
      %p38 = pneg %p32
      %p39 = scmp.eq.s32.totalorder %s23, 1
      %p40 = por %p38, %p39
      %p41 = scmp.ne.s32.totalorder %s33, %s36
      %p42 = scmp.eq.s32.totalorder %s23, 0
      %p43 = por %p41, %p42
      %p44 = scmp.ne.s32.totalorder %s33, %s36
      %p45 = scmp.eq.s32.totalorder %s28, 1
      %p46 = por %p44, %p45
      %p47 = scmp.ne.s32.totalorder %s36, %s37
      %p48 = scmp.eq.s32.totalorder %s28, 0
      %p49 = por %p47, %p48
      %p50 = scmp.ne.s32.totalorder %s36, %s37
      %p51 = scmp.eq.s32.totalorder %s29, 1
      %p52 = por %p50, %p51
      %p54 = scmp.ne.s32.totalorder %s37, %s53
      %p55 = scmp.eq.s32.totalorder %s29, 0
      %p56 = por %p54, %p55
      %s58 = sadd.s32 %s57, 1
      %p61 = scmp.eq.s32.totalorder %s23, 1
      %p62 = scmp.ne.s32.totalorder %s57, %s59
      %p63 = scmp.eq.s32.totalorder %s23, 0
      %p64 = por %p62, %p63
      %p65 = scmp.ne.s32.totalorder %s57, %s59
      %p66 = scmp.eq.s32.totalorder %s28, 1
      %p67 = por %p65, %p66
      %p68 = scmp.ne.s32.totalorder %s59, %s60
      %p69 = scmp.eq.s32.totalorder %s28, 0
      %p70 = por %p68, %p69
      %p71 = scmp.ne.s32.totalorder %s59, %s60
      %p72 = scmp.eq.s32.totalorder %s29, 1
      %p73 = por %p71, %p72
      %p75 = scmp.ne.s32.totalorder %s60, %s74
      %p76 = scmp.eq.s32.totalorder %s29, 0
      %p77 = por %p75, %p76
      %s79 = sadd.s32 %s78, 1
      %p82 = scmp.eq.s32.totalorder %s23, 1
      %p83 = scmp.ne.s32.totalorder %s78, %s80
      %p84 = scmp.eq.s32.totalorder %s23, 0
      %p85 = por %p83, %p84
      %p86 = scmp.ne.s32.totalorder %s78, %s80
      %p87 = scmp.eq.s32.totalorder %s28, 1
      %p88 = por %p86, %p87
      %p89 = scmp.ne.s32.totalorder %s80, %s81
      %p90 = scmp.eq.s32.totalorder %s28, 0
      %p91 = por %p89, %p90
      %p92 = scmp.ne.s32.totalorder %s80, %s81
      %p93 = scmp.eq.s32.totalorder %s29, 1
      %p94 = por %p92, %p93
      %p96 = scmp.ne.s32.totalorder %s81, %s95
      %p97 = scmp.eq.s32.totalorder %s29, 0
      %p98 = por %p96, %p97
      %s100 = sadd.s32 %s99, 1
      %p103 = scmp.eq.s32.totalorder %s23, 1
      %p104 = scmp.ne.s32.totalorder %s99, %s101
      %p105 = scmp.eq.s32.totalorder %s23, 0
      %p106 = por %p104, %p105
      %p107 = scmp.ne.s32.totalorder %s99, %s101
      %p108 = scmp.eq.s32.totalorder %s28, 1
      %p109 = por %p107, %p108
      %p110 = scmp.ne.s32.totalorder %s101, %s102
      %p111 = scmp.eq.s32.totalorder %s28, 0
      %p112 = por %p110, %p111
      %p113 = scmp.ne.s32.totalorder %s101, %s102
      %p114 = scmp.eq.s32.totalorder %s29, 1
      %p115 = por %p113, %p114
      %p117 = scmp.ne.s32.totalorder %s102, %s116
      %p118 = scmp.eq.s32.totalorder %s29, 0
      %p119 = por %p117, %p118
      %s121 = sadd.s32 %s120, 1
      %p124 = scmp.eq.s32.totalorder %s23, 1
      %p125 = scmp.ne.s32.totalorder %s120, %s122
      %p126 = scmp.eq.s32.totalorder %s23, 0
      %p127 = por %p125, %p126
      %p128 = scmp.ne.s32.totalorder %s120, %s122
      %p129 = scmp.eq.s32.totalorder %s28, 1
      %p130 = por %p128, %p129
      %p131 = scmp.ne.s32.totalorder %s122, %s123
      %p132 = scmp.eq.s32.totalorder %s28, 0
      %p133 = por %p131, %p132
      %p134 = scmp.ne.s32.totalorder %s122, %s123
      %p135 = scmp.eq.s32.totalorder %s29, 1
      %p136 = por %p134, %p135
      %p138 = scmp.ne.s32.totalorder %s123, %s137
      %p139 = scmp.eq.s32.totalorder %s29, 0
      %p140 = por %p138, %p139
      %s142 = sadd.s32 %s141, 1
      %p145 = scmp.eq.s32.totalorder %s23, 1
      %p146 = scmp.ne.s32.totalorder %s141, %s143
      %p147 = scmp.eq.s32.totalorder %s23, 0
      %p148 = por %p146, %p147
      %p149 = scmp.ne.s32.totalorder %s141, %s143
      %p150 = scmp.eq.s32.totalorder %s28, 1
      %p151 = por %p149, %p150
      %p152 = scmp.ne.s32.totalorder %s143, %s144
      %p153 = scmp.eq.s32.totalorder %s28, 0
      %p154 = por %p152, %p153
      %p155 = scmp.ne.s32.totalorder %s143, %s144
      %p156 = scmp.eq.s32.totalorder %s29, 1
      %p157 = por %p155, %p156
      %p159 = scmp.ne.s32.totalorder %s144, %s158
      %p160 = scmp.eq.s32.totalorder %s29, 0
      %p161 = por %p159, %p160
      %s163 = sadd.s32 %s162, 1
      %p166 = scmp.eq.s32.totalorder %s23, 1
      %p167 = scmp.ne.s32.totalorder %s162, %s164
      %p168 = scmp.eq.s32.totalorder %s23, 0
      %p169 = por %p167, %p168
      %p170 = scmp.ne.s32.totalorder %s162, %s164
      %p171 = scmp.eq.s32.totalorder %s28, 1
      %p172 = por %p170, %p171
      %p173 = scmp.ne.s32.totalorder %s164, %s165
      %p174 = scmp.eq.s32.totalorder %s28, 0
      %p175 = por %p173, %p174
      %p176 = scmp.ne.s32.totalorder %s164, %s165
      %p177 = scmp.eq.s32.totalorder %s29, 1
      %p178 = por %p176, %p177
      %p180 = scmp.ne.s32.totalorder %s165, %s179
      %p181 = scmp.eq.s32.totalorder %s29, 0
      %p182 = por %p180, %p181
      %s184 = sadd.s32 %s183, 1
      %p187 = scmp.eq.s32.totalorder %s23, 1
      %p188 = scmp.ne.s32.totalorder %s183, %s185
      %p189 = scmp.eq.s32.totalorder %s23, 0
      %p190 = por %p188, %p189
      %p191 = scmp.ne.s32.totalorder %s183, %s185
      %p192 = scmp.eq.s32.totalorder %s28, 1
      %p193 = por %p191, %p192
      %p194 = scmp.ne.s32.totalorder %s185, %s186
      %p195 = scmp.eq.s32.totalorder %s28, 0
      %p196 = por %p194, %p195
      %p197 = scmp.ne.s32.totalorder %s185, %s186
      %p198 = scmp.eq.s32.totalorder %s29, 1
      %p199 = por %p197, %p198
      %p201 = scmp.ne.s32.totalorder %s186, %s200
      %p202 = scmp.eq.s32.totalorder %s29, 0
      %p203 = por %p201, %p202
      %s205 = sadd.s32 %s204, 1
      %p208 = scmp.eq.s32.totalorder %s23, 1
      %p209 = scmp.ne.s32.totalorder %s204, %s206
      %p210 = scmp.eq.s32.totalorder %s23, 0
      %p211 = por %p209, %p210
      %p212 = scmp.ne.s32.totalorder %s204, %s206
      %p213 = scmp.eq.s32.totalorder %s28, 1
      %p214 = por %p212, %p213
      %p215 = scmp.ne.s32.totalorder %s206, %s207
      %p216 = scmp.eq.s32.totalorder %s28, 0
      %p217 = por %p215, %p216
      %p218 = scmp.ne.s32.totalorder %s206, %s207
      %p219 = scmp.eq.s32.totalorder %s29, 1
      %p220 = por %p218, %p219
      %p222 = scmp.ne.s32.totalorder %s207, %s221
      %p223 = scmp.eq.s32.totalorder %s29, 0
      %p224 = por %p222, %p223
      %s225 = ssub.s32 %s23, %s30
      %p226 = scmp.eq.s32.totalorder %s225, 0
      %s228 = sadd.s32 %s227, 1
      %s229 = scalar_select %p226, %s227, %s228
      %p232 = pneg %p226
      %p233 = scmp.eq.s32.totalorder %s23, 1
      %p234 = por %p232, %p233
      %p235 = scmp.ne.s32.totalorder %s227, %s230
      %p236 = scmp.eq.s32.totalorder %s23, 0
      %p237 = por %p235, %p236
      %p238 = scmp.ne.s32.totalorder %s227, %s230
      %p239 = scmp.eq.s32.totalorder %s28, 1
      %p240 = por %p238, %p239
      %p241 = scmp.ne.s32.totalorder %s230, %s231
      %p242 = scmp.eq.s32.totalorder %s28, 0
      %p243 = por %p241, %p242
      %p244 = scmp.ne.s32.totalorder %s230, %s231
      %p245 = scmp.eq.s32.totalorder %s29, 1
      %p246 = por %p244, %p245
      %p248 = scmp.ne.s32.totalorder %s231, %s247
      %p249 = scmp.eq.s32.totalorder %s29, 0
      %p250 = por %p248, %p249
      %p251 = scmp.le.s32.totalorder 1, %s23
      %p252 = scmp.lt.s32.totalorder %s23, 3
      %p253 = pnand %p251, %p252
      %p254 = pneg %p253
      // Predicated region
      $region9: #{tpu_custom_call.1} parent=5 // pred_check
        _
      $region10: #{tpu_custom_call.1} parent=5 // pred_check_branch
        %256 = sbr.rel (%p253) target = $region12
      $region11: #{tpu_custom_call.1} parent=5 // pred_region
        %s257 = ssub.s32 %s23, 1
        // Predicated region
        $region13: #{tpu_custom_call.1} parent=11 // pred_check
          %p258 = pneg %p70
        $region14: #{tpu_custom_call.1} parent=11 // pred_check_branch
          %260 = sbr.rel (%p258) target = $region16
        $region15: #{tpu_custom_call.1} parent=11 // pred_region
          %s262 = ssub.s32 3072, 3072
          %263 = vsyncadd [#allocation6], %s262
          %s264 = sshll.u32 [#allocation5], 4
          %s265 = int_to_ptr.vmem [resolvable:$true] %s264
          %270 = dma.hbm_to_vmem [thread:$0]  %s1, 3072, %s265, [#allocation6], 192, 192, 12
        $region16: #{tpu_custom_call.1} parent=11 // pred_fallthru
          _
        // Predicated region
        $region17: #{tpu_custom_call.1} parent=11 // pred_check
          %p271 = pneg %p91
        $region18: #{tpu_custom_call.1} parent=11 // pred_check_branch
          %273 = sbr.rel (%p271) target = $region20
        $region19: #{tpu_custom_call.1} parent=11 // pred_region
          _
        $region20: #{tpu_custom_call.1} parent=11 // pred_fallthru
          _
        // Predicated region
        $region21: #{tpu_custom_call.1} parent=11 // pred_check
          %p274 = pneg %p112
        $region22: #{tpu_custom_call.1} parent=11 // pred_check_branch
          %276 = sbr.rel (%p274) target = $region24
        $region23: #{tpu_custom_call.1} parent=11 // pred_region
          %s278 = ssub.s32 1024, 1024
          %279 = vsyncadd [#allocation6], %s278
          %s280 = sshll.u32 [#allocation7], 4
          %s281 = int_to_ptr.vmem [resolvable:$true] %s280
          %286 = dma.hbm_to_vmem [thread:$0]  %s3, 1024, %s281, [#allocation6], 64, 64, 4
        $region24: #{tpu_custom_call.1} parent=11 // pred_fallthru
          _
        // Predicated region
        $region25: #{tpu_custom_call.1} parent=11 // pred_check
          %p287 = pneg %p133
        $region26: #{tpu_custom_call.1} parent=11 // pred_check_branch
          %289 = sbr.rel (%p287) target = $region28
        $region27: #{tpu_custom_call.1} parent=11 // pred_region
          _
        $region28: #{tpu_custom_call.1} parent=11 // pred_fallthru
          _
        // Predicated region
        $region29: #{tpu_custom_call.1} parent=11 // pred_check
          %p290 = pneg %p154
        $region30: #{tpu_custom_call.1} parent=11 // pred_check_branch
          %292 = sbr.rel (%p290) target = $region32
        $region31: #{tpu_custom_call.1} parent=11 // pred_region
          %s294 = ssub.s32 4096, 4096
          %295 = vsyncadd [#allocation9], %s294
          %s296 = sshll.u32 [#allocation8], 4
          %s297 = int_to_ptr.vmem [resolvable:$true] %s296
          %302 = dma.hbm_to_vmem [thread:$0]  %s5, 4096, %s297, [#allocation9], 256, 256, 16
        $region32: #{tpu_custom_call.1} parent=11 // pred_fallthru
          _
        // Predicated region
        $region33: #{tpu_custom_call.1} parent=11 // pred_check
          %p303 = pneg %p175
        $region34: #{tpu_custom_call.1} parent=11 // pred_check_branch
          %305 = sbr.rel (%p303) target = $region36
        $region35: #{tpu_custom_call.1} parent=11 // pred_region
          _
        $region36: #{tpu_custom_call.1} parent=11 // pred_fallthru
          _
        // Predicated region
        $region37: #{tpu_custom_call.1} parent=11 // pred_check
          %p306 = pneg %p196
        $region38: #{tpu_custom_call.1} parent=11 // pred_check_branch
          %308 = sbr.rel (%p306) target = $region40
        $region39: #{tpu_custom_call.1} parent=11 // pred_region
          %s310 = ssub.s32 4096, 4096
          %311 = vsyncadd [#allocation9], %s310
          %s312 = sshll.u32 [#allocation10], 4
          %s313 = int_to_ptr.vmem [resolvable:$true] %s312
          %318 = dma.hbm_to_vmem [thread:$0]  %s7, 4096, %s313, [#allocation9], 64, 64, 4
        $region40: #{tpu_custom_call.1} parent=11 // pred_fallthru
          _
        // Predicated region
        $region41: #{tpu_custom_call.1} parent=11 // pred_check
          %p319 = pneg %p217
        $region42: #{tpu_custom_call.1} parent=11 // pred_check_branch
          %321 = sbr.rel (%p319) target = $region44
        $region43: #{tpu_custom_call.1} parent=11 // pred_region
          _
        $region44: #{tpu_custom_call.1} parent=11 // pred_fallthru
          _
      $region12: #{tpu_custom_call.1} parent=5 // pred_fallthru
        _
      %p322 = scmp.lt.s32.totalorder %s23, 2
      // Predicated region
      $region45: #{tpu_custom_call.1} parent=5 // pred_check
        %p323 = pneg %p322
      $region46: #{tpu_custom_call.1} parent=5 // pred_check_branch
        %325 = sbr.rel (%p323) target = $region48
      $region47: #{tpu_custom_call.1} parent=5 // pred_region
        // Predicated region
        $region49: #{tpu_custom_call.1} parent=47 // pred_check
          %p326 = pneg %p43
        $region50: #{tpu_custom_call.1} parent=47 // pred_check_branch
          %328 = sbr.rel (%p326) target = $region52
        $region51: #{tpu_custom_call.1} parent=47 // pred_region
          %s329 = sand.u32 %s33, 1
          %s330 = scalar_lea.sflag [#allocation3], %s329
          %s331 = sand.u32 %s33, 1
          %s332 = smul.addr %s331, 8
          %s333 = scalar_lea.vmem [#allocation2], %s332
          %s335 = ssub.s32 128, 128
          %336 = vsyncadd %s330, %s335
          %s337 = smul.addr %s23, 128
          %s338 = scalar_lea.hbm %s0, %s337
          %s340 = sshll.u32 %s333, 4
          %s341 = int_to_ptr.vmem [resolvable:$true] %s340
          %343 = dma.hbm_to_vmem [thread:$0]  %s338, 128, %s341, %s330
        $region52: #{tpu_custom_call.1} parent=47 // pred_fallthru
          _
      $region48: #{tpu_custom_call.1} parent=5 // pred_fallthru
        _
      %p344 = scmp.le.s32.totalorder 1, %s23
      %p345 = scmp.lt.s32.totalorder %s23, 3
      %p346 = pnand %p344, %p345
      %p347 = pneg %p346
      // Predicated region
      $region53: #{tpu_custom_call.1} parent=5 // pred_check
        _
      $region54: #{tpu_custom_call.1} parent=5 // pred_check_branch
        %349 = sbr.rel (%p346) target = $region56
      $region55: #{tpu_custom_call.1} parent=5 // pred_region
        %s350 = ssub.s32 %s23, 1
        %s351 = sand.u32 %s36, 1
        %s352 = scalar_lea.sflag [#allocation3], %s351
        %s353 = sand.u32 %s36, 1
        %s354 = smul.addr %s353, 8
        %s355 = scalar_lea.vmem [#allocation2], %s354
        // Predicated region
        $region57: #{tpu_custom_call.1} parent=55 // pred_check
          %p356 = pneg %p49
        $region58: #{tpu_custom_call.1} parent=55 // pred_check_branch
          %358 = sbr.rel (%p356) target = $region60
        $region59: #{tpu_custom_call.1} parent=55 // pred_region
          %359 = dma.done %s352, 128
        $region60: #{tpu_custom_call.1} parent=55 // pred_fallthru
          _
        // Predicated region
        $region61: #{tpu_custom_call.1} parent=55 // pred_check
          %p360 = pneg %p70
        $region62: #{tpu_custom_call.1} parent=55 // pred_check_branch
          %362 = sbr.rel (%p360) target = $region64
        $region63: #{tpu_custom_call.1} parent=55 // pred_region
          %363 = dma.done [#allocation6], 3072
        $region64: #{tpu_custom_call.1} parent=55 // pred_fallthru
          _
        // Predicated region
        $region65: #{tpu_custom_call.1} parent=55 // pred_check
          %p364 = pneg %p112
        $region66: #{tpu_custom_call.1} parent=55 // pred_check_branch
          %366 = sbr.rel (%p364) target = $region68
        $region67: #{tpu_custom_call.1} parent=55 // pred_region
          %367 = dma.done [#allocation6], 1024
        $region68: #{tpu_custom_call.1} parent=55 // pred_fallthru
          _
        // Predicated region
        $region69: #{tpu_custom_call.1} parent=55 // pred_check
          %p368 = pneg %p154
        $region70: #{tpu_custom_call.1} parent=55 // pred_check_branch
          %370 = sbr.rel (%p368) target = $region72
        $region71: #{tpu_custom_call.1} parent=55 // pred_region
          %371 = dma.done [#allocation9], 4096
        $region72: #{tpu_custom_call.1} parent=55 // pred_fallthru
          _
        // Predicated region
        $region73: #{tpu_custom_call.1} parent=55 // pred_check
          %p372 = pneg %p196
        $region74: #{tpu_custom_call.1} parent=55 // pred_check_branch
          %374 = sbr.rel (%p372) target = $region76
        $region75: #{tpu_custom_call.1} parent=55 // pred_region
          %375 = dma.done [#allocation9], 4096
        $region76: #{tpu_custom_call.1} parent=55 // pred_fallthru
          _
        %s376 = sand.u32 %s36, 1
        %s377 = scalar_lea.sflag [#allocation3], %s376
        %s378 = sand.u32 %s36, 1
        %s379 = smul.addr %s378, 8
        %s380 = scalar_lea.vmem [#allocation2], %s379
        %p381 = pneg %p49
        %p382 = pneg %p46
        %p383 = pneg %p70
        %p384 = pneg %p67
        %p385 = pneg %p91
        %p386 = pneg %p88
        %p387 = pneg %p112
        %p388 = pneg %p109
        %p389 = pneg %p133
        %p390 = pneg %p130
        %p391 = pneg %p154
        %p392 = pneg %p151
        %p393 = pneg %p175
        %p394 = pneg %p172
        %p395 = pneg %p196
        %p396 = pneg %p193
        %p397 = pneg %p217
        %p398 = pneg %p214
        %p399 = pneg %p243
        %p400 = pneg %p240
        %s401 = sand.u32 %s230, 1
        %s402 = scalar_lea.sflag [#allocation4], %s401
        %s403 = sand.u32 %s230, 1
        %s404 = smul.addr %s403, 8
        %s405 = scalar_lea.vmem [#allocation11], %s404
        %v407 = vld [vmem:[%s355] sm:$0xff]
        %408 = vadd.xlane.f32.xlu0 %v407
        %v409 = vpop.xlane.xlu0 %408
        %v410 = vrcp.pop 128.0
        %v411 = vmul.f32 %v409, %v410
        %v412 = vsub.f32 %v407, %v411
        %v413 = vmul.f32 %v412, %v412
        %414 = vadd.xlane.f32.xlu0 %v413
        %v415 = vpop.xlane.xlu0 %414
        %v416 = vmul.f32 %v415, %v410
        %v417 = vadd.f32 %v416, 1e-06
        %v418 = vrsqrt.pop %v417
        %v419 = vmul.f32 %v412, %v418
        %v420 = vpack.c.bf16 %v419, %v419
        %v421 = vld [vmem:[#allocation5] sm:$0xff]
        %v422 = vld [vmem:[#allocation5 + $0x8] sm:$0xf]
        %v423 = vld [vmem:[#allocation5 + $0xc] sm:$0xff]
        %v424 = vld [vmem:[#allocation5 + $0x14] sm:$0xf]
        %v425 = vld [vmem:[#allocation5 + $0x18] sm:$0xff]
        %v426 = vld [vmem:[#allocation5 + $0x20] sm:$0xf]
        %v427 = vld [vmem:[#allocation5 + $0x24] sm:$0xff]
        %v428 = vld [vmem:[#allocation5 + $0x2c] sm:$0xf]
        %v429 = vld [vmem:[#allocation5 + $0x30] sm:$0xff]
        %v430 = vld [vmem:[#allocation5 + $0x38] sm:$0xf]
        %v431 = vld [vmem:[#allocation5 + $0x3c] sm:$0xff]
        %v432 = vld [vmem:[#allocation5 + $0x44] sm:$0xf]
        %v433 = vld [vmem:[#allocation5 + $0x48] sm:$0xff]
        %v434 = vld [vmem:[#allocation5 + $0x50] sm:$0xf]
        %v435 = vld [vmem:[#allocation5 + $0x54] sm:$0xff]
        %v436 = vld [vmem:[#allocation5 + $0x5c] sm:$0xf]
        %v437 = vld [vmem:[#allocation5 + $0x60] sm:$0xff]
        %v438 = vld [vmem:[#allocation5 + $0x68] sm:$0xf]
        %v439 = vld [vmem:[#allocation5 + $0x6c] sm:$0xff]
        %v440 = vld [vmem:[#allocation5 + $0x74] sm:$0xf]
        %v441 = vld [vmem:[#allocation5 + $0x78] sm:$0xff]
        %v442 = vld [vmem:[#allocation5 + $0x80] sm:$0xf]
        %v443 = vld [vmem:[#allocation5 + $0x84] sm:$0xff]
        %v444 = vld [vmem:[#allocation5 + $0x8c] sm:$0xf]
        %v445 = vld [vmem:[#allocation5 + $0x90] sm:$0xff]
        %v446 = vld [vmem:[#allocation5 + $0x98] sm:$0xf]
        %v447 = vld [vmem:[#allocation5 + $0x9c] sm:$0xff]
        %v448 = vld [vmem:[#allocation5 + $0xa4] sm:$0xf]
        %v449 = vld [vmem:[#allocation5 + $0xa8] sm:$0xff]
        %v450 = vld [vmem:[#allocation5 + $0xb0] sm:$0xf]
        %v451 = vld [vmem:[#allocation5 + $0xb4] sm:$0xff]
        %v452 = vld [vmem:[#allocation5 + $0xbc] sm:$0xf]
        %v453 = vld [vmem:[%s2] sm:$0x7]
        %v455 = vlaneseq
        %v456 = vshrl.u32 %v455, 7
        %v457 = vsub.s32 0, %v456
        %v458 = vrot.slane %v453, %v457
        %v459 = vlaneseq
        %v460 = vshrl.u32 %v459, 7
        %v461 = vsub.s32 1, %v460
        %v462 = vrot.slane %v453, %v461
        %v463 = vlaneseq
        %v464 = vshrl.u32 %v463, 7
        %v465 = vsub.s32 2, %v464
        %v466 = vrot.slane %v453, %v465
        %v502 = vunpack.c.l.b16 %v421
        %v503 = vunpack.c.h.b16 %v421
        %v504 = vunpack.c.l.b16 %v422
        %v505 = vunpack.c.l.b16 %v423
        %v506 = vunpack.c.h.b16 %v423
        %v507 = vunpack.c.l.b16 %v424
        %v508 = vunpack.c.l.b16 %v425
        %v509 = vunpack.c.h.b16 %v425
        %v510 = vunpack.c.l.b16 %v426
        %v511 = vunpack.c.l.b16 %v427
        %v512 = vunpack.c.h.b16 %v427
        %v513 = vunpack.c.l.b16 %v428
        %v514 = vunpack.c.l.b16 %v429
        %v515 = vunpack.c.h.b16 %v429
        %v516 = vunpack.c.l.b16 %v430
        %v517 = vunpack.c.l.b16 %v431
        %v518 = vunpack.c.h.b16 %v431
        %v519 = vunpack.c.l.b16 %v432
        %v520 = vunpack.c.l.b16 %v433
        %v521 = vunpack.c.h.b16 %v433
        %v522 = vunpack.c.l.b16 %v434
        %v523 = vunpack.c.l.b16 %v435
        %v524 = vunpack.c.h.b16 %v435
        %v525 = vunpack.c.l.b16 %v436
        %v526 = vunpack.c.l.b16 %v437
        %v527 = vunpack.c.h.b16 %v437
        %v528 = vunpack.c.l.b16 %v438
        %v529 = vunpack.c.l.b16 %v439
        %v530 = vunpack.c.h.b16 %v439
        %v531 = vunpack.c.l.b16 %v440
        %v532 = vunpack.c.l.b16 %v441
        %v533 = vunpack.c.h.b16 %v441
        %v534 = vunpack.c.l.b16 %v442
        %v535 = vunpack.c.l.b16 %v443
        %v536 = vunpack.c.h.b16 %v443
        %v537 = vunpack.c.l.b16 %v444
        %v538 = vunpack.c.l.b16 %v445
        %v539 = vunpack.c.h.b16 %v445
        %v540 = vunpack.c.l.b16 %v446
        %v541 = vunpack.c.l.b16 %v447
        %v542 = vunpack.c.h.b16 %v447
        %v543 = vunpack.c.l.b16 %v448
        %v544 = vunpack.c.l.b16 %v449
        %v545 = vunpack.c.h.b16 %v449
        %v546 = vunpack.c.l.b16 %v450
        %v547 = vunpack.c.l.b16 %v451
        %v548 = vunpack.c.h.b16 %v451
        %v549 = vunpack.c.l.b16 %v452
        %v550 = vpack.c.b16 %v505, %v502
        %v551 = vpack.c.b16 %v506, %v503
        %v552 = vpack.c.b16 %v507, %v504
        %v553 = vpack.c.b16 %v511, %v508
        %v554 = vpack.c.b16 %v512, %v509
        %v555 = vpack.c.b16 %v513, %v510
        %v556 = vpack.c.b16 %v517, %v514
        %v557 = vpack.c.b16 %v518, %v515
        %v558 = vpack.c.b16 %v519, %v516
        %v559 = vpack.c.b16 %v523, %v520
        %v560 = vpack.c.b16 %v524, %v521
        %v561 = vpack.c.b16 %v525, %v522
        %v562 = vpack.c.b16 %v529, %v526
        %v563 = vpack.c.b16 %v530, %v527
        %v564 = vpack.c.b16 %v531, %v528
        %v565 = vpack.c.b16 %v535, %v532
        %v566 = vpack.c.b16 %v536, %v533
        %v567 = vpack.c.b16 %v537, %v534
        %v568 = vpack.c.b16 %v541, %v538
        %v569 = vpack.c.b16 %v542, %v539
        %v570 = vpack.c.b16 %v543, %v540
        %v571 = vpack.c.b16 %v547, %v544
        %v572 = vpack.c.b16 %v548, %v545
        %v573 = vpack.c.b16 %v549, %v546
        %598 = vmatprep.subr.bf16.mxu0 %v551
        %599 = vmatpush1.bf16.msra.mxu0 %v550
        %600 = vmatprep.subr.bf16.mxu0 %v554
        %601 = vmatpush1.bf16.msra.mxu0 %v553
        %602 = vmatprep.subr.bf16.mxu0 %v557
        %603 = vmatpush1.bf16.msra.mxu0 %v556
        %604 = vmatprep.subr.bf16.mxu0 %v560
        %605 = vmatpush1.bf16.msra.mxu0 %v559
        %606 = vmatprep.subr.bf16.mxu0 %v563
        %607 = vmatpush1.bf16.msra.mxu0 %v562
        %608 = vmatprep.subr.bf16.mxu0 %v566
        %609 = vmatpush1.bf16.msra.mxu0 %v565
        %610 = vmatprep.subr.bf16.mxu0 %v569
        %611 = vmatpush1.bf16.msra.mxu0 %v568
        %612 = vmatprep.subr.bf16.mxu0 %v572
        %613 = vmatpush1.bf16.msra.mxu0 %v571
        %614 = vmatprep.subr.bf16.mxu0 0
        %615 = vmatpush1.bf16.msra.mxu0 0
        %616 = vmatprep.subr.bf16.mxu0 0
        %617 = vmatpush1.bf16.msra.mxu0 0
        %618 = vmatprep.subr.bf16.mxu0 0
        %619 = vmatpush1.bf16.msra.mxu0 0
        %620 = vmatprep.subr.bf16.mxu0 0
        %621 = vmatpush1.bf16.msra.mxu0 0
        %622 = vmatprep.subr.bf16.mxu0 0
        %623 = vmatpush1.bf16.msra.mxu0 0
        %624 = vmatprep.subr.bf16.mxu0 0
        %625 = vmatpush1.bf16.msra.mxu0 0
        %626 = vmatprep.subr.bf16.mxu0 0
        %627 = vmatpush1.bf16.msra.mxu0 0
        %628 = vmatprep.subr.bf16.mxu0 0
        %629 = vmatpush1.bf16.msra.mxu0 0
        %630 = vmatprep.mubr.bf16.mxu0 0
        %631 = vmatmul.mubr.bf16.gmra.mrb[0].mxu0 %v420
        %v632 = vpop.f32.mrb[0].mxu0
        %v633 = vadd.f32 %v458, %v632
        %v634 = vpop.f32.mrb[0].mxu0
        %v635 = vadd.f32 %v462, %v634
        %v636 = vpop.f32.mrb[0].mxu0
        %v637 = vpop.f32.mrb[0].mxu0
        %638 = vdwg.mxu0
        %639 = vmatprep.subr.bf16.mxu0 0
        %640 = vmatpush1.bf16.msra.mxu0 %v552
        %641 = vmatprep.subr.bf16.mxu0 0
        %642 = vmatpush1.bf16.msra.mxu0 %v555
        %643 = vmatprep.subr.bf16.mxu0 0
        %644 = vmatpush1.bf16.msra.mxu0 %v558
        %645 = vmatprep.subr.bf16.mxu0 0
        %646 = vmatpush1.bf16.msra.mxu0 %v561
        %647 = vmatprep.subr.bf16.mxu0 0
        %648 = vmatpush1.bf16.msra.mxu0 %v564
        %649 = vmatprep.subr.bf16.mxu0 0
        %650 = vmatpush1.bf16.msra.mxu0 %v567
        %651 = vmatprep.subr.bf16.mxu0 0
        %652 = vmatpush1.bf16.msra.mxu0 %v570
        %653 = vmatprep.subr.bf16.mxu0 0
        %654 = vmatpush1.bf16.msra.mxu0 %v573
        %655 = vmatprep.subr.bf16.mxu0 0
        %656 = vmatpush1.bf16.msra.mxu0 0
        %657 = vmatprep.subr.bf16.mxu0 0
        %658 = vmatpush1.bf16.msra.mxu0 0
        %659 = vmatprep.subr.bf16.mxu0 0
        %660 = vmatpush1.bf16.msra.mxu0 0
        %661 = vmatprep.subr.bf16.mxu0 0
        %662 = vmatpush1.bf16.msra.mxu0 0
        %663 = vmatprep.subr.bf16.mxu0 0
        %664 = vmatpush1.bf16.msra.mxu0 0
        %665 = vmatprep.subr.bf16.mxu0 0
        %666 = vmatpush1.bf16.msra.mxu0 0
        %667 = vmatprep.subr.bf16.mxu0 0
        %668 = vmatpush1.bf16.msra.mxu0 0
        %669 = vmatprep.subr.bf16.mxu0 0
        %670 = vmatpush1.bf16.msra.mxu0 0
        %671 = vmatprep.mubr.bf16.mxu0 0
        %672 = vmatmul.mubr.bf16.gmra.mrb[0].mxu0 %v420
        %v673 = vpop.f32.mrb[0].mxu0
        %v674 = vadd.f32 %v466, %v673
        %v675 = vpop.f32.mrb[0].mxu0
        %v676 = vpop.f32.mrb[0].mxu0
        %v677 = vpop.f32.mrb[0].mxu0
        %678 = vdwg.mxu0
        %v679 = vpack.c.bf16 %v633, %v633
        %681 = vrot.lane.b32.xlu0 %v679, 96
        %v682 = vpop.permute.xlu0 %681
        %683 = vrot.lane.b32.xlu0 %v679, 64
        %v684 = vpop.permute.xlu0 %683
        %685 = vrot.lane.b32.xlu0 %v679, 32
        %v686 = vpop.permute.xlu0 %685
        %v687 = vpack.c.bf16 %v635, %v635
        %689 = vrot.lane.b32.xlu0 %v687, 96
        %v690 = vpop.permute.xlu0 %689
        %691 = vrot.lane.b32.xlu0 %v687, 64
        %v692 = vpop.permute.xlu0 %691
        %693 = vrot.lane.b32.xlu0 %v687, 32
        %v694 = vpop.permute.xlu0 %693
        %v695 = vpack.c.bf16 %v674, %v674
        %697 = vrot.lane.b32.xlu0 %v695, 96
        %v698 = vpop.permute.xlu0 %697
        %699 = vrot.lane.b32.xlu0 %v695, 64
        %v700 = vpop.permute.xlu0 %699
        %701 = vrot.lane.b32.xlu0 %v695, 32
        %v702 = vpop.permute.xlu0 %701
        %vm703 = vcmask 261120
        %v705 = vsel %vm703, %v679, 0
        %v708 = vsel %vm703, %v687, 0
        %710 = vmatprep.subr.bf16.mxu0 0
        %711 = vmatpush1.bf16.xpose.msra.mxu0 %v708
        %712 = vmatprep.subr.bf16.mxu0 0
        %713 = vmatpush1.bf16.xpose.msra.mxu0 0
        %714 = vmatprep.subr.bf16.mxu0 0
        %715 = vmatpush1.bf16.xpose.msra.mxu0 0
        %716 = vmatprep.subr.bf16.mxu0 0
        %717 = vmatpush1.bf16.xpose.msra.mxu0 0
        %718 = vmatprep.subr.bf16.mxu0 0
        %719 = vmatpush1.bf16.xpose.msra.mxu0 0
        %720 = vmatprep.subr.bf16.mxu0 0
        %721 = vmatpush1.bf16.xpose.msra.mxu0 0
        %722 = vmatprep.subr.bf16.mxu0 0
        %723 = vmatpush1.bf16.xpose.msra.mxu0 0
        %724 = vmatprep.subr.bf16.mxu0 0
        %725 = vmatpush1.bf16.xpose.msra.mxu0 0
        %726 = vmatprep.subr.bf16.mxu0 0
        %727 = vmatpush1.bf16.xpose.msra.mxu0 0
        %728 = vmatprep.subr.bf16.mxu0 0
        %729 = vmatpush1.bf16.xpose.msra.mxu0 0
        %730 = vmatprep.subr.bf16.mxu0 0
        %731 = vmatpush1.bf16.xpose.msra.mxu0 0
        %732 = vmatprep.subr.bf16.mxu0 0
        %733 = vmatpush1.bf16.xpose.msra.mxu0 0
        %734 = vmatprep.subr.bf16.mxu0 0
        %735 = vmatpush1.bf16.xpose.msra.mxu0 0
        %736 = vmatprep.subr.bf16.mxu0 0
        %737 = vmatpush1.bf16.xpose.msra.mxu0 0
        %738 = vmatprep.subr.bf16.mxu0 0
        %739 = vmatpush1.bf16.xpose.msra.mxu0 0
        %740 = vmatprep.subr.bf16.mxu0 0
        %741 = vmatpush1.bf16.xpose.msra.mxu0 0
        %742 = vmatprep.mubr.bf16.mxu0 0
        %743 = vmatmul.mubr.bf16.gmra.mrb[0].mxu0 %v705
        %v744 = vpop.f32.mrb[0].mxu0
        %v745 = vadd.f32 0.0, %v744
        %v746 = vpop.f32.mrb[0].mxu0
        %v747 = vpop.f32.mrb[0].mxu0
        %v748 = vpop.f32.mrb[0].mxu0
        %749 = vdwg.mxu0
        %v751 = vsel %vm703, %v682, 0
        %v754 = vsel %vm703, %v690, 0
        %756 = vmatprep.subr.bf16.mxu0 0
        %757 = vmatpush1.bf16.xpose.msra.mxu0 %v754
        %758 = vmatprep.subr.bf16.mxu0 0
        %759 = vmatpush1.bf16.xpose.msra.mxu0 0
        %760 = vmatprep.subr.bf16.mxu0 0
        %761 = vmatpush1.bf16.xpose.msra.mxu0 0
        %762 = vmatprep.subr.bf16.mxu0 0
        %763 = vmatpush1.bf16.xpose.msra.mxu0 0
        %764 = vmatprep.subr.bf16.mxu0 0
        %765 = vmatpush1.bf16.xpose.msra.mxu0 0
        %766 = vmatprep.subr.bf16.mxu0 0
        %767 = vmatpush1.bf16.xpose.msra.mxu0 0
        %768 = vmatprep.subr.bf16.mxu0 0
        %769 = vmatpush1.bf16.xpose.msra.mxu0 0
        %770 = vmatprep.subr.bf16.mxu0 0
        %771 = vmatpush1.bf16.xpose.msra.mxu0 0
        %772 = vmatprep.subr.bf16.mxu0 0
        %773 = vmatpush1.bf16.xpose.msra.mxu0 0
        %774 = vmatprep.subr.bf16.mxu0 0
        %775 = vmatpush1.bf16.xpose.msra.mxu0 0
        %776 = vmatprep.subr.bf16.mxu0 0
        %777 = vmatpush1.bf16.xpose.msra.mxu0 0
        %778 = vmatprep.subr.bf16.mxu0 0
        %779 = vmatpush1.bf16.xpose.msra.mxu0 0
        %780 = vmatprep.subr.bf16.mxu0 0
        %781 = vmatpush1.bf16.xpose.msra.mxu0 0
        %782 = vmatprep.subr.bf16.mxu0 0
        %783 = vmatpush1.bf16.xpose.msra.mxu0 0
        %784 = vmatprep.subr.bf16.mxu0 0
        %785 = vmatpush1.bf16.xpose.msra.mxu0 0
        %786 = vmatprep.subr.bf16.mxu0 0
        %787 = vmatpush1.bf16.xpose.msra.mxu0 0
        %788 = vmatprep.mubr.bf16.mxu0 0
        %789 = vmatmul.mubr.bf16.gmra.mrb[0].mxu0 %v751
        %v790 = vpop.f32.mrb[0].mxu0
        %v791 = vadd.f32 0.0, %v790
        %v792 = vpop.f32.mrb[0].mxu0
        %v793 = vpop.f32.mrb[0].mxu0
        %v794 = vpop.f32.mrb[0].mxu0
        %795 = vdwg.mxu0
        %v797 = vsel %vm703, %v684, 0
        %v800 = vsel %vm703, %v692, 0
        %802 = vmatprep.subr.bf16.mxu0 0
        %803 = vmatpush1.bf16.xpose.msra.mxu0 %v800
        %804 = vmatprep.subr.bf16.mxu0 0
        %805 = vmatpush1.bf16.xpose.msra.mxu0 0
        %806 = vmatprep.subr.bf16.mxu0 0
        %807 = vmatpush1.bf16.xpose.msra.mxu0 0
        %808 = vmatprep.subr.bf16.mxu0 0
        %809 = vmatpush1.bf16.xpose.msra.mxu0 0
        %810 = vmatprep.subr.bf16.mxu0 0
        %811 = vmatpush1.bf16.xpose.msra.mxu0 0
        %812 = vmatprep.subr.bf16.mxu0 0
        %813 = vmatpush1.bf16.xpose.msra.mxu0 0
        %814 = vmatprep.subr.bf16.mxu0 0
        %815 = vmatpush1.bf16.xpose.msra.mxu0 0
        %816 = vmatprep.subr.bf16.mxu0 0
        %817 = vmatpush1.bf16.xpose.msra.mxu0 0
        %818 = vmatprep.subr.bf16.mxu0 0
        %819 = vmatpush1.bf16.xpose.msra.mxu0 0
        %820 = vmatprep.subr.bf16.mxu0 0
        %821 = vmatpush1.bf16.xpose.msra.mxu0 0
        %822 = vmatprep.subr.bf16.mxu0 0
        %823 = vmatpush1.bf16.xpose.msra.mxu0 0
        %824 = vmatprep.subr.bf16.mxu0 0
        %825 = vmatpush1.bf16.xpose.msra.mxu0 0
        %826 = vmatprep.subr.bf16.mxu0 0
        %827 = vmatpush1.bf16.xpose.msra.mxu0 0
        %828 = vmatprep.subr.bf16.mxu0 0
        %829 = vmatpush1.bf16.xpose.msra.mxu0 0
        %830 = vmatprep.subr.bf16.mxu0 0
        %831 = vmatpush1.bf16.xpose.msra.mxu0 0
        %832 = vmatprep.subr.bf16.mxu0 0
        %833 = vmatpush1.bf16.xpose.msra.mxu0 0
        %834 = vmatprep.mubr.bf16.mxu0 0
        %835 = vmatmul.mubr.bf16.gmra.mrb[0].mxu0 %v797
        %v836 = vpop.f32.mrb[0].mxu0
        %v837 = vadd.f32 0.0, %v836
        %v838 = vpop.f32.mrb[0].mxu0
        %v839 = vpop.f32.mrb[0].mxu0
        %v840 = vpop.f32.mrb[0].mxu0
        %841 = vdwg.mxu0
        %v843 = vsel %vm703, %v686, 0
        %v846 = vsel %vm703, %v694, 0
        %848 = vmatprep.subr.bf16.mxu0 0
        %849 = vmatpush1.bf16.xpose.msra.mxu0 %v846
        %850 = vmatprep.subr.bf16.mxu0 0
        %851 = vmatpush1.bf16.xpose.msra.mxu0 0
        %852 = vmatprep.subr.bf16.mxu0 0
        %853 = vmatpush1.bf16.xpose.msra.mxu0 0
        %854 = vmatprep.subr.bf16.mxu0 0
        %855 = vmatpush1.bf16.xpose.msra.mxu0 0
        %856 = vmatprep.subr.bf16.mxu0 0
        %857 = vmatpush1.bf16.xpose.msra.mxu0 0
        %858 = vmatprep.subr.bf16.mxu0 0
        %859 = vmatpush1.bf16.xpose.msra.mxu0 0
        %860 = vmatprep.subr.bf16.mxu0 0
        %861 = vmatpush1.bf16.xpose.msra.mxu0 0
        %862 = vmatprep.subr.bf16.mxu0 0
        %863 = vmatpush1.bf16.xpose.msra.mxu0 0
        %864 = vmatprep.subr.bf16.mxu0 0
        %865 = vmatpush1.bf16.xpose.msra.mxu0 0
        %866 = vmatprep.subr.bf16.mxu0 0
        %867 = vmatpush1.bf16.xpose.msra.mxu0 0
        %868 = vmatprep.subr.bf16.mxu0 0
        %869 = vmatpush1.bf16.xpose.msra.mxu0 0
        %870 = vmatprep.subr.bf16.mxu0 0
        %871 = vmatpush1.bf16.xpose.msra.mxu0 0
        %872 = vmatprep.subr.bf16.mxu0 0
        %873 = vmatpush1.bf16.xpose.msra.mxu0 0
        %874 = vmatprep.subr.bf16.mxu0 0
        %875 = vmatpush1.bf16.xpose.msra.mxu0 0
        %876 = vmatprep.subr.bf16.mxu0 0
        %877 = vmatpush1.bf16.xpose.msra.mxu0 0
        %878 = vmatprep.subr.bf16.mxu0 0
        %879 = vmatpush1.bf16.xpose.msra.mxu0 0
        %880 = vmatprep.mubr.bf16.mxu0 0
        %881 = vmatmul.mubr.bf16.gmra.mrb[0].mxu0 %v843
        %v882 = vpop.f32.mrb[0].mxu0
        %v883 = vadd.f32 0.0, %v882
        %v884 = vpop.f32.mrb[0].mxu0
        %v885 = vpop.f32.mrb[0].mxu0
        %v886 = vpop.f32.mrb[0].mxu0
        %887 = vdwg.mxu0
        %vm888 = vcmask 64512
        %v889 = vsel %vm888, %v745, -inf
        %890 = vmax.xlane.f32.xlu0 %v889
        %v891 = vpop.xlane.xlu0 %890
        %v892 = vsel %vm888, %v791, -inf
        %893 = vmax.xlane.f32.xlu0 %v892
        %v894 = vpop.xlane.xlu0 %893
        %v895 = vsel %vm888, %v837, -inf
        %896 = vmax.xlane.f32.xlu0 %v895
        %v897 = vpop.xlane.xlu0 %896
        %v898 = vsel %vm888, %v883, -inf
        %899 = vmax.xlane.f32.xlu0 %v898
        %v900 = vpop.xlane.xlu0 %899
        %v901 = vsub.f32 -inf, %v891
        %v902 = vsub.f32 -inf, %v894
        %v903 = vsub.f32 -inf, %v897
        %v904 = vsub.f32 -inf, %v900
        %v905 = vmul.f32 %v901, 1.442695
        %v906 = vpow.pop %v905
        %v907 = vmul.f32 %v902, 1.442695
        %v908 = vpow.pop %v907
        %v909 = vmul.f32 %v903, 1.442695
        %v910 = vpow.pop %v909
        %v911 = vmul.f32 %v904, 1.442695
        %v912 = vpow.pop %v911
        %v913 = vsub.f32 %v745, %v891
        %v914 = vsub.f32 %v791, %v894
        %v915 = vsub.f32 %v837, %v897
        %v916 = vsub.f32 %v883, %v900
        %v917 = vmul.f32 %v913, 1.442695
        %v918 = vpow.pop %v917
        %v919 = vmul.f32 %v914, 1.442695
        %v920 = vpow.pop %v919
        %v921 = vmul.f32 %v915, 1.442695
        %v922 = vpow.pop %v921
        %v923 = vmul.f32 %v916, 1.442695
        %v924 = vpow.pop %v923
        %v925 = vmul.f32 %v906, 0.0
        %v926 = vmul.f32 %v908, 0.0
        %v927 = vmul.f32 %v910, 0.0
        %v928 = vmul.f32 %v912, 0.0
        %v929 = vsel %vm888, %v918, 0.0
        %930 = vadd.xlane.f32.xlu0 %v929
        %v931 = vpop.xlane.xlu0 %930
        %v932 = vsel %vm888, %v920, 0.0
        %933 = vadd.xlane.f32.xlu0 %v932
        %v934 = vpop.xlane.xlu0 %933
        %v935 = vsel %vm888, %v922, 0.0
        %936 = vadd.xlane.f32.xlu0 %v935
        %v937 = vpop.xlane.xlu0 %936
        %v938 = vsel %vm888, %v924, 0.0
        %939 = vadd.xlane.f32.xlu0 %v938
        %v940 = vpop.xlane.xlu0 %939
        %v941 = vadd.f32 %v925, %v931
        %v942 = vadd.f32 %v926, %v934
        %v943 = vadd.f32 %v927, %v937
        %v944 = vadd.f32 %v928, %v940
        %v945 = vpack.c.bf16 %v918, %v918
        %v946 = vpack.c.bf16 %v920, %v920
        %v947 = vpack.c.bf16 %v922, %v922
        %v948 = vpack.c.bf16 %v924, %v924
        %v950 = vsel %vm888, %v945, 0
        %vm952 = vcmask 1043456
        %v954 = vsel %vm952, %v695, 0
        %956 = vmatprep.subr.bf16.mxu0 0
        %957 = vmatpush1.bf16.msra.mxu0 %v954
        %958 = vmatprep.subr.bf16.mxu0 0
        %959 = vmatpush1.bf16.msra.mxu0 0
        %960 = vmatprep.subr.bf16.mxu0 0
        %961 = vmatpush1.bf16.msra.mxu0 0
        %962 = vmatprep.subr.bf16.mxu0 0
        %963 = vmatpush1.bf16.msra.mxu0 0
        %964 = vmatprep.subr.bf16.mxu0 0
        %965 = vmatpush1.bf16.msra.mxu0 0
        %966 = vmatprep.subr.bf16.mxu0 0
        %967 = vmatpush1.bf16.msra.mxu0 0
        %968 = vmatprep.subr.bf16.mxu0 0
        %969 = vmatpush1.bf16.msra.mxu0 0
        %970 = vmatprep.subr.bf16.mxu0 0
        %971 = vmatpush1.bf16.msra.mxu0 0
        %972 = vmatprep.subr.bf16.mxu0 0
        %973 = vmatpush1.bf16.msra.mxu0 0
        %974 = vmatprep.subr.bf16.mxu0 0
        %975 = vmatpush1.bf16.msra.mxu0 0
        %976 = vmatprep.subr.bf16.mxu0 0
        %977 = vmatpush1.bf16.msra.mxu0 0
        %978 = vmatprep.subr.bf16.mxu0 0
        %979 = vmatpush1.bf16.msra.mxu0 0
        %980 = vmatprep.subr.bf16.mxu0 0
        %981 = vmatpush1.bf16.msra.mxu0 0
        %982 = vmatprep.subr.bf16.mxu0 0
        %983 = vmatpush1.bf16.msra.mxu0 0
        %984 = vmatprep.subr.bf16.mxu0 0
        %985 = vmatpush1.bf16.msra.mxu0 0
        %986 = vmatprep.subr.bf16.mxu0 0
        %987 = vmatpush1.bf16.msra.mxu0 0
        %988 = vmatprep.mubr.bf16.mxu0 0
        %989 = vmatmul.mubr.bf16.gmra.mrb[0].mxu0 %v950
        %v990 = vpop.f32.mrb[0].mxu0
        %v991 = vadd.f32 0.0, %v990
        %v992 = vpop.f32.mrb[0].mxu0
        %v993 = vpop.f32.mrb[0].mxu0
        %v994 = vpop.f32.mrb[0].mxu0
        %995 = vdwg.mxu0
        %v997 = vsel %vm888, %v946, 0
        %v1000 = vsel %vm952, %v698, 0
        %1002 = vmatprep.subr.bf16.mxu0 0
        %1003 = vmatpush1.bf16.msra.mxu0 %v1000
        %1004 = vmatprep.subr.bf16.mxu0 0
        %1005 = vmatpush1.bf16.msra.mxu0 0
        %1006 = vmatprep.subr.bf16.mxu0 0
        %1007 = vmatpush1.bf16.msra.mxu0 0
        %1008 = vmatprep.subr.bf16.mxu0 0
        %1009 = vmatpush1.bf16.msra.mxu0 0
        %1010 = vmatprep.subr.bf16.mxu0 0
        %1011 = vmatpush1.bf16.msra.mxu0 0
        %1012 = vmatprep.subr.bf16.mxu0 0
        %1013 = vmatpush1.bf16.msra.mxu0 0
        %1014 = vmatprep.subr.bf16.mxu0 0
        %1015 = vmatpush1.bf16.msra.mxu0 0
        %1016 = vmatprep.subr.bf16.mxu0 0
        %1017 = vmatpush1.bf16.msra.mxu0 0
        %1018 = vmatprep.subr.bf16.mxu0 0
        %1019 = vmatpush1.bf16.msra.mxu0 0
        %1020 = vmatprep.subr.bf16.mxu0 0
        %1021 = vmatpush1.bf16.msra.mxu0 0
        %1022 = vmatprep.subr.bf16.mxu0 0
        %1023 = vmatpush1.bf16.msra.mxu0 0
        %1024 = vmatprep.subr.bf16.mxu0 0
        %1025 = vmatpush1.bf16.msra.mxu0 0
        %1026 = vmatprep.subr.bf16.mxu0 0
        %1027 = vmatpush1.bf16.msra.mxu0 0
        %1028 = vmatprep.subr.bf16.mxu0 0
        %1029 = vmatpush1.bf16.msra.mxu0 0
        %1030 = vmatprep.subr.bf16.mxu0 0
        %1031 = vmatpush1.bf16.msra.mxu0 0
        %1032 = vmatprep.subr.bf16.mxu0 0
        %1033 = vmatpush1.bf16.msra.mxu0 0
        %1034 = vmatprep.mubr.bf16.mxu0 0
        %1035 = vmatmul.mubr.bf16.gmra.mrb[0].mxu0 %v997
        %v1036 = vpop.f32.mrb[0].mxu0
        %v1037 = vadd.f32 0.0, %v1036
        %v1038 = vpop.f32.mrb[0].mxu0
        %v1039 = vpop.f32.mrb[0].mxu0
        %v1040 = vpop.f32.mrb[0].mxu0
        %1041 = vdwg.mxu0
        %v1043 = vsel %vm888, %v947, 0
        %v1046 = vsel %vm952, %v700, 0
        %1048 = vmatprep.subr.bf16.mxu0 0
        %1049 = vmatpush1.bf16.msra.mxu0 %v1046
        %1050 = vmatprep.subr.bf16.mxu0 0
        %1051 = vmatpush1.bf16.msra.mxu0 0
        %1052 = vmatprep.subr.bf16.mxu0 0
        %1053 = vmatpush1.bf16.msra.mxu0 0
        %1054 = vmatprep.subr.bf16.mxu0 0
        %1055 = vmatpush1.bf16.msra.mxu0 0
        %1056 = vmatprep.subr.bf16.mxu0 0
        %1057 = vmatpush1.bf16.msra.mxu0 0
        %1058 = vmatprep.subr.bf16.mxu0 0
        %1059 = vmatpush1.bf16.msra.mxu0 0
        %1060 = vmatprep.subr.bf16.mxu0 0
        %1061 = vmatpush1.bf16.msra.mxu0 0
        %1062 = vmatprep.subr.bf16.mxu0 0
        %1063 = vmatpush1.bf16.msra.mxu0 0
        %1064 = vmatprep.subr.bf16.mxu0 0
        %1065 = vmatpush1.bf16.msra.mxu0 0
        %1066 = vmatprep.subr.bf16.mxu0 0
        %1067 = vmatpush1.bf16.msra.mxu0 0
        %1068 = vmatprep.subr.bf16.mxu0 0
        %1069 = vmatpush1.bf16.msra.mxu0 0
        %1070 = vmatprep.subr.bf16.mxu0 0
        %1071 = vmatpush1.bf16.msra.mxu0 0
        %1072 = vmatprep.subr.bf16.mxu0 0
        %1073 = vmatpush1.bf16.msra.mxu0 0
        %1074 = vmatprep.subr.bf16.mxu0 0
        %1075 = vmatpush1.bf16.msra.mxu0 0
        %1076 = vmatprep.subr.bf16.mxu0 0
        %1077 = vmatpush1.bf16.msra.mxu0 0
        %1078 = vmatprep.subr.bf16.mxu0 0
        %1079 = vmatpush1.bf16.msra.mxu0 0
        %1080 = vmatprep.mubr.bf16.mxu0 0
        %1081 = vmatmul.mubr.bf16.gmra.mrb[0].mxu0 %v1043
        %v1082 = vpop.f32.mrb[0].mxu0
        %v1083 = vadd.f32 0.0, %v1082
        %v1084 = vpop.f32.mrb[0].mxu0
        %v1085 = vpop.f32.mrb[0].mxu0
        %v1086 = vpop.f32.mrb[0].mxu0
        %1087 = vdwg.mxu0
        %v1089 = vsel %vm888, %v948, 0
        %v1092 = vsel %vm952, %v702, 0
        %1094 = vmatprep.subr.bf16.mxu0 0
        %1095 = vmatpush1.bf16.msra.mxu0 %v1092
        %1096 = vmatprep.subr.bf16.mxu0 0
        %1097 = vmatpush1.bf16.msra.mxu0 0
        %1098 = vmatprep.subr.bf16.mxu0 0
        %1099 = vmatpush1.bf16.msra.mxu0 0
        %1100 = vmatprep.subr.bf16.mxu0 0
        %1101 = vmatpush1.bf16.msra.mxu0 0
        %1102 = vmatprep.subr.bf16.mxu0 0
        %1103 = vmatpush1.bf16.msra.mxu0 0
        %1104 = vmatprep.subr.bf16.mxu0 0
        %1105 = vmatpush1.bf16.msra.mxu0 0
        %1106 = vmatprep.subr.bf16.mxu0 0
        %1107 = vmatpush1.bf16.msra.mxu0 0
        %1108 = vmatprep.subr.bf16.mxu0 0
        %1109 = vmatpush1.bf16.msra.mxu0 0
        %1110 = vmatprep.subr.bf16.mxu0 0
        %1111 = vmatpush1.bf16.msra.mxu0 0
        %1112 = vmatprep.subr.bf16.mxu0 0
        %1113 = vmatpush1.bf16.msra.mxu0 0
        %1114 = vmatprep.subr.bf16.mxu0 0
        %1115 = vmatpush1.bf16.msra.mxu0 0
        %1116 = vmatprep.subr.bf16.mxu0 0
        %1117 = vmatpush1.bf16.msra.mxu0 0
        %1118 = vmatprep.subr.bf16.mxu0 0
        %1119 = vmatpush1.bf16.msra.mxu0 0
        %1120 = vmatprep.subr.bf16.mxu0 0
        %1121 = vmatpush1.bf16.msra.mxu0 0
        %1122 = vmatprep.subr.bf16.mxu0 0
        %1123 = vmatpush1.bf16.msra.mxu0 0
        %1124 = vmatprep.subr.bf16.mxu0 0
        %1125 = vmatpush1.bf16.msra.mxu0 0
        %1126 = vmatprep.mubr.bf16.mxu0 0
        %1127 = vmatmul.mubr.bf16.gmra.mrb[0].mxu0 %v1089
        %v1128 = vpop.f32.mrb[0].mxu0
        %v1129 = vadd.f32 0.0, %v1128
        %v1130 = vpop.f32.mrb[0].mxu0
        %v1131 = vpop.f32.mrb[0].mxu0
        %v1132 = vpop.f32.mrb[0].mxu0
        %1133 = vdwg.mxu0
        %v1134 = vadd.f32 %v925, %v991
        %v1135 = vadd.f32 %v926, %v1037
        %v1136 = vadd.f32 %v927, %v1083
        %v1137 = vadd.f32 %v928, %v1129
        %v1138 = vrcp.pop %v941
        %v1139 = vrcp.pop %v942
        %v1140 = vrcp.pop %v943
        %v1141 = vrcp.pop %v944
        %v1142 = vmul.f32 %v1134, %v1138
        %v1143 = vmul.f32 %v1135, %v1139
        %v1144 = vmul.f32 %v1136, %v1140
        %v1145 = vmul.f32 %v1137, %v1141
        %v1146 = vpack.c.bf16 %v1142, %v1142
        %v1147 = vpack.c.bf16 %v1143, %v1143
        %v1148 = vpack.c.bf16 %v1144, %v1144
        %v1149 = vpack.c.bf16 %v1145, %v1145
        %v1150 = vld [vmem:[#allocation7] sm:$0xf]
        %v1151 = vld [vmem:[#allocation7 + $0x4] sm:$0xf]
        %v1152 = vld [vmem:[#allocation7 + $0x8] sm:$0xf]
        %v1153 = vld [vmem:[#allocation7 + $0xc] sm:$0xf]
        %v1154 = vld [vmem:[#allocation7 + $0x10] sm:$0xf]
        %v1155 = vld [vmem:[#allocation7 + $0x14] sm:$0xf]
        %v1156 = vld [vmem:[#allocation7 + $0x18] sm:$0xf]
        %v1157 = vld [vmem:[#allocation7 + $0x1c] sm:$0xf]
        %v1158 = vld [vmem:[#allocation7 + $0x20] sm:$0xf]
        %v1159 = vld [vmem:[#allocation7 + $0x24] sm:$0xf]
        %v1160 = vld [vmem:[#allocation7 + $0x28] sm:$0xf]
        %v1161 = vld [vmem:[#allocation7 + $0x2c] sm:$0xf]
        %v1162 = vld [vmem:[#allocation7 + $0x30] sm:$0xf]
        %v1163 = vld [vmem:[#allocation7 + $0x34] sm:$0xf]
        %v1164 = vld [vmem:[#allocation7 + $0x38] sm:$0xf]
        %v1165 = vld [vmem:[#allocation7 + $0x3c] sm:$0xf]
        %v1170 = vunpack.c.l.b16 %v1150
        %v1171 = vunpack.c.l.b16 %v1151
        %v1172 = vunpack.c.l.b16 %v1152
        %v1173 = vunpack.c.l.b16 %v1153
        %v1174 = vpack.c.b16 %v1171, %v1170
        %v1175 = vpack.c.b16 %v1173, %v1172
        %v1179 = vsel %vm703, %v1146, 0
        %1181 = vmatprep.subr.bf16.mxu0 0
        %1182 = vmatpush1.bf16.msra.mxu0 %v1174
        %1183 = vmatprep.subr.bf16.mxu0 0
        %1184 = vmatpush1.bf16.msra.mxu0 %v1175
        %1185 = vmatprep.subr.bf16.mxu0 0
        %1186 = vmatpush1.bf16.msra.mxu0 0
        %1187 = vmatprep.subr.bf16.mxu0 0
        %1188 = vmatpush1.bf16.msra.mxu0 0
        %1189 = vmatprep.subr.bf16.mxu0 0
        %1190 = vmatpush1.bf16.msra.mxu0 0
        %1191 = vmatprep.subr.bf16.mxu0 0
        %1192 = vmatpush1.bf16.msra.mxu0 0
        %1193 = vmatprep.subr.bf16.mxu0 0
        %1194 = vmatpush1.bf16.msra.mxu0 0
        %1195 = vmatprep.subr.bf16.mxu0 0
        %1196 = vmatpush1.bf16.msra.mxu0 0
        %1197 = vmatprep.subr.bf16.mxu0 0
        %1198 = vmatpush1.bf16.msra.mxu0 0
        %1199 = vmatprep.subr.bf16.mxu0 0
        %1200 = vmatpush1.bf16.msra.mxu0 0
        %1201 = vmatprep.subr.bf16.mxu0 0
        %1202 = vmatpush1.bf16.msra.mxu0 0
        %1203 = vmatprep.subr.bf16.mxu0 0
        %1204 = vmatpush1.bf16.msra.mxu0 0
        %1205 = vmatprep.subr.bf16.mxu0 0
        %1206 = vmatpush1.bf16.msra.mxu0 0
        %1207 = vmatprep.subr.bf16.mxu0 0
        %1208 = vmatpush1.bf16.msra.mxu0 0
        %1209 = vmatprep.subr.bf16.mxu0 0
        %1210 = vmatpush1.bf16.msra.mxu0 0
        %1211 = vmatprep.subr.bf16.mxu0 0
        %1212 = vmatpush1.bf16.msra.mxu0 0
        %1213 = vmatprep.mubr.bf16.mxu0 0
        %1214 = vmatmul.mubr.bf16.gmra.mrb[0].mxu0 %v1179
        %v1215 = vpop.f32.mrb[0].mxu0
        %v1216 = vadd.f32 0.0, %v1215
        %v1217 = vpop.f32.mrb[0].mxu0
        %v1218 = vpop.f32.mrb[0].mxu0
        %v1219 = vpop.f32.mrb[0].mxu0
        %1220 = vdwg.mxu0
        %v1225 = vunpack.c.l.b16 %v1154
        %v1226 = vunpack.c.l.b16 %v1155
        %v1227 = vunpack.c.l.b16 %v1156
        %v1228 = vunpack.c.l.b16 %v1157
        %v1229 = vpack.c.b16 %v1226, %v1225
        %v1230 = vpack.c.b16 %v1228, %v1227
        %v1234 = vsel %vm703, %v1147, 0
        %1236 = vmatprep.subr.bf16.mxu0 0
        %1237 = vmatpush1.bf16.msra.mxu0 %v1229
        %1238 = vmatprep.subr.bf16.mxu0 0
        %1239 = vmatpush1.bf16.msra.mxu0 %v1230
        %1240 = vmatprep.subr.bf16.mxu0 0
        %1241 = vmatpush1.bf16.msra.mxu0 0
        %1242 = vmatprep.subr.bf16.mxu0 0
        %1243 = vmatpush1.bf16.msra.mxu0 0
        %1244 = vmatprep.subr.bf16.mxu0 0
        %1245 = vmatpush1.bf16.msra.mxu0 0
        %1246 = vmatprep.subr.bf16.mxu0 0
        %1247 = vmatpush1.bf16.msra.mxu0 0
        %1248 = vmatprep.subr.bf16.mxu0 0
        %1249 = vmatpush1.bf16.msra.mxu0 0
        %1250 = vmatprep.subr.bf16.mxu0 0
        %1251 = vmatpush1.bf16.msra.mxu0 0
        %1252 = vmatprep.subr.bf16.mxu0 0
        %1253 = vmatpush1.bf16.msra.mxu0 0
        %1254 = vmatprep.subr.bf16.mxu0 0
        %1255 = vmatpush1.bf16.msra.mxu0 0
        %1256 = vmatprep.subr.bf16.mxu0 0
        %1257 = vmatpush1.bf16.msra.mxu0 0
        %1258 = vmatprep.subr.bf16.mxu0 0
        %1259 = vmatpush1.bf16.msra.mxu0 0
        %1260 = vmatprep.subr.bf16.mxu0 0
        %1261 = vmatpush1.bf16.msra.mxu0 0
        %1262 = vmatprep.subr.bf16.mxu0 0
        %1263 = vmatpush1.bf16.msra.mxu0 0
        %1264 = vmatprep.subr.bf16.mxu0 0
        %1265 = vmatpush1.bf16.msra.mxu0 0
        %1266 = vmatprep.subr.bf16.mxu0 0
        %1267 = vmatpush1.bf16.msra.mxu0 0
        %1268 = vmatprep.mubr.bf16.mxu0 0
        %1269 = vmatmul.mubr.bf16.gmra.mrb[0].mxu0 %v1234
        %v1270 = vpop.f32.mrb[0].mxu0
        %v1271 = vadd.f32 0.0, %v1270
        %v1272 = vpop.f32.mrb[0].mxu0
        %v1273 = vpop.f32.mrb[0].mxu0
        %v1274 = vpop.f32.mrb[0].mxu0
        %1275 = vdwg.mxu0
        %v1280 = vunpack.c.l.b16 %v1158
        %v1281 = vunpack.c.l.b16 %v1159
        %v1282 = vunpack.c.l.b16 %v1160
        %v1283 = vunpack.c.l.b16 %v1161
        %v1284 = vpack.c.b16 %v1281, %v1280
        %v1285 = vpack.c.b16 %v1283, %v1282
        %v1289 = vsel %vm703, %v1148, 0
        %1291 = vmatprep.subr.bf16.mxu0 0
        %1292 = vmatpush1.bf16.msra.mxu0 %v1284
        %1293 = vmatprep.subr.bf16.mxu0 0
        %1294 = vmatpush1.bf16.msra.mxu0 %v1285
        %1295 = vmatprep.subr.bf16.mxu0 0
        %1296 = vmatpush1.bf16.msra.mxu0 0
        %1297 = vmatprep.subr.bf16.mxu0 0
        %1298 = vmatpush1.bf16.msra.mxu0 0
        %1299 = vmatprep.subr.bf16.mxu0 0
        %1300 = vmatpush1.bf16.msra.mxu0 0
        %1301 = vmatprep.subr.bf16.mxu0 0
        %1302 = vmatpush1.bf16.msra.mxu0 0
        %1303 = vmatprep.subr.bf16.mxu0 0
        %1304 = vmatpush1.bf16.msra.mxu0 0
        %1305 = vmatprep.subr.bf16.mxu0 0
        %1306 = vmatpush1.bf16.msra.mxu0 0
        %1307 = vmatprep.subr.bf16.mxu0 0
        %1308 = vmatpush1.bf16.msra.mxu0 0
        %1309 = vmatprep.subr.bf16.mxu0 0
        %1310 = vmatpush1.bf16.msra.mxu0 0
        %1311 = vmatprep.subr.bf16.mxu0 0
        %1312 = vmatpush1.bf16.msra.mxu0 0
        %1313 = vmatprep.subr.bf16.mxu0 0
        %1314 = vmatpush1.bf16.msra.mxu0 0
        %1315 = vmatprep.subr.bf16.mxu0 0
        %1316 = vmatpush1.bf16.msra.mxu0 0
        %1317 = vmatprep.subr.bf16.mxu0 0
        %1318 = vmatpush1.bf16.msra.mxu0 0
        %1319 = vmatprep.subr.bf16.mxu0 0
        %1320 = vmatpush1.bf16.msra.mxu0 0
        %1321 = vmatprep.subr.bf16.mxu0 0
        %1322 = vmatpush1.bf16.msra.mxu0 0
        %1323 = vmatprep.mubr.bf16.mxu0 0
        %1324 = vmatmul.mubr.bf16.gmra.mrb[0].mxu0 %v1289
        %v1325 = vpop.f32.mrb[0].mxu0
        %v1326 = vadd.f32 0.0, %v1325
        %v1327 = vpop.f32.mrb[0].mxu0
        %v1328 = vpop.f32.mrb[0].mxu0
        %v1329 = vpop.f32.mrb[0].mxu0
        %1330 = vdwg.mxu0
        %v1335 = vunpack.c.l.b16 %v1162
        %v1336 = vunpack.c.l.b16 %v1163
        %v1337 = vunpack.c.l.b16 %v1164
        %v1338 = vunpack.c.l.b16 %v1165
        %v1339 = vpack.c.b16 %v1336, %v1335
        %v1340 = vpack.c.b16 %v1338, %v1337
        %v1344 = vsel %vm703, %v1149, 0
        %1346 = vmatprep.subr.bf16.mxu0 0
        %1347 = vmatpush1.bf16.msra.mxu0 %v1339
        %1348 = vmatprep.subr.bf16.mxu0 0
        %1349 = vmatpush1.bf16.msra.mxu0 %v1340
        %1350 = vmatprep.subr.bf16.mxu0 0
        %1351 = vmatpush1.bf16.msra.mxu0 0
        %1352 = vmatprep.subr.bf16.mxu0 0
        %1353 = vmatpush1.bf16.msra.mxu0 0
        %1354 = vmatprep.subr.bf16.mxu0 0
        %1355 = vmatpush1.bf16.msra.mxu0 0
        %1356 = vmatprep.subr.bf16.mxu0 0
        %1357 = vmatpush1.bf16.msra.mxu0 0
        %1358 = vmatprep.subr.bf16.mxu0 0
        %1359 = vmatpush1.bf16.msra.mxu0 0
        %1360 = vmatprep.subr.bf16.mxu0 0
        %1361 = vmatpush1.bf16.msra.mxu0 0
        %1362 = vmatprep.subr.bf16.mxu0 0
        %1363 = vmatpush1.bf16.msra.mxu0 0
        %1364 = vmatprep.subr.bf16.mxu0 0
        %1365 = vmatpush1.bf16.msra.mxu0 0
        %1366 = vmatprep.subr.bf16.mxu0 0
        %1367 = vmatpush1.bf16.msra.mxu0 0
        %1368 = vmatprep.subr.bf16.mxu0 0
        %1369 = vmatpush1.bf16.msra.mxu0 0
        %1370 = vmatprep.subr.bf16.mxu0 0
        %1371 = vmatpush1.bf16.msra.mxu0 0
        %1372 = vmatprep.subr.bf16.mxu0 0
        %1373 = vmatpush1.bf16.msra.mxu0 0
        %1374 = vmatprep.subr.bf16.mxu0 0
        %1375 = vmatpush1.bf16.msra.mxu0 0
        %1376 = vmatprep.subr.bf16.mxu0 0
        %1377 = vmatpush1.bf16.msra.mxu0 0
        %1378 = vmatprep.mubr.bf16.mxu0 0
        %1379 = vmatmul.mubr.bf16.gmra.mrb[0].mxu0 %v1344
        %v1380 = vpop.f32.mrb[0].mxu0
        %v1381 = vadd.f32 0.0, %v1380
        %v1382 = vpop.f32.mrb[0].mxu0
        %v1383 = vpop.f32.mrb[0].mxu0
        %v1384 = vpop.f32.mrb[0].mxu0
        %1385 = vdwg.mxu0
        %v1386 = vadd.f32 %v1216, %v1271
        %v1387 = vadd.f32 %v1386, %v1326
        %v1388 = vadd.f32 %v1387, %v1381
        %v1389 = vld [vmem:[%s4] sm:$0x1]
        %v1391 = vlaneseq
        %v1392 = vshrl.u32 %v1391, 7
        %v1393 = vsub.s32 0, %v1392
        %v1394 = vrot.slane %v1389, %v1393
        %v1396 = vadd.f32 %v1388, %v1394
        %v1397 = vadd.f32 %v419, %v1396
        %1398 = vadd.xlane.f32.xlu0 %v1397
        %v1399 = vpop.xlane.xlu0 %1398
        %v1400 = vmul.f32 %v1399, %v410
        %v1401 = vsub.f32 %v1397, %v1400
        %v1402 = vmul.f32 %v1401, %v1401
        %1403 = vadd.xlane.f32.xlu0 %v1402
        %v1404 = vpop.xlane.xlu0 %1403
        %v1405 = vmul.f32 %v1404, %v410
        %v1406 = vadd.f32 %v1405, 1e-06
        %v1407 = vrsqrt.pop %v1406
        %v1408 = vmul.f32 %v1401, %v1407
        %v1409 = vpack.c.bf16 %v1408, %v1408
        %v1410 = vld [vmem:[#allocation8] sm:$0xff]
        %v1411 = vld [vmem:[#allocation8 + $0x8] sm:$0xff]
        %v1412 = vld [vmem:[#allocation8 + $0x10] sm:$0xff]
        %v1413 = vld [vmem:[#allocation8 + $0x18] sm:$0xff]
        %v1414 = vld [vmem:[#allocation8 + $0x20] sm:$0xff]
        %v1415 = vld [vmem:[#allocation8 + $0x28] sm:$0xff]
        %v1416 = vld [vmem:[#allocation8 + $0x30] sm:$0xff]
        %v1417 = vld [vmem:[#allocation8 + $0x38] sm:$0xff]
        %v1418 = vld [vmem:[#allocation8 + $0x40] sm:$0xff]
        %v1419 = vld [vmem:[#allocation8 + $0x48] sm:$0xff]
        %v1420 = vld [vmem:[#allocation8 + $0x50] sm:$0xff]
        %v1421 = vld [vmem:[#allocation8 + $0x58] sm:$0xff]
        %v1422 = vld [vmem:[#allocation8 + $0x60] sm:$0xff]
        %v1423 = vld [vmem:[#allocation8 + $0x68] sm:$0xff]
        %v1424 = vld [vmem:[#allocation8 + $0x70] sm:$0xff]
        %v1425 = vld [vmem:[#allocation8 + $0x78] sm:$0xff]
        %v1426 = vld [vmem:[#allocation8 + $0x80] sm:$0xff]
        %v1427 = vld [vmem:[#allocation8 + $0x88] sm:$0xff]
        %v1428 = vld [vmem:[#allocation8 + $0x90] sm:$0xff]
        %v1429 = vld [vmem:[#allocation8 + $0x98] sm:$0xff]
        %v1430 = vld [vmem:[#allocation8 + $0xa0] sm:$0xff]
        %v1431 = vld [vmem:[#allocation8 + $0xa8] sm:$0xff]
        %v1432 = vld [vmem:[#allocation8 + $0xb0] sm:$0xff]
        %v1433 = vld [vmem:[#allocation8 + $0xb8] sm:$0xff]
        %v1434 = vld [vmem:[#allocation8 + $0xc0] sm:$0xff]
        %v1435 = vld [vmem:[#allocation8 + $0xc8] sm:$0xff]
        %v1436 = vld [vmem:[#allocation8 + $0xd0] sm:$0xff]
        %v1437 = vld [vmem:[#allocation8 + $0xd8] sm:$0xff]
        %v1438 = vld [vmem:[#allocation8 + $0xe0] sm:$0xff]
        %v1439 = vld [vmem:[#allocation8 + $0xe8] sm:$0xff]
        %v1440 = vld [vmem:[#allocation8 + $0xf0] sm:$0xff]
        %v1441 = vld [vmem:[#allocation8 + $0xf8] sm:$0xff]
        %v1442 = vld [vmem:[%s6] sm:$0xf]
        %v1444 = vlaneseq
        %v1445 = vshrl.u32 %v1444, 7
        %v1446 = vsub.s32 0, %v1445
        %v1447 = vrot.slane %v1442, %v1446
        %v1448 = vlaneseq
        %v1449 = vshrl.u32 %v1448, 7
        %v1450 = vsub.s32 1, %v1449
        %v1451 = vrot.slane %v1442, %v1450
        %v1452 = vlaneseq
        %v1453 = vshrl.u32 %v1452, 7
        %v1454 = vsub.s32 2, %v1453
        %v1455 = vrot.slane %v1442, %v1454
        %v1456 = vlaneseq
        %v1457 = vshrl.u32 %v1456, 7
        %v1458 = vsub.s32 3, %v1457
        %v1459 = vrot.slane %v1442, %v1458
        %v1496 = vunpack.c.l.b16 %v1410
        %v1497 = vunpack.c.h.b16 %v1410
        %v1498 = vunpack.c.l.b16 %v1411
        %v1499 = vunpack.c.h.b16 %v1411
        %v1500 = vunpack.c.l.b16 %v1412
        %v1501 = vunpack.c.h.b16 %v1412
        %v1502 = vunpack.c.l.b16 %v1413
        %v1503 = vunpack.c.h.b16 %v1413
        %v1504 = vunpack.c.l.b16 %v1414
        %v1505 = vunpack.c.h.b16 %v1414
        %v1506 = vunpack.c.l.b16 %v1415
        %v1507 = vunpack.c.h.b16 %v1415
        %v1508 = vunpack.c.l.b16 %v1416
        %v1509 = vunpack.c.h.b16 %v1416
        %v1510 = vunpack.c.l.b16 %v1417
        %v1511 = vunpack.c.h.b16 %v1417
        %v1512 = vunpack.c.l.b16 %v1418
        %v1513 = vunpack.c.h.b16 %v1418
        %v1514 = vunpack.c.l.b16 %v1419
        %v1515 = vunpack.c.h.b16 %v1419
        %v1516 = vunpack.c.l.b16 %v1420
        %v1517 = vunpack.c.h.b16 %v1420
        %v1518 = vunpack.c.l.b16 %v1421
        %v1519 = vunpack.c.h.b16 %v1421
        %v1520 = vunpack.c.l.b16 %v1422
        %v1521 = vunpack.c.h.b16 %v1422
        %v1522 = vunpack.c.l.b16 %v1423
        %v1523 = vunpack.c.h.b16 %v1423
        %v1524 = vunpack.c.l.b16 %v1424
        %v1525 = vunpack.c.h.b16 %v1424
        %v1526 = vunpack.c.l.b16 %v1425
        %v1527 = vunpack.c.h.b16 %v1425
        %v1528 = vunpack.c.l.b16 %v1426
        %v1529 = vunpack.c.h.b16 %v1426
        %v1530 = vunpack.c.l.b16 %v1427
        %v1531 = vunpack.c.h.b16 %v1427
        %v1532 = vunpack.c.l.b16 %v1428
        %v1533 = vunpack.c.h.b16 %v1428
        %v1534 = vunpack.c.l.b16 %v1429
        %v1535 = vunpack.c.h.b16 %v1429
        %v1536 = vunpack.c.l.b16 %v1430
        %v1537 = vunpack.c.h.b16 %v1430
        %v1538 = vunpack.c.l.b16 %v1431
        %v1539 = vunpack.c.h.b16 %v1431
        %v1540 = vunpack.c.l.b16 %v1432
        %v1541 = vunpack.c.h.b16 %v1432
        %v1542 = vunpack.c.l.b16 %v1433
        %v1543 = vunpack.c.h.b16 %v1433
        %v1544 = vunpack.c.l.b16 %v1434
        %v1545 = vunpack.c.h.b16 %v1434
        %v1546 = vunpack.c.l.b16 %v1435
        %v1547 = vunpack.c.h.b16 %v1435
        %v1548 = vunpack.c.l.b16 %v1436
        %v1549 = vunpack.c.h.b16 %v1436
        %v1550 = vunpack.c.l.b16 %v1437
        %v1551 = vunpack.c.h.b16 %v1437
        %v1552 = vunpack.c.l.b16 %v1438
        %v1553 = vunpack.c.h.b16 %v1438
        %v1554 = vunpack.c.l.b16 %v1439
        %v1555 = vunpack.c.h.b16 %v1439
        %v1556 = vunpack.c.l.b16 %v1440
        %v1557 = vunpack.c.h.b16 %v1440
        %v1558 = vunpack.c.l.b16 %v1441
        %v1559 = vunpack.c.h.b16 %v1441
        %v1560 = vpack.c.b16 %v1500, %v1496
        %v1561 = vpack.c.b16 %v1501, %v1497
        %v1562 = vpack.c.b16 %v1502, %v1498
        %v1563 = vpack.c.b16 %v1503, %v1499
        %v1564 = vpack.c.b16 %v1508, %v1504
        %v1565 = vpack.c.b16 %v1509, %v1505
        %v1566 = vpack.c.b16 %v1510, %v1506
        %v1567 = vpack.c.b16 %v1511, %v1507
        %v1568 = vpack.c.b16 %v1516, %v1512
        %v1569 = vpack.c.b16 %v1517, %v1513
        %v1570 = vpack.c.b16 %v1518, %v1514
        %v1571 = vpack.c.b16 %v1519, %v1515
        %v1572 = vpack.c.b16 %v1524, %v1520
        %v1573 = vpack.c.b16 %v1525, %v1521
        %v1574 = vpack.c.b16 %v1526, %v1522
        %v1575 = vpack.c.b16 %v1527, %v1523
        %v1576 = vpack.c.b16 %v1532, %v1528
        %v1577 = vpack.c.b16 %v1533, %v1529
        %v1578 = vpack.c.b16 %v1534, %v1530
        %v1579 = vpack.c.b16 %v1535, %v1531
        %v1580 = vpack.c.b16 %v1540, %v1536
        %v1581 = vpack.c.b16 %v1541, %v1537
        %v1582 = vpack.c.b16 %v1542, %v1538
        %v1583 = vpack.c.b16 %v1543, %v1539
        %v1584 = vpack.c.b16 %v1548, %v1544
        %v1585 = vpack.c.b16 %v1549, %v1545
        %v1586 = vpack.c.b16 %v1550, %v1546
        %v1587 = vpack.c.b16 %v1551, %v1547
        %v1588 = vpack.c.b16 %v1556, %v1552
        %v1589 = vpack.c.b16 %v1557, %v1553
        %v1590 = vpack.c.b16 %v1558, %v1554
        %v1591 = vpack.c.b16 %v1559, %v1555
        %1624 = vmatprep.subr.bf16.mxu0 %v1561
        %1625 = vmatpush1.bf16.msra.mxu0 %v1560
        %1626 = vmatprep.subr.bf16.mxu0 %v1565
        %1627 = vmatpush1.bf16.msra.mxu0 %v1564
        %1628 = vmatprep.subr.bf16.mxu0 %v1569
        %1629 = vmatpush1.bf16.msra.mxu0 %v1568
        %1630 = vmatprep.subr.bf16.mxu0 %v1573
        %1631 = vmatpush1.bf16.msra.mxu0 %v1572
        %1632 = vmatprep.subr.bf16.mxu0 %v1577
        %1633 = vmatpush1.bf16.msra.mxu0 %v1576
        %1634 = vmatprep.subr.bf16.mxu0 %v1581
        %1635 = vmatpush1.bf16.msra.mxu0 %v1580
        %1636 = vmatprep.subr.bf16.mxu0 %v1585
        %1637 = vmatpush1.bf16.msra.mxu0 %v1584
        %1638 = vmatprep.subr.bf16.mxu0 %v1589
        %1639 = vmatpush1.bf16.msra.mxu0 %v1588
        %1640 = vmatprep.subr.bf16.mxu0 0
        %1641 = vmatpush1.bf16.msra.mxu0 0
        %1642 = vmatprep.subr.bf16.mxu0 0
        %1643 = vmatpush1.bf16.msra.mxu0 0
        %1644 = vmatprep.subr.bf16.mxu0 0
        %1645 = vmatpush1.bf16.msra.mxu0 0
        %1646 = vmatprep.subr.bf16.mxu0 0
        %1647 = vmatpush1.bf16.msra.mxu0 0
        %1648 = vmatprep.subr.bf16.mxu0 0
        %1649 = vmatpush1.bf16.msra.mxu0 0
        %1650 = vmatprep.subr.bf16.mxu0 0
        %1651 = vmatpush1.bf16.msra.mxu0 0
        %1652 = vmatprep.subr.bf16.mxu0 0
        %1653 = vmatpush1.bf16.msra.mxu0 0
        %1654 = vmatprep.subr.bf16.mxu0 0
        %1655 = vmatpush1.bf16.msra.mxu0 0
        %1656 = vmatprep.mubr.bf16.mxu0 0
        %1657 = vmatmul.mubr.bf16.gmra.mrb[0].mxu0 %v1409
        %v1658 = vpop.f32.mrb[0].mxu0
        %v1659 = vadd.f32 %v1447, %v1658
        %v1660 = vpop.f32.mrb[0].mxu0
        %v1661 = vadd.f32 %v1451, %v1660
        %v1662 = vpop.f32.mrb[0].mxu0
        %v1663 = vpop.f32.mrb[0].mxu0
        %1664 = vdwg.mxu0
        %1665 = vmatprep.subr.bf16.mxu0 %v1563
        %1666 = vmatpush1.bf16.msra.mxu0 %v1562
        %1667 = vmatprep.subr.bf16.mxu0 %v1567
        %1668 = vmatpush1.bf16.msra.mxu0 %v1566
        %1669 = vmatprep.subr.bf16.mxu0 %v1571
        %1670 = vmatpush1.bf16.msra.mxu0 %v1570
        %1671 = vmatprep.subr.bf16.mxu0 %v1575
        %1672 = vmatpush1.bf16.msra.mxu0 %v1574
        %1673 = vmatprep.subr.bf16.mxu0 %v1579
        %1674 = vmatpush1.bf16.msra.mxu0 %v1578
        %1675 = vmatprep.subr.bf16.mxu0 %v1583
        %1676 = vmatpush1.bf16.msra.mxu0 %v1582
        %1677 = vmatprep.subr.bf16.mxu0 %v1587
        %1678 = vmatpush1.bf16.msra.mxu0 %v1586
        %1679 = vmatprep.subr.bf16.mxu0 %v1591
        %1680 = vmatpush1.bf16.msra.mxu0 %v1590
        %1681 = vmatprep.subr.bf16.mxu0 0
        %1682 = vmatpush1.bf16.msra.mxu0 0
        %1683 = vmatprep.subr.bf16.mxu0 0
        %1684 = vmatpush1.bf16.msra.mxu0 0
        %1685 = vmatprep.subr.bf16.mxu0 0
        %1686 = vmatpush1.bf16.msra.mxu0 0
        %1687 = vmatprep.subr.bf16.mxu0 0
        %1688 = vmatpush1.bf16.msra.mxu0 0
        %1689 = vmatprep.subr.bf16.mxu0 0
        %1690 = vmatpush1.bf16.msra.mxu0 0
        %1691 = vmatprep.subr.bf16.mxu0 0
        %1692 = vmatpush1.bf16.msra.mxu0 0
        %1693 = vmatprep.subr.bf16.mxu0 0
        %1694 = vmatpush1.bf16.msra.mxu0 0
        %1695 = vmatprep.subr.bf16.mxu0 0
        %1696 = vmatpush1.bf16.msra.mxu0 0
        %1697 = vmatprep.mubr.bf16.mxu0 0
        %1698 = vmatmul.mubr.bf16.gmra.mrb[0].mxu0 %v1409
        %v1699 = vpop.f32.mrb[0].mxu0
        %v1700 = vadd.f32 %v1455, %v1699
        %v1701 = vpop.f32.mrb[0].mxu0
        %v1702 = vadd.f32 %v1459, %v1701
        %v1703 = vpop.f32.mrb[0].mxu0
        %v1704 = vpop.f32.mrb[0].mxu0
        %1705 = vdwg.mxu0
        %v1706 = vmul.f32 %v1659, 0.5
        %v1707 = vmul.f32 %v1661, 0.5
        %v1708 = vmul.f32 %v1700, 0.5
        %v1709 = vmul.f32 %v1702, 0.5
        %v1710 = vmul.f32 %v1659, 0.70710677
        %v1711 = vmul.f32 %v1661, 0.70710677
        %v1712 = vmul.f32 %v1700, 0.70710677
        %v1713 = vmul.f32 %v1702, 0.70710677
        %v1714 = vand.u32 2147483647, %v1710
        %v1715 = vand.u32 2147483647, %v1711
        %v1716 = vand.u32 2147483647, %v1712
        %v1717 = vand.u32 2147483647, %v1713
        %v1718 = vmul.f32 %v1714, 0.3275911
        %v1719 = vmul.f32 %v1715, 0.3275911
        %v1720 = vmul.f32 %v1716, 0.3275911
        %v1721 = vmul.f32 %v1717, 0.3275911
        %v1722 = vadd.f32 %v1718, 1.0
        %v1723 = vadd.f32 %v1719, 1.0
        %v1724 = vadd.f32 %v1720, 1.0
        %v1725 = vadd.f32 %v1721, 1.0
        %v1726 = vrcp.pop %v1722
        %v1727 = vmul.f32 1.0, %v1726
        %v1728 = vrcp.pop %v1723
        %v1729 = vmul.f32 1.0, %v1728
        %v1730 = vrcp.pop %v1724
        %v1731 = vmul.f32 1.0, %v1730
        %v1732 = vrcp.pop %v1725
        %v1733 = vmul.f32 1.0, %v1732
        %v1734 = vmul.f32 %v1727, 1.0614054
        %v1735 = vmul.f32 %v1729, 1.0614054
        %v1736 = vmul.f32 %v1731, 1.0614054
        %v1737 = vmul.f32 %v1733, 1.0614054
        %v1738 = vadd.f32 %v1734, -1.4531521
        %v1739 = vadd.f32 %v1735, -1.4531521
        %v1740 = vadd.f32 %v1736, -1.4531521
        %v1741 = vadd.f32 %v1737, -1.4531521
        %v1742 = vmul.f32 %v1738, %v1727
        %v1743 = vmul.f32 %v1739, %v1729
        %v1744 = vmul.f32 %v1740, %v1731
        %v1745 = vmul.f32 %v1741, %v1733
        %v1746 = vadd.f32 %v1742, 1.4214138
        %v1747 = vadd.f32 %v1743, 1.4214138
        %v1748 = vadd.f32 %v1744, 1.4214138
        %v1749 = vadd.f32 %v1745, 1.4214138
        %v1750 = vmul.f32 %v1746, %v1727
        %v1751 = vmul.f32 %v1747, %v1729
        %v1752 = vmul.f32 %v1748, %v1731
        %v1753 = vmul.f32 %v1749, %v1733
        %v1754 = vadd.f32 %v1750, -0.28449672
        %v1755 = vadd.f32 %v1751, -0.28449672
        %v1756 = vadd.f32 %v1752, -0.28449672
        %v1757 = vadd.f32 %v1753, -0.28449672
        %v1758 = vmul.f32 %v1754, %v1727
        %v1759 = vmul.f32 %v1755, %v1729
        %v1760 = vmul.f32 %v1756, %v1731
        %v1761 = vmul.f32 %v1757, %v1733
        %v1762 = vadd.f32 %v1758, 0.2548296
        %v1763 = vadd.f32 %v1759, 0.2548296
        %v1764 = vadd.f32 %v1760, 0.2548296
        %v1765 = vadd.f32 %v1761, 0.2548296
        %v1766 = vmul.f32 %v1762, %v1727
        %v1767 = vmul.f32 %v1763, %v1729
        %v1768 = vmul.f32 %v1764, %v1731
        %v1769 = vmul.f32 %v1765, %v1733
        %v1770 = vsub.f32 0.0, %v1714
        %v1771 = vsub.f32 0.0, %v1715
        %v1772 = vsub.f32 0.0, %v1716
        %v1773 = vsub.f32 0.0, %v1717
        %v1774 = vmul.f32 %v1770, %v1714
        %v1775 = vmul.f32 %v1771, %v1715
        %v1776 = vmul.f32 %v1772, %v1716
        %v1777 = vmul.f32 %v1773, %v1717
        %v1778 = vmul.f32 %v1774, 1.442695
        %v1779 = vpow.pop %v1778
        %v1780 = vmul.f32 %v1775, 1.442695
        %v1781 = vpow.pop %v1780
        %v1782 = vmul.f32 %v1776, 1.442695
        %v1783 = vpow.pop %v1782
        %v1784 = vmul.f32 %v1777, 1.442695
        %v1785 = vpow.pop %v1784
        %v1786 = vmul.f32 %v1766, %v1779
        %v1787 = vmul.f32 %v1767, %v1781
        %v1788 = vmul.f32 %v1768, %v1783
        %v1789 = vmul.f32 %v1769, %v1785
        %v1790 = vsub.f32 1.0, %v1786
        %v1791 = vsub.f32 1.0, %v1787
        %v1792 = vsub.f32 1.0, %v1788
        %v1793 = vsub.f32 1.0, %v1789
        %vm1794 = vcmp.ge.f32.partialorder %v1710, 0.0
        %vm1795 = vcmp.ge.f32.partialorder %v1711, 0.0
        %vm1796 = vcmp.ge.f32.partialorder %v1712, 0.0
        %vm1797 = vcmp.ge.f32.partialorder %v1713, 0.0
        %v1798 = vsub.f32 0.0, %v1790
        %v1799 = vsub.f32 0.0, %v1791
        %v1800 = vsub.f32 0.0, %v1792
        %v1801 = vsub.f32 0.0, %v1793
        %v1802 = vsel %vm1794, %v1790, %v1798
        %v1803 = vsel %vm1795, %v1791, %v1799
        %v1804 = vsel %vm1796, %v1792, %v1800
        %v1805 = vsel %vm1797, %v1793, %v1801
        %v1806 = vadd.f32 %v1802, 1.0
        %v1807 = vadd.f32 %v1803, 1.0
        %v1808 = vadd.f32 %v1804, 1.0
        %v1809 = vadd.f32 %v1805, 1.0
        %v1810 = vmul.f32 %v1706, %v1806
        %v1811 = vmul.f32 %v1707, %v1807
        %v1812 = vmul.f32 %v1708, %v1808
        %v1813 = vmul.f32 %v1709, %v1809
        %v1814 = vpack.c.bf16 %v1810, %v1810
        %v1815 = vpack.c.bf16 %v1811, %v1811
        %v1816 = vpack.c.bf16 %v1812, %v1812
        %v1817 = vpack.c.bf16 %v1813, %v1813
        %v1818 = vld [vmem:[#allocation10] sm:$0xf]
        %v1819 = vld [vmem:[#allocation10 + $0x4] sm:$0xf]
        %v1820 = vld [vmem:[#allocation10 + $0x8] sm:$0xf]
        %v1821 = vld [vmem:[#allocation10 + $0xc] sm:$0xf]
        %v1822 = vld [vmem:[#allocation10 + $0x10] sm:$0xf]
        %v1823 = vld [vmem:[#allocation10 + $0x14] sm:$0xf]
        %v1824 = vld [vmem:[#allocation10 + $0x18] sm:$0xf]
        %v1825 = vld [vmem:[#allocation10 + $0x1c] sm:$0xf]
        %v1826 = vld [vmem:[#allocation10 + $0x20] sm:$0xf]
        %v1827 = vld [vmem:[#allocation10 + $0x24] sm:$0xf]
        %v1828 = vld [vmem:[#allocation10 + $0x28] sm:$0xf]
        %v1829 = vld [vmem:[#allocation10 + $0x2c] sm:$0xf]
        %v1830 = vld [vmem:[#allocation10 + $0x30] sm:$0xf]
        %v1831 = vld [vmem:[#allocation10 + $0x34] sm:$0xf]
        %v1832 = vld [vmem:[#allocation10 + $0x38] sm:$0xf]
        %v1833 = vld [vmem:[#allocation10 + $0x3c] sm:$0xf]
        %v1834 = vld [vmem:[#allocation10 + $0x40] sm:$0xf]
        %v1835 = vld [vmem:[#allocation10 + $0x44] sm:$0xf]
        %v1836 = vld [vmem:[#allocation10 + $0x48] sm:$0xf]
        %v1837 = vld [vmem:[#allocation10 + $0x4c] sm:$0xf]
        %v1838 = vld [vmem:[#allocation10 + $0x50] sm:$0xf]
        %v1839 = vld [vmem:[#allocation10 + $0x54] sm:$0xf]
        %v1840 = vld [vmem:[#allocation10 + $0x58] sm:$0xf]
        %v1841 = vld [vmem:[#allocation10 + $0x5c] sm:$0xf]
        %v1842 = vld [vmem:[#allocation10 + $0x60] sm:$0xf]
        %v1843 = vld [vmem:[#allocation10 + $0x64] sm:$0xf]
        %v1844 = vld [vmem:[#allocation10 + $0x68] sm:$0xf]
        %v1845 = vld [vmem:[#allocation10 + $0x6c] sm:$0xf]
        %v1846 = vld [vmem:[#allocation10 + $0x70] sm:$0xf]
        %v1847 = vld [vmem:[#allocation10 + $0x74] sm:$0xf]
        %v1848 = vld [vmem:[#allocation10 + $0x78] sm:$0xf]
        %v1849 = vld [vmem:[#allocation10 + $0x7c] sm:$0xf]
        %v1850 = vld [vmem:[#allocation10 + $0x80] sm:$0xf]
        %v1851 = vld [vmem:[#allocation10 + $0x84] sm:$0xf]
        %v1852 = vld [vmem:[#allocation10 + $0x88] sm:$0xf]
        %v1853 = vld [vmem:[#allocation10 + $0x8c] sm:$0xf]
        %v1854 = vld [vmem:[#allocation10 + $0x90] sm:$0xf]
        %v1855 = vld [vmem:[#allocation10 + $0x94] sm:$0xf]
        %v1856 = vld [vmem:[#allocation10 + $0x98] sm:$0xf]
        %v1857 = vld [vmem:[#allocation10 + $0x9c] sm:$0xf]
        %v1858 = vld [vmem:[#allocation10 + $0xa0] sm:$0xf]
        %v1859 = vld [vmem:[#allocation10 + $0xa4] sm:$0xf]
        %v1860 = vld [vmem:[#allocation10 + $0xa8] sm:$0xf]
        %v1861 = vld [vmem:[#allocation10 + $0xac] sm:$0xf]
        %v1862 = vld [vmem:[#allocation10 + $0xb0] sm:$0xf]
        %v1863 = vld [vmem:[#allocation10 + $0xb4] sm:$0xf]
        %v1864 = vld [vmem:[#allocation10 + $0xb8] sm:$0xf]
        %v1865 = vld [vmem:[#allocation10 + $0xbc] sm:$0xf]
        %v1866 = vld [vmem:[#allocation10 + $0xc0] sm:$0xf]
        %v1867 = vld [vmem:[#allocation10 + $0xc4] sm:$0xf]
        %v1868 = vld [vmem:[#allocation10 + $0xc8] sm:$0xf]
        %v1869 = vld [vmem:[#allocation10 + $0xcc] sm:$0xf]
        %v1870 = vld [vmem:[#allocation10 + $0xd0] sm:$0xf]
        %v1871 = vld [vmem:[#allocation10 + $0xd4] sm:$0xf]
        %v1872 = vld [vmem:[#allocation10 + $0xd8] sm:$0xf]
        %v1873 = vld [vmem:[#allocation10 + $0xdc] sm:$0xf]
        %v1874 = vld [vmem:[#allocation10 + $0xe0] sm:$0xf]
        %v1875 = vld [vmem:[#allocation10 + $0xe4] sm:$0xf]
        %v1876 = vld [vmem:[#allocation10 + $0xe8] sm:$0xf]
        %v1877 = vld [vmem:[#allocation10 + $0xec] sm:$0xf]
        %v1878 = vld [vmem:[#allocation10 + $0xf0] sm:$0xf]
        %v1879 = vld [vmem:[#allocation10 + $0xf4] sm:$0xf]
        %v1880 = vld [vmem:[#allocation10 + $0xf8] sm:$0xf]
        %v1881 = vld [vmem:[#allocation10 + $0xfc] sm:$0xf]
        %v1882 = vld [vmem:[%s8] sm:$0x1]
        %v1884 = vlaneseq
        %v1885 = vshrl.u32 %v1884, 7
        %v1886 = vsub.s32 0, %v1885
        %v1887 = vrot.slane %v1882, %v1886
        %v1953 = vunpack.c.l.b16 %v1818
        %v1954 = vunpack.c.l.b16 %v1819
        %v1955 = vunpack.c.l.b16 %v1820
        %v1956 = vunpack.c.l.b16 %v1821
        %v1957 = vunpack.c.l.b16 %v1822
        %v1958 = vunpack.c.l.b16 %v1823
        %v1959 = vunpack.c.l.b16 %v1824
        %v1960 = vunpack.c.l.b16 %v1825
        %v1961 = vunpack.c.l.b16 %v1826
        %v1962 = vunpack.c.l.b16 %v1827
        %v1963 = vunpack.c.l.b16 %v1828
        %v1964 = vunpack.c.l.b16 %v1829
        %v1965 = vunpack.c.l.b16 %v1830
        %v1966 = vunpack.c.l.b16 %v1831
        %v1967 = vunpack.c.l.b16 %v1832
        %v1968 = vunpack.c.l.b16 %v1833
        %v1969 = vunpack.c.l.b16 %v1834
        %v1970 = vunpack.c.l.b16 %v1835
        %v1971 = vunpack.c.l.b16 %v1836
        %v1972 = vunpack.c.l.b16 %v1837
        %v1973 = vunpack.c.l.b16 %v1838
        %v1974 = vunpack.c.l.b16 %v1839
        %v1975 = vunpack.c.l.b16 %v1840
        %v1976 = vunpack.c.l.b16 %v1841
        %v1977 = vunpack.c.l.b16 %v1842
        %v1978 = vunpack.c.l.b16 %v1843
        %v1979 = vunpack.c.l.b16 %v1844
        %v1980 = vunpack.c.l.b16 %v1845
        %v1981 = vunpack.c.l.b16 %v1846
        %v1982 = vunpack.c.l.b16 %v1847
        %v1983 = vunpack.c.l.b16 %v1848
        %v1984 = vunpack.c.l.b16 %v1849
        %v1985 = vunpack.c.l.b16 %v1850
        %v1986 = vunpack.c.l.b16 %v1851
        %v1987 = vunpack.c.l.b16 %v1852
        %v1988 = vunpack.c.l.b16 %v1853
        %v1989 = vunpack.c.l.b16 %v1854
        %v1990 = vunpack.c.l.b16 %v1855
        %v1991 = vunpack.c.l.b16 %v1856
        %v1992 = vunpack.c.l.b16 %v1857
        %v1993 = vunpack.c.l.b16 %v1858
        %v1994 = vunpack.c.l.b16 %v1859
        %v1995 = vunpack.c.l.b16 %v1860
        %v1996 = vunpack.c.l.b16 %v1861
        %v1997 = vunpack.c.l.b16 %v1862
        %v1998 = vunpack.c.l.b16 %v1863
        %v1999 = vunpack.c.l.b16 %v1864
        %v2000 = vunpack.c.l.b16 %v1865
        %v2001 = vunpack.c.l.b16 %v1866
        %v2002 = vunpack.c.l.b16 %v1867
        %v2003 = vunpack.c.l.b16 %v1868
        %v2004 = vunpack.c.l.b16 %v1869
        %v2005 = vunpack.c.l.b16 %v1870
        %v2006 = vunpack.c.l.b16 %v1871
        %v2007 = vunpack.c.l.b16 %v1872
        %v2008 = vunpack.c.l.b16 %v1873
        %v2009 = vunpack.c.l.b16 %v1874
        %v2010 = vunpack.c.l.b16 %v1875
        %v2011 = vunpack.c.l.b16 %v1876
        %v2012 = vunpack.c.l.b16 %v1877
        %v2013 = vunpack.c.l.b16 %v1878
        %v2014 = vunpack.c.l.b16 %v1879
        %v2015 = vunpack.c.l.b16 %v1880
        %v2016 = vunpack.c.l.b16 %v1881
        %v2017 = vpack.c.b16 %v1954, %v1953
        %v2018 = vpack.c.b16 %v1956, %v1955
        %v2019 = vpack.c.b16 %v1958, %v1957
        %v2020 = vpack.c.b16 %v1960, %v1959
        %v2021 = vpack.c.b16 %v1962, %v1961
        %v2022 = vpack.c.b16 %v1964, %v1963
        %v2023 = vpack.c.b16 %v1966, %v1965
        %v2024 = vpack.c.b16 %v1968, %v1967
        %v2025 = vpack.c.b16 %v1970, %v1969
        %v2026 = vpack.c.b16 %v1972, %v1971
        %v2027 = vpack.c.b16 %v1974, %v1973
        %v2028 = vpack.c.b16 %v1976, %v1975
        %v2029 = vpack.c.b16 %v1978, %v1977
        %v2030 = vpack.c.b16 %v1980, %v1979
        %v2031 = vpack.c.b16 %v1982, %v1981
        %v2032 = vpack.c.b16 %v1984, %v1983
        %v2033 = vpack.c.b16 %v1986, %v1985
        %v2034 = vpack.c.b16 %v1988, %v1987
        %v2035 = vpack.c.b16 %v1990, %v1989
        %v2036 = vpack.c.b16 %v1992, %v1991
        %v2037 = vpack.c.b16 %v1994, %v1993
        %v2038 = vpack.c.b16 %v1996, %v1995
        %v2039 = vpack.c.b16 %v1998, %v1997
        %v2040 = vpack.c.b16 %v2000, %v1999
        %v2041 = vpack.c.b16 %v2002, %v2001
        %v2042 = vpack.c.b16 %v2004, %v2003
        %v2043 = vpack.c.b16 %v2006, %v2005
        %v2044 = vpack.c.b16 %v2008, %v2007
        %v2045 = vpack.c.b16 %v2010, %v2009
        %v2046 = vpack.c.b16 %v2012, %v2011
        %v2047 = vpack.c.b16 %v2014, %v2013
        %v2048 = vpack.c.b16 %v2016, %v2015
        %2081 = vmatprep.subr.bf16.mxu0 0
        %2082 = vmatpush1.bf16.msra.mxu0 %v2017
        %2083 = vmatprep.subr.bf16.mxu0 0
        %2084 = vmatpush1.bf16.msra.mxu0 %v2018
        %2085 = vmatprep.subr.bf16.mxu0 0
        %2086 = vmatpush1.bf16.msra.mxu0 %v2019
        %2087 = vmatprep.subr.bf16.mxu0 0
        %2088 = vmatpush1.bf16.msra.mxu0 %v2020
        %2089 = vmatprep.subr.bf16.mxu0 0
        %2090 = vmatpush1.bf16.msra.mxu0 %v2021
        %2091 = vmatprep.subr.bf16.mxu0 0
        %2092 = vmatpush1.bf16.msra.mxu0 %v2022
        %2093 = vmatprep.subr.bf16.mxu0 0
        %2094 = vmatpush1.bf16.msra.mxu0 %v2023
        %2095 = vmatprep.subr.bf16.mxu0 0
        %2096 = vmatpush1.bf16.msra.mxu0 %v2024
        %2097 = vmatprep.subr.bf16.mxu0 0
        %2098 = vmatpush1.bf16.msra.mxu0 %v2025
        %2099 = vmatprep.subr.bf16.mxu0 0
        %2100 = vmatpush1.bf16.msra.mxu0 %v2026
        %2101 = vmatprep.subr.bf16.mxu0 0
        %2102 = vmatpush1.bf16.msra.mxu0 %v2027
        %2103 = vmatprep.subr.bf16.mxu0 0
        %2104 = vmatpush1.bf16.msra.mxu0 %v2028
        %2105 = vmatprep.subr.bf16.mxu0 0
        %2106 = vmatpush1.bf16.msra.mxu0 %v2029
        %2107 = vmatprep.subr.bf16.mxu0 0
        %2108 = vmatpush1.bf16.msra.mxu0 %v2030
        %2109 = vmatprep.subr.bf16.mxu0 0
        %2110 = vmatpush1.bf16.msra.mxu0 %v2031
        %2111 = vmatprep.subr.bf16.mxu0 0
        %2112 = vmatpush1.bf16.msra.mxu0 %v2032
        %2113 = vmatprep.mubr.bf16.mxu0 %v1815
        %2114 = vmatmul.mubr.bf16.gmra.mrb[0].mxu0 %v1814
        %v2115 = vpop.f32.mrb[0].mxu0
        %v2116 = vadd.f32 %v1887, %v2115
        %v2117 = vpop.f32.mrb[0].mxu0
        %v2118 = vpop.f32.mrb[0].mxu0
        %v2119 = vpop.f32.mrb[0].mxu0
        %2120 = vdwg.mxu0
        %2121 = vmatprep.subr.bf16.mxu0 0
        %2122 = vmatpush1.bf16.msra.mxu0 %v2033
        %2123 = vmatprep.subr.bf16.mxu0 0
        %2124 = vmatpush1.bf16.msra.mxu0 %v2034
        %2125 = vmatprep.subr.bf16.mxu0 0
        %2126 = vmatpush1.bf16.msra.mxu0 %v2035
        %2127 = vmatprep.subr.bf16.mxu0 0
        %2128 = vmatpush1.bf16.msra.mxu0 %v2036
        %2129 = vmatprep.subr.bf16.mxu0 0
        %2130 = vmatpush1.bf16.msra.mxu0 %v2037
        %2131 = vmatprep.subr.bf16.mxu0 0
        %2132 = vmatpush1.bf16.msra.mxu0 %v2038
        %2133 = vmatprep.subr.bf16.mxu0 0
        %2134 = vmatpush1.bf16.msra.mxu0 %v2039
        %2135 = vmatprep.subr.bf16.mxu0 0
        %2136 = vmatpush1.bf16.msra.mxu0 %v2040
        %2137 = vmatprep.subr.bf16.mxu0 0
        %2138 = vmatpush1.bf16.msra.mxu0 %v2041
        %2139 = vmatprep.subr.bf16.mxu0 0
        %2140 = vmatpush1.bf16.msra.mxu0 %v2042
        %2141 = vmatprep.subr.bf16.mxu0 0
        %2142 = vmatpush1.bf16.msra.mxu0 %v2043
        %2143 = vmatprep.subr.bf16.mxu0 0
        %2144 = vmatpush1.bf16.msra.mxu0 %v2044
        %2145 = vmatprep.subr.bf16.mxu0 0
        %2146 = vmatpush1.bf16.msra.mxu0 %v2045
        %2147 = vmatprep.subr.bf16.mxu0 0
        %2148 = vmatpush1.bf16.msra.mxu0 %v2046
        %2149 = vmatprep.subr.bf16.mxu0 0
        %2150 = vmatpush1.bf16.msra.mxu0 %v2047
        %2151 = vmatprep.subr.bf16.mxu0 0
        %2152 = vmatpush1.bf16.msra.mxu0 %v2048
        %2153 = vmatprep.mubr.bf16.mxu0 %v1817
        %2154 = vmatmul.mubr.bf16.gmra.mrb[0].mxu0 %v1816
        %v2155 = vpop.f32.mrb[0].mxu0
        %v2156 = vadd.f32 %v2116, %v2155
        %v2157 = vpop.f32.mrb[0].mxu0
        %v2158 = vpop.f32.mrb[0].mxu0
        %v2159 = vpop.f32.mrb[0].mxu0
        %2160 = vdwg.mxu0
        %v2161 = vadd.f32 %v1397, %v2156
        %2162 = vst [vmem:[%s405] sm:$0xff] %v2161
        %s2163 = sand.u32 %s230, 1
        %s2164 = scalar_lea.sflag [#allocation4], %s2163
        %s2165 = sand.u32 %s230, 1
        %s2166 = smul.addr %s2165, 8
        %s2167 = scalar_lea.vmem [#allocation11], %s2166
        // Predicated region
        $region77: #{tpu_custom_call.1} parent=55 // pred_check
          %p2168 = pneg %p240
        $region78: #{tpu_custom_call.1} parent=55 // pred_check_branch
          %2170 = sbr.rel (%p2168) target = $region80
        $region79: #{tpu_custom_call.1} parent=55 // pred_region
          %s2172 = ssub.s32 128, 128
          %2173 = vsyncadd %s2164, %s2172
          %s2174 = smul.addr %s28, 128
          %s2175 = scalar_lea.hbm %s9, %s2174
          %s2177 = sshll.u32 %s2167, 4
          %s2178 = int_to_ptr.vmem [resolvable:$true] %s2177
          %2180 = dma.vmem_to_hbm [thread:$0]  %s2178, 128, %s2175, %s2164
        $region80: #{tpu_custom_call.1} parent=55 // pred_fallthru
          _
      $region56: #{tpu_custom_call.1} parent=5 // pred_fallthru
        _
      %p2181 = scmp.le.s32.totalorder 2, %s23
      // Predicated region
      $region81: #{tpu_custom_call.1} parent=5 // pred_check
        %p2182 = pneg %p2181
      $region82: #{tpu_custom_call.1} parent=5 // pred_check_branch
        %2184 = sbr.rel (%p2182) target = $region84
      $region83: #{tpu_custom_call.1} parent=5 // pred_region
        %s2185 = ssub.s32 %s23, 2
        // Predicated region
        $region85: #{tpu_custom_call.1} parent=83 // pred_check
          %p2186 = pneg %p246
        $region86: #{tpu_custom_call.1} parent=83 // pred_check_branch
          %2188 = sbr.rel (%p2186) target = $region88
        $region87: #{tpu_custom_call.1} parent=83 // pred_region
          %s2189 = sand.u32 %s231, 1
          %s2190 = scalar_lea.sflag [#allocation4], %s2189
          %s2191 = sand.u32 %s231, 1
          %s2192 = smul.addr %s2191, 8
          %s2193 = scalar_lea.vmem [#allocation11], %s2192
          %2194 = dma.done %s2190, 128
        $region88: #{tpu_custom_call.1} parent=83 // pred_fallthru
          _
      $region84: #{tpu_custom_call.1} parent=5 // pred_fallthru
        _
    $region6: #{tpu_custom_call.1} parent=1 // loop_footer
      %s27 = sadd.s32 1, %s23
    $region7: #{tpu_custom_call.1} parent=1 // loop_footer_branch
      %22 = sbr.rel target = $region3
    $region8: #{tpu_custom_call.1} parent=1 // loop_exit
      _
    %2195 = vsyncpa [#allocation3], 1
    %s2196 = scalar_lea.sflag [#allocation3], 1
    %2197 = vsyncpa %s2196, 1
    %2198 = vsyncpa [#allocation6], 1
    %2199 = vsyncpa [#allocation9], 1
    %2200 = vsyncpa [#allocation4], 1
    %s2201 = scalar_lea.sflag [#allocation4], 1
    %2202 = vsyncpa %s2201, 1

</llo_original>
